<compile_context>
chip_gen: v5e
topology: v5e:2x2
jax: 0.10.0
libtpu: 0.0.40
codegen_flags: <defaults>
</compile_context>

<pallas_src>
import functools

import jax
import jax.numpy as jnp
from jax.experimental import pallas as pl
from jax.experimental.pallas import tpu as pltpu


_VMEM_LIMIT_BYTES = 48 * 1024 * 1024   # fits every generation (v7x: 64 MiB physical)
_EDGE_TILE_BYTES = 8 * 1024 * 1024     # cap for one streamed edge-tile buffer
_MASK_TILE_BYTES = 8 * 1024 * 1024     # cap for the (tile_n, tile_e) mask temp


def _round_up(x: int, m: int) -> int:
    return ((x + m - 1) // m) * m


def _edges_to_nodes_kernel(recv_ref, edges_ref, out_ref, acc_ref, cnt_ref, *,
                           tile_n: int, reduce_mean: bool, mxu_dtype):
    """One (N-tile, E-tile) grid step of the segment reduction.

    recv_ref:  (1, TILE_E) int32 -- receiver (or sender) node id per edge (-1 = pad)
    edges_ref: (TILE_E, D)       -- edge features (no lane padding)
    out_ref:   (TILE_N, D)       -- written only on the last E step (edge dtype)
    acc_ref:   (TILE_N, D) f32   -- persistent segment-sum accumulator
    cnt_ref:   (TILE_N, 1) f32   -- persistent per-node edge counts (mean only)
    """
    e = pl.program_id(1)

    @pl.when(e == 0)
    def _():
        acc_ref[...] = jnp.zeros_like(acc_ref)
        if reduce_mean:
            cnt_ref[...] = jnp.zeros_like(cnt_ref)

    recv = recv_ref[...]                                        # (1, TILE_E)
    row0 = pl.program_id(0) * tile_n
    # (TILE_N, 1) column of global node ids, broadcast-compared against the
    # (1, TILE_E) receiver row: one full-tile VPU compare, no full-tile iota.
    node_col = row0 + jax.lax.broadcasted_iota(jnp.int32, (tile_n, 1), 0)
    mask_bool = node_col == recv                                # (TILE_N, TILE_E)

    edges = edges_ref[...]
    mm_dtype = edges.dtype if mxu_dtype is None else mxu_dtype
    mask = mask_bool.astype(mm_dtype)                           # 0/1 exact in bf16

    # Segment-sum on the MXU, f32 accumulation in persistent scratch.
    acc_ref[...] += jnp.dot(mask, edges.astype(mm_dtype),
                            preferred_element_type=jnp.float32)

    if reduce_mean:
        # Counts via cross-lane (XLU) reduction -- free while the MXU is busy.
        cnt_ref[...] += jnp.sum(mask_bool.astype(jnp.float32), axis=1,
                                keepdims=True)

    @pl.when(e == pl.num_programs(1) - 1)
    def _():
        acc = acc_ref[...]
        if reduce_mean:
            # Counts are exact small integers -> exact reciprocal for parity
            # with the reference scatter-mean.  Clamp protects nodes with no
            # incident edges (they return 0, matching the reference).
            inv = 1.0 / jnp.maximum(cnt_ref[...], 1.0)          # (TILE_N, 1)
            out_ref[...] = (acc * inv).astype(out_ref.dtype)
        else:  # segment-sum reducer
            out_ref[...] = acc.astype(out_ref.dtype)


def _choose_tiles(num_edges: int, d_feat: int, num_nodes: int, itemsize: int):
    # N tile: a single tile for small node sets (edges streamed from HBM
    # exactly once); multiples of 256 above that (fills the 256-wide MXU on
    # v6e/v7x and keeps >= 2 tiles so v7x's parallel split has work).
    if num_nodes <= 512:
        tile_n = _round_up(num_nodes, 8)
    else:
        tile_n = 512
    # E tile: full residency when small, otherwise wide streamed tiles capped
    # so the double-buffered edge tile and the (tile_n, tile_e) mask temp stay
    # well inside VMEM on every generation (v7x: 64 MiB, v5e scoped: 16 MiB).
    e_full = _round_up(num_edges, 128)
    cap_edges = max(128, (_EDGE_TILE_BYTES // max(1, d_feat * itemsize)) // 128 * 128)
    cap_mask = max(128, (_MASK_TILE_BYTES // (tile_n * 4)) // 128 * 128)
    tile_e = min(e_full, 4096, cap_edges, cap_mask)
    return tile_n, tile_e


def edges_to_nodes_aggregate(edges, indices, num_nodes, *, reducer="mean",
                             tile_n=None, tile_e=None, mxu_dtype=None):
    """Segment-{mean,sum} of `edges` into `num_nodes` buckets given by `indices`."""
    E, D = edges.shape
    itemsize = jnp.dtype(edges.dtype).itemsize
    auto_n, auto_e = _choose_tiles(E, D, num_nodes, itemsize)
    tile_n = auto_n if tile_n is None else min(tile_n, _round_up(num_nodes, 8))
    tile_e = auto_e if tile_e is None else min(_round_up(tile_e, 128),
                                               _round_up(E, 128))

    n_pad = _round_up(num_nodes, tile_n)
    e_pad = _round_up(E, tile_e)

    # No lane padding of the feature axis; only pad the edge count up to a
    # tile multiple (padded rows are masked out via receiver id -1).
    edges_p = edges if e_pad == E else jnp.pad(edges, ((0, e_pad - E), (0, 0)))
    recv = jnp.pad(indices.astype(jnp.int32), (0, e_pad - E),
                   constant_values=-1)[None, :]                 # (1, e_pad)

    kernel = functools.partial(
        _edges_to_nodes_kernel, tile_n=tile_n,
        reduce_mean=(reducer == "mean"), mxu_dtype=mxu_dtype)

    out = pl.pallas_call(
        kernel,
        out_shape=jax.ShapeDtypeStruct((n_pad, D), edges.dtype),
        grid_spec=pltpu.PrefetchScalarGridSpec(
            num_scalar_prefetch=0,
            grid=(n_pad // tile_n, e_pad // tile_e),            # reduction axis last
            in_specs=[
                pl.BlockSpec((1, tile_e), lambda n, e: (0, e)),     # receivers
                pl.BlockSpec((tile_e, D), lambda n, e: (e, 0)),     # edges, full-D
            ],
            out_specs=pl.BlockSpec((tile_n, D), lambda n, e: (n, 0)),
            scratch_shapes=[pltpu.VMEM((tile_n, D), jnp.float32),   # segment sums
                            pltpu.VMEM((tile_n, 1), jnp.float32)],  # counts
        ),
        compiler_params=pltpu.CompilerParams(
            dimension_semantics=("parallel", "arbitrary"),
            vmem_limit_bytes=_VMEM_LIMIT_BYTES),
    )(recv, edges_p)

    return out[:num_nodes] if n_pad != num_nodes else out


def edges_to_nodes_aggregator_forward(edges, receivers, senders, num_nodes, *,
                                      use_sent_edges=False, reducer="mean",
                                      mxu_dtype=None):
    """Mirrors _EdgesToNodesAggregator.forward: returns [reducer(edges, indices)]."""
    indices = senders if use_sent_edges else receivers
    return [edges_to_nodes_aggregate(edges, indices, num_nodes, reducer=reducer,
                                     mxu_dtype=mxu_dtype)]


def segment_reduce_reference(edges, indices, num_nodes, reducer="mean"):
    """Pure-JAX reference mirroring the PyTorch reducer semantics."""
    seg = jax.ops.segment_sum(edges.astype(jnp.float32), indices,
                              num_segments=num_nodes)
    if reducer == "sum":
        return seg
    counts = jax.ops.segment_sum(jnp.ones((edges.shape[0],), jnp.float32),
                                 indices, num_segments=num_nodes)[:, None]
    return seg / jnp.maximum(counts, 1.0)


if __name__ == "__main__":
    key = jax.random.PRNGKey(0)
    k_edges, k_recv, k_send = jax.random.split(key, 3)

    N, E, D = 256, 2048, 32   # small graph: 256 nodes, 2048 edges, d_model=32

    edges = jax.random.normal(k_edges, (E, D), dtype=jnp.float32)
    # Ensure every node id appears at least once as a receiver, then fill the
    # rest randomly (mirrors the PyTorch mean reducer's implicit assumption).
    extra = jax.random.randint(k_recv, (E - N,), 0, N, dtype=jnp.int32)
    receivers = jnp.concatenate([jnp.arange(N, dtype=jnp.int32), extra])
    senders = jax.random.randint(k_send, (E,), 0, N, dtype=jnp.int32)

    # Mean reducer (default), receivers.
    (agg_mean,) = edges_to_nodes_aggregator_forward(
        edges, receivers, senders, N, use_sent_edges=False, reducer="mean")
    agg_mean = jax.block_until_ready(agg_mean)
    ref_mean = segment_reduce_reference(edges, receivers, N, "mean")
    assert agg_mean.shape == (N, D) and agg_mean.dtype == edges.dtype
    assert jnp.allclose(agg_mean, ref_mean, atol=1e-3, rtol=1e-3), \
        float(jnp.max(jnp.abs(agg_mean - ref_mean)))

    # Sum reducer, senders (use_sent_edges=True path).
    (agg_sum,) = edges_to_nodes_aggregator_forward(
        edges, receivers, senders, N, use_sent_edges=True, reducer="sum")
    agg_sum = jax.block_until_ready(agg_sum)
    ref_sum = segment_reduce_reference(edges, senders, N, "sum")
    assert jnp.allclose(agg_sum, ref_sum, atol=1e-3, rtol=1e-3), \
        float(jnp.max(jnp.abs(agg_sum - ref_sum)))

    # bf16 edges: output preserves the input dtype, f32 accumulation inside.
    edges_bf = edges.astype(jnp.bfloat16)
    (agg_bf,) = edges_to_nodes_aggregator_forward(
        edges_bf, receivers, senders, N, use_sent_edges=False, reducer="mean")
    agg_bf = jax.block_until_ready(agg_bf)
    ref_bf = segment_reduce_reference(edges_bf, receivers, N, "mean")
    assert agg_bf.dtype == jnp.bfloat16
    assert jnp.allclose(agg_bf.astype(jnp.float32), ref_bf,
                        atol=5e-2, rtol=5e-2), \
        float(jnp.max(jnp.abs(agg_bf.astype(jnp.float32) - ref_bf)))

    print("KERNEL_OK")
</pallas_src>

<mosaic_0001>
module attributes {stable_mosaic.version = 11 : i64} {
  func.func @_edges_to_nodes_kernel(%arg0: i32, %arg1: i32, %arg2: memref<1x2048xi32, #tpu.memory_space<vmem>>, %arg3: memref<2048x32xf32, #tpu.memory_space<vmem>>, %arg4: memref<256x32xf32, #tpu.memory_space<vmem>>, %arg5: memref<256x32xf32, #tpu.memory_space<vmem>>, %arg6: memref<256x1xf32, #tpu.memory_space<vmem>>) attributes {dimension_semantics = [#tpu.dimension_semantics<parallel>, #tpu.dimension_semantics<arbitrary>], iteration_bounds = array<i64: 1, 1>, scalar_prefetch = 0 : i64, scratch_operands = 2 : i64, tpu.core_type = #tpu.core_type<tc>, window_params = [{transform_indices = @transform_0, window_bounds = array<i64: 1, 2048>}, {transform_indices = @transform_1, window_bounds = array<i64: 2048, 32>}, {transform_indices = @transform_2, window_bounds = array<i64: 256, 32>}]} {
    %c0_i32 = arith.constant 0 : i32
    %0 = arith.cmpi eq, %arg1, %c0_i32 : i32
    %1 = arith.extui %0 : i1 to i32
    %c0_i32_0 = arith.constant 0 : i32
    %2 = arith.cmpi ne, %1, %c0_i32_0 : i32
    scf.if %2 {
      %cst_15 = arith.constant 0.000000e+00 : f32
      %28 = vector.broadcast %cst_15 : f32 to vector<256x32xf32>
      %c0_16 = arith.constant 0 : index
      %c0_17 = arith.constant 0 : index
      %29 = vector.load %arg5[%c0_16, %c0_17] : memref<256x32xf32, #tpu.memory_space<vmem>>, vector<256x32xf32>
      tpu.vector_store %arg5[%c0_16, %c0_17], %28 {strides = array<i32>} : memref<256x32xf32, #tpu.memory_space<vmem>>, vector<256x32xf32>,
      %cst_18 = arith.constant 0.000000e+00 : f32
      %30 = vector.broadcast %cst_18 : f32 to vector<256x1xf32>
      %c0_19 = arith.constant 0 : index
      %c0_20 = arith.constant 0 : index
      %31 = vector.load %arg6[%c0_19, %c0_20] : memref<256x1xf32, #tpu.memory_space<vmem>>, vector<256x1xf32>
      tpu.vector_store %arg6[%c0_19, %c0_20], %30 {strides = array<i32>} : memref<256x1xf32, #tpu.memory_space<vmem>>, vector<256x1xf32>,
    } else {
    }
    %c0 = arith.constant 0 : index
    %c0_1 = arith.constant 0 : index
    %3 = vector.load %arg2[%c0, %c0_1] : memref<1x2048xi32, #tpu.memory_space<vmem>>, vector<1x2048xi32>
    %c256_i32 = arith.constant 256 : i32
    %4 = arith.muli %arg0, %c256_i32 : i32
    %5 = tpu.iota {dimensions = array<i32: 0>} : vector<256x1xi32>
    %6 = vector.broadcast %4 : i32 to vector<256x1xi32>
    %7 = arith.addi %6, %5 : vector<256x1xi32>
    %8 = vector.broadcast %7 : vector<256x1xi32> to vector<256x2048xi32>
    %9 = vector.broadcast %3 : vector<1x2048xi32> to vector<256x2048xi32>
    %10 = arith.cmpi eq, %8, %9 : vector<256x2048xi32>
    %c0_2 = arith.constant 0 : index
    %c0_3 = arith.constant 0 : index
    %11 = vector.load %arg3[%c0_2, %c0_3] : memref<2048x32xf32, #tpu.memory_space<vmem>>, vector<2048x32xf32>
    %12 = arith.extui %10 : vector<256x2048xi1> to vector<256x2048xi32>
    %13 = arith.sitofp %12 : vector<256x2048xi32> to vector<256x2048xf32>
    %c0_4 = arith.constant 0 : index
    %c0_5 = arith.constant 0 : index
    %14 = vector.load %arg5[%c0_4, %c0_5] : memref<256x32xf32, #tpu.memory_space<vmem>>, vector<256x32xf32>
    %cst = arith.constant dense<0.000000e+00> : vector<256x32xf32>
    %15 = tpu.matmul %13, %11, %cst {dimension_numbers = #tpu.dot_dimension_numbers<[1], [0], [0], [1], [0, 0, 1, 1], [], []>} : vector<256x2048xf32>, vector<2048x32xf32>, vector<256x32xf32> -> vector<256x32xf32>
    %16 = arith.addf %14, %15 : vector<256x32xf32>
    %c0_6 = arith.constant 0 : index
    %c0_7 = arith.constant 0 : index
    %17 = vector.load %arg5[%c0_6, %c0_7] : memref<256x32xf32, #tpu.memory_space<vmem>>, vector<256x32xf32>
    tpu.vector_store %arg5[%c0_6, %c0_7], %16 {strides = array<i32>} : memref<256x32xf32, #tpu.memory_space<vmem>>, vector<256x32xf32>,
    %c0_8 = arith.constant 0 : index
    %c0_9 = arith.constant 0 : index
    %18 = vector.load %arg6[%c0_8, %c0_9] : memref<256x1xf32, #tpu.memory_space<vmem>>, vector<256x1xf32>
    %19 = arith.extui %10 : vector<256x2048xi1> to vector<256x2048xi32>
    %20 = arith.sitofp %19 : vector<256x2048xi32> to vector<256x2048xf32>
    %cst_10 = arith.constant dense<0.000000e+00> : vector<256xf32>
    %21 = vector.multi_reduction <add>, %20, %cst_10 [1] : vector<256x2048xf32> to vector<256xf32>
    %22 = vector.shape_cast %21 : vector<256xf32> to vector<256x1xf32>
    %23 = arith.addf %18, %22 : vector<256x1xf32>
    %c0_11 = arith.constant 0 : index
    %c0_12 = arith.constant 0 : index
    %24 = vector.load %arg6[%c0_11, %c0_12] : memref<256x1xf32, #tpu.memory_space<vmem>>, vector<256x1xf32>
    tpu.vector_store %arg6[%c0_11, %c0_12], %23 {strides = array<i32>} : memref<256x1xf32, #tpu.memory_space<vmem>>, vector<256x1xf32>,
    %c0_i32_13 = arith.constant 0 : i32
    %25 = arith.cmpi eq, %arg1, %c0_i32_13 : i32
    %26 = arith.extui %25 : i1 to i32
    %c0_i32_14 = arith.constant 0 : i32
    %27 = arith.cmpi ne, %26, %c0_i32_14 : i32
    scf.if %27 {
      %c0_15 = arith.constant 0 : index
      %c0_16 = arith.constant 0 : index
      %28 = vector.load %arg5[%c0_15, %c0_16] : memref<256x32xf32, #tpu.memory_space<vmem>>, vector<256x32xf32>
      %c0_17 = arith.constant 0 : index
      %c0_18 = arith.constant 0 : index
      %29 = vector.load %arg6[%c0_17, %c0_18] : memref<256x1xf32, #tpu.memory_space<vmem>>, vector<256x1xf32>
      %cst_19 = arith.constant 1.000000e+00 : f32
      %30 = vector.broadcast %cst_19 : f32 to vector<256x1xf32>
      %31 = arith.maximumf %29, %30 : vector<256x1xf32>
      %cst_20 = arith.constant 1.000000e+00 : f32
      %32 = vector.broadcast %cst_20 : f32 to vector<256x1xf32>
      %33 = arith.divf %32, %31 : vector<256x1xf32>
      %34 = vector.broadcast %33 : vector<256x1xf32> to vector<256x32xf32>
      %35 = arith.mulf %28, %34 : vector<256x32xf32>
      %c0_21 = arith.constant 0 : index
      %c0_22 = arith.constant 0 : index
      %36 = vector.load %arg4[%c0_21, %c0_22] : memref<256x32xf32, #tpu.memory_space<vmem>>, vector<256x32xf32>
      tpu.vector_store %arg4[%c0_21, %c0_22], %35 {strides = array<i32>} : memref<256x32xf32, #tpu.memory_space<vmem>>, vector<256x32xf32>,
    } else {
    }
    return
  }
  func.func @transform_0(%arg0: i32, %arg1: i32) -> (i32, i32) {
    %c0_i32 = arith.constant 0 : i32
    %c0_i32_0 = arith.constant 0 : i32
    return %c0_i32, %arg1 : i32, i32
  }
  func.func @transform_1(%arg0: i32, %arg1: i32) -> (i32, i32) {
    %c0_i32 = arith.constant 0 : i32
    %c0_i32_0 = arith.constant 0 : i32
    return %arg1, %c0_i32 : i32, i32
  }
  func.func @transform_2(%arg0: i32, %arg1: i32) -> (i32, i32) {
    %c0_i32 = arith.constant 0 : i32
    %c0_i32_0 = arith.constant 0 : i32
    return %arg0, %c0_i32 : i32, i32
  }
}

</mosaic_0001>

<llo_original>
// kernel: tpu_custom_call.1
$region0: #{tpu_custom_call.1}
  #allocation0 [shape = 'u32[]', space=smem, size = 0x4, offset = 0x4, fixed_abs, tag = 'smem constant byte address 0x4 - core index']
  #allocation1 [shape = 'u32[72,128]{1,0:T(1,128)}', space=vmem, size = 0x9000, scoped, tag = 'internal scratch']
  #allocation2 [shape = 'f32[256,32]{1,0:T(8,128)}', space=vmem, size = 0x20000, scoped, tag = 'scratch operand']
  #allocation3 [shape = 'f32[256,1]{1,0:T(8,128)}', space=vmem, size = 0x20000, scoped, tag = 'scratch operand']
  %s0 = inlined_call_operand.vmem [shape: s32[1,2048], index: 0, kind: input, shape index: {}]
  %s1 = inlined_call_operand.vmem [shape: f32[2048,32], index: 1, kind: input, shape index: {}]
  %s2 = inlined_call_operand.vmem [shape: f32[256,32], index: 2, kind: output, shape index: {}]
  %s3 = sld [smem:[#allocation0]]
  $region26: #{tpu_custom_call.1} parent=0
    _
  %s5 = ssub.s32 1, %s3
  %s6 = scalar_select 0, %s5, %s3
  // Predicated region
  $region2: #{tpu_custom_call.1} parent=0 // pred_check
    _
  $region3: #{tpu_custom_call.1} parent=0 // pred_check_branch
    %8 = sbr.rel (0) target = $region5
  $region4: #{tpu_custom_call.1} parent=0 // pred_region
    _
  $region5: #{tpu_custom_call.1} parent=0 // pred_fallthru
    _
  // Predicated region
  $region6: #{tpu_custom_call.1} parent=0 // pred_check
    _
  $region7: #{tpu_custom_call.1} parent=0 // pred_check_branch
    %10 = sbr.rel (0) target = $region9
  $region8: #{tpu_custom_call.1} parent=0 // pred_region
    _
  $region9: #{tpu_custom_call.1} parent=0 // pred_fallthru
    _
  %p11 = scmp.eq.s32.totalorder 0, 0
  // Predicated region
  $region10: #{tpu_custom_call.1} parent=0 // pred_check
    %p12 = pneg %p11
  $region11: #{tpu_custom_call.1} parent=0 // pred_check_branch
    %14 = sbr.rel (%p12) target = $region13
  $region12: #{tpu_custom_call.1} parent=0 // pred_region
    %vm15 = vcmask 261120
    %16 = vst.msk [vmem:[#allocation2] sm:$0xff] %vm15, 0.0
    %17 = vst.msk [vmem:[#allocation2 + $0x8] sm:$0xff] %vm15, 0.0
    %18 = vst.msk [vmem:[#allocation2 + $0x10] sm:$0xff] %vm15, 0.0
    %19 = vst.msk [vmem:[#allocation2 + $0x18] sm:$0xff] %vm15, 0.0
    %20 = vst.msk [vmem:[#allocation2 + $0x20] sm:$0xff] %vm15, 0.0
    %21 = vst.msk [vmem:[#allocation2 + $0x28] sm:$0xff] %vm15, 0.0
    %22 = vst.msk [vmem:[#allocation2 + $0x30] sm:$0xff] %vm15, 0.0
    %23 = vst.msk [vmem:[#allocation2 + $0x38] sm:$0xff] %vm15, 0.0
    %24 = vst.msk [vmem:[#allocation2 + $0x40] sm:$0xff] %vm15, 0.0
    %25 = vst.msk [vmem:[#allocation2 + $0x48] sm:$0xff] %vm15, 0.0
    %26 = vst.msk [vmem:[#allocation2 + $0x50] sm:$0xff] %vm15, 0.0
    %27 = vst.msk [vmem:[#allocation2 + $0x58] sm:$0xff] %vm15, 0.0
    %28 = vst.msk [vmem:[#allocation2 + $0x60] sm:$0xff] %vm15, 0.0
    %29 = vst.msk [vmem:[#allocation2 + $0x68] sm:$0xff] %vm15, 0.0
    %30 = vst.msk [vmem:[#allocation2 + $0x70] sm:$0xff] %vm15, 0.0
    %31 = vst.msk [vmem:[#allocation2 + $0x78] sm:$0xff] %vm15, 0.0
    %32 = vst.msk [vmem:[#allocation2 + $0x80] sm:$0xff] %vm15, 0.0
    %33 = vst.msk [vmem:[#allocation2 + $0x88] sm:$0xff] %vm15, 0.0
    %34 = vst.msk [vmem:[#allocation2 + $0x90] sm:$0xff] %vm15, 0.0
    %35 = vst.msk [vmem:[#allocation2 + $0x98] sm:$0xff] %vm15, 0.0
    %36 = vst.msk [vmem:[#allocation2 + $0xa0] sm:$0xff] %vm15, 0.0
    %37 = vst.msk [vmem:[#allocation2 + $0xa8] sm:$0xff] %vm15, 0.0
    %38 = vst.msk [vmem:[#allocation2 + $0xb0] sm:$0xff] %vm15, 0.0
    %39 = vst.msk [vmem:[#allocation2 + $0xb8] sm:$0xff] %vm15, 0.0
    %40 = vst.msk [vmem:[#allocation2 + $0xc0] sm:$0xff] %vm15, 0.0
    %41 = vst.msk [vmem:[#allocation2 + $0xc8] sm:$0xff] %vm15, 0.0
    %42 = vst.msk [vmem:[#allocation2 + $0xd0] sm:$0xff] %vm15, 0.0
    %43 = vst.msk [vmem:[#allocation2 + $0xd8] sm:$0xff] %vm15, 0.0
    %44 = vst.msk [vmem:[#allocation2 + $0xe0] sm:$0xff] %vm15, 0.0
    %45 = vst.msk [vmem:[#allocation2 + $0xe8] sm:$0xff] %vm15, 0.0
    %46 = vst.msk [vmem:[#allocation2 + $0xf0] sm:$0xff] %vm15, 0.0
    %47 = vst.msk [vmem:[#allocation2 + $0xf8] sm:$0xff] %vm15, 0.0
    %vm48 = vcmask 7168
    %49 = vst.msk [vmem:[#allocation3] sm:$0xff] %vm48, 0.0
    %50 = vst.msk [vmem:[#allocation3 + $0x8] sm:$0xff] %vm48, 0.0
    %51 = vst.msk [vmem:[#allocation3 + $0x10] sm:$0xff] %vm48, 0.0
    %52 = vst.msk [vmem:[#allocation3 + $0x18] sm:$0xff] %vm48, 0.0
    %53 = vst.msk [vmem:[#allocation3 + $0x20] sm:$0xff] %vm48, 0.0
    %54 = vst.msk [vmem:[#allocation3 + $0x28] sm:$0xff] %vm48, 0.0
    %55 = vst.msk [vmem:[#allocation3 + $0x30] sm:$0xff] %vm48, 0.0
    %56 = vst.msk [vmem:[#allocation3 + $0x38] sm:$0xff] %vm48, 0.0
    %57 = vst.msk [vmem:[#allocation3 + $0x40] sm:$0xff] %vm48, 0.0
    %58 = vst.msk [vmem:[#allocation3 + $0x48] sm:$0xff] %vm48, 0.0
    %59 = vst.msk [vmem:[#allocation3 + $0x50] sm:$0xff] %vm48, 0.0
    %60 = vst.msk [vmem:[#allocation3 + $0x58] sm:$0xff] %vm48, 0.0
    %61 = vst.msk [vmem:[#allocation3 + $0x60] sm:$0xff] %vm48, 0.0
    %62 = vst.msk [vmem:[#allocation3 + $0x68] sm:$0xff] %vm48, 0.0
    %63 = vst.msk [vmem:[#allocation3 + $0x70] sm:$0xff] %vm48, 0.0
    %64 = vst.msk [vmem:[#allocation3 + $0x78] sm:$0xff] %vm48, 0.0
    %65 = vst.msk [vmem:[#allocation3 + $0x80] sm:$0xff] %vm48, 0.0
    %66 = vst.msk [vmem:[#allocation3 + $0x88] sm:$0xff] %vm48, 0.0
    %67 = vst.msk [vmem:[#allocation3 + $0x90] sm:$0xff] %vm48, 0.0
    %68 = vst.msk [vmem:[#allocation3 + $0x98] sm:$0xff] %vm48, 0.0
    %69 = vst.msk [vmem:[#allocation3 + $0xa0] sm:$0xff] %vm48, 0.0
    %70 = vst.msk [vmem:[#allocation3 + $0xa8] sm:$0xff] %vm48, 0.0
    %71 = vst.msk [vmem:[#allocation3 + $0xb0] sm:$0xff] %vm48, 0.0
    %72 = vst.msk [vmem:[#allocation3 + $0xb8] sm:$0xff] %vm48, 0.0
    %73 = vst.msk [vmem:[#allocation3 + $0xc0] sm:$0xff] %vm48, 0.0
    %74 = vst.msk [vmem:[#allocation3 + $0xc8] sm:$0xff] %vm48, 0.0
    %75 = vst.msk [vmem:[#allocation3 + $0xd0] sm:$0xff] %vm48, 0.0
    %76 = vst.msk [vmem:[#allocation3 + $0xd8] sm:$0xff] %vm48, 0.0
    %77 = vst.msk [vmem:[#allocation3 + $0xe0] sm:$0xff] %vm48, 0.0
    %78 = vst.msk [vmem:[#allocation3 + $0xe8] sm:$0xff] %vm48, 0.0
    %79 = vst.msk [vmem:[#allocation3 + $0xf0] sm:$0xff] %vm48, 0.0
    %80 = vst.msk [vmem:[#allocation3 + $0xf8] sm:$0xff] %vm48, 0.0
  $region13: #{tpu_custom_call.1} parent=0 // pred_fallthru
    _
  %v81 = vld [vmem:[%s0] sm:$0xff]
  %v82 = vld [vmem:[%s0 + $0x8] sm:$0xff]
  %s83 = smul.u32 0, 256
  %v84 = vlaneseq
  %v85 = vshrl.u32 %v84, 7
  %v86 = vadd.s32 %v85, 8
  %v87 = vadd.s32 %v85, 16
  %v88 = vadd.s32 %v85, 24
  %v89 = vadd.s32 %v85, 32
  %v90 = vadd.s32 %v85, 40
  %v91 = vadd.s32 %v85, 48
  %v92 = vadd.s32 %v85, 56
  %v93 = vadd.s32 %v85, 64
  %v94 = vadd.s32 %v85, 72
  %v95 = vadd.s32 %v85, 80
  %v96 = vadd.s32 %v85, 88
  %v97 = vadd.s32 %v85, 96
  %v98 = vadd.s32 %v85, 104
  %v99 = vadd.s32 %v85, 112
  %v100 = vadd.s32 %v85, 120
  %v101 = vadd.s32 %v85, 128
  %v102 = vadd.s32 %v85, 136
  %v103 = vadd.s32 %v85, 144
  %v104 = vadd.s32 %v85, 152
  %v105 = vadd.s32 %v85, 160
  %v106 = vadd.s32 %v85, 168
  %v107 = vadd.s32 %v85, 176
  %v108 = vadd.s32 %v85, 184
  %v109 = vadd.s32 %v85, 192
  %v110 = vadd.s32 %v85, 200
  %v111 = vadd.s32 %v85, 208
  %v112 = vadd.s32 %v85, 216
  %v113 = vadd.s32 %v85, 224
  %v114 = vadd.s32 %v85, 232
  %v115 = vadd.s32 %v85, 240
  %v116 = vadd.s32 %v85, 248
  %v117 = vstv %s83
  %v118 = vadd.s32 %v117, %v85
  %v119 = vadd.s32 %v117, %v86
  %v120 = vadd.s32 %v117, %v87
  %v121 = vadd.s32 %v117, %v88
  %v122 = vadd.s32 %v117, %v89
  %v123 = vadd.s32 %v117, %v90
  %v124 = vadd.s32 %v117, %v91
  %v125 = vadd.s32 %v117, %v92
  %v126 = vadd.s32 %v117, %v93
  %v127 = vadd.s32 %v117, %v94
  %v128 = vadd.s32 %v117, %v95
  %v129 = vadd.s32 %v117, %v96
  %v130 = vadd.s32 %v117, %v97
  %v131 = vadd.s32 %v117, %v98
  %v132 = vadd.s32 %v117, %v99
  %v133 = vadd.s32 %v117, %v100
  %v134 = vadd.s32 %v117, %v101
  %v135 = vadd.s32 %v117, %v102
  %v136 = vadd.s32 %v117, %v103
  %v137 = vadd.s32 %v117, %v104
  %v138 = vadd.s32 %v117, %v105
  %v139 = vadd.s32 %v117, %v106
  %v140 = vadd.s32 %v117, %v107
  %v141 = vadd.s32 %v117, %v108
  %v142 = vadd.s32 %v117, %v109
  %v143 = vadd.s32 %v117, %v110
  %v144 = vadd.s32 %v117, %v111
  %v145 = vadd.s32 %v117, %v112
  %v146 = vadd.s32 %v117, %v113
  %v147 = vadd.s32 %v117, %v114
  %v148 = vadd.s32 %v117, %v115
  %v149 = vadd.s32 %v117, %v116
  %v150 = vperm.slane %v81, 0
  %v151 = vperm.slane %v81, 1
  %v152 = vperm.slane %v81, 2
  %v153 = vperm.slane %v81, 3
  %v154 = vperm.slane %v81, 4
  %v155 = vperm.slane %v81, 5
  %v156 = vperm.slane %v81, 6
  %v157 = vperm.slane %v81, 7
  %v158 = vperm.slane %v82, 0
  %v159 = vperm.slane %v82, 1
  %v160 = vperm.slane %v82, 2
  %v161 = vperm.slane %v82, 3
  %v162 = vperm.slane %v82, 4
  %v163 = vperm.slane %v82, 5
  %v164 = vperm.slane %v82, 6
  %v165 = vperm.slane %v82, 7
  %vm166 = vcmp.eq.s32.totalorder %v118, %v150
  %vm167 = vcmp.eq.s32.totalorder %v118, %v151
  %vm168 = vcmp.eq.s32.totalorder %v118, %v152
  %vm169 = vcmp.eq.s32.totalorder %v118, %v153
  %vm170 = vcmp.eq.s32.totalorder %v118, %v154
  %vm171 = vcmp.eq.s32.totalorder %v118, %v155
  %vm172 = vcmp.eq.s32.totalorder %v118, %v156
  %vm173 = vcmp.eq.s32.totalorder %v118, %v157
  %vm174 = vcmp.eq.s32.totalorder %v118, %v158
  %vm175 = vcmp.eq.s32.totalorder %v118, %v159
  %vm176 = vcmp.eq.s32.totalorder %v118, %v160
  %vm177 = vcmp.eq.s32.totalorder %v118, %v161
  %vm178 = vcmp.eq.s32.totalorder %v118, %v162
  %vm179 = vcmp.eq.s32.totalorder %v118, %v163
  %vm180 = vcmp.eq.s32.totalorder %v118, %v164
  %vm181 = vcmp.eq.s32.totalorder %v118, %v165
  %vm182 = vcmp.eq.s32.totalorder %v119, %v150
  %vm183 = vcmp.eq.s32.totalorder %v119, %v151
  %vm184 = vcmp.eq.s32.totalorder %v119, %v152
  %vm185 = vcmp.eq.s32.totalorder %v119, %v153
  %vm186 = vcmp.eq.s32.totalorder %v119, %v154
  %vm187 = vcmp.eq.s32.totalorder %v119, %v155
  %vm188 = vcmp.eq.s32.totalorder %v119, %v156
  %vm189 = vcmp.eq.s32.totalorder %v119, %v157
  %vm190 = vcmp.eq.s32.totalorder %v119, %v158
  %vm191 = vcmp.eq.s32.totalorder %v119, %v159
  %vm192 = vcmp.eq.s32.totalorder %v119, %v160
  %vm193 = vcmp.eq.s32.totalorder %v119, %v161
  %vm194 = vcmp.eq.s32.totalorder %v119, %v162
  %vm195 = vcmp.eq.s32.totalorder %v119, %v163
  %vm196 = vcmp.eq.s32.totalorder %v119, %v164
  %vm197 = vcmp.eq.s32.totalorder %v119, %v165
  %vm198 = vcmp.eq.s32.totalorder %v120, %v150
  %vm199 = vcmp.eq.s32.totalorder %v120, %v151
  %vm200 = vcmp.eq.s32.totalorder %v120, %v152
  %vm201 = vcmp.eq.s32.totalorder %v120, %v153
  %vm202 = vcmp.eq.s32.totalorder %v120, %v154
  %vm203 = vcmp.eq.s32.totalorder %v120, %v155
  %vm204 = vcmp.eq.s32.totalorder %v120, %v156
  %vm205 = vcmp.eq.s32.totalorder %v120, %v157
  %vm206 = vcmp.eq.s32.totalorder %v120, %v158
  %vm207 = vcmp.eq.s32.totalorder %v120, %v159
  %vm208 = vcmp.eq.s32.totalorder %v120, %v160
  %vm209 = vcmp.eq.s32.totalorder %v120, %v161
  %vm210 = vcmp.eq.s32.totalorder %v120, %v162
  %vm211 = vcmp.eq.s32.totalorder %v120, %v163
  %vm212 = vcmp.eq.s32.totalorder %v120, %v164
  %vm213 = vcmp.eq.s32.totalorder %v120, %v165
  %vm214 = vcmp.eq.s32.totalorder %v121, %v150
  %vm215 = vcmp.eq.s32.totalorder %v121, %v151
  %vm216 = vcmp.eq.s32.totalorder %v121, %v152
  %vm217 = vcmp.eq.s32.totalorder %v121, %v153
  %vm218 = vcmp.eq.s32.totalorder %v121, %v154
  %vm219 = vcmp.eq.s32.totalorder %v121, %v155
  %vm220 = vcmp.eq.s32.totalorder %v121, %v156
  %vm221 = vcmp.eq.s32.totalorder %v121, %v157
  %vm222 = vcmp.eq.s32.totalorder %v121, %v158
  %vm223 = vcmp.eq.s32.totalorder %v121, %v159
  %vm224 = vcmp.eq.s32.totalorder %v121, %v160
  %vm225 = vcmp.eq.s32.totalorder %v121, %v161
  %vm226 = vcmp.eq.s32.totalorder %v121, %v162
  %vm227 = vcmp.eq.s32.totalorder %v121, %v163
  %vm228 = vcmp.eq.s32.totalorder %v121, %v164
  %vm229 = vcmp.eq.s32.totalorder %v121, %v165
  %vm230 = vcmp.eq.s32.totalorder %v122, %v150
  %vm231 = vcmp.eq.s32.totalorder %v122, %v151
  %vm232 = vcmp.eq.s32.totalorder %v122, %v152
  %vm233 = vcmp.eq.s32.totalorder %v122, %v153
  %vm234 = vcmp.eq.s32.totalorder %v122, %v154
  %vm235 = vcmp.eq.s32.totalorder %v122, %v155
  %vm236 = vcmp.eq.s32.totalorder %v122, %v156
  %vm237 = vcmp.eq.s32.totalorder %v122, %v157
  %vm238 = vcmp.eq.s32.totalorder %v122, %v158
  %vm239 = vcmp.eq.s32.totalorder %v122, %v159
  %vm240 = vcmp.eq.s32.totalorder %v122, %v160
  %vm241 = vcmp.eq.s32.totalorder %v122, %v161
  %vm242 = vcmp.eq.s32.totalorder %v122, %v162
  %vm243 = vcmp.eq.s32.totalorder %v122, %v163
  %vm244 = vcmp.eq.s32.totalorder %v122, %v164
  %vm245 = vcmp.eq.s32.totalorder %v122, %v165
  %vm246 = vcmp.eq.s32.totalorder %v123, %v150
  %vm247 = vcmp.eq.s32.totalorder %v123, %v151
  %vm248 = vcmp.eq.s32.totalorder %v123, %v152
  %vm249 = vcmp.eq.s32.totalorder %v123, %v153
  %vm250 = vcmp.eq.s32.totalorder %v123, %v154
  %vm251 = vcmp.eq.s32.totalorder %v123, %v155
  %vm252 = vcmp.eq.s32.totalorder %v123, %v156
  %vm253 = vcmp.eq.s32.totalorder %v123, %v157
  %vm254 = vcmp.eq.s32.totalorder %v123, %v158
  %vm255 = vcmp.eq.s32.totalorder %v123, %v159
  %vm256 = vcmp.eq.s32.totalorder %v123, %v160
  %vm257 = vcmp.eq.s32.totalorder %v123, %v161
  %vm258 = vcmp.eq.s32.totalorder %v123, %v162
  %vm259 = vcmp.eq.s32.totalorder %v123, %v163
  %vm260 = vcmp.eq.s32.totalorder %v123, %v164
  %vm261 = vcmp.eq.s32.totalorder %v123, %v165
  %vm262 = vcmp.eq.s32.totalorder %v124, %v150
  %vm263 = vcmp.eq.s32.totalorder %v124, %v151
  %vm264 = vcmp.eq.s32.totalorder %v124, %v152
  %vm265 = vcmp.eq.s32.totalorder %v124, %v153
  %vm266 = vcmp.eq.s32.totalorder %v124, %v154
  %vm267 = vcmp.eq.s32.totalorder %v124, %v155
  %vm268 = vcmp.eq.s32.totalorder %v124, %v156
  %vm269 = vcmp.eq.s32.totalorder %v124, %v157
  %vm270 = vcmp.eq.s32.totalorder %v124, %v158
  %vm271 = vcmp.eq.s32.totalorder %v124, %v159
  %vm272 = vcmp.eq.s32.totalorder %v124, %v160
  %vm273 = vcmp.eq.s32.totalorder %v124, %v161
  %vm274 = vcmp.eq.s32.totalorder %v124, %v162
  %vm275 = vcmp.eq.s32.totalorder %v124, %v163
  %vm276 = vcmp.eq.s32.totalorder %v124, %v164
  %vm277 = vcmp.eq.s32.totalorder %v124, %v165
  %vm278 = vcmp.eq.s32.totalorder %v125, %v150
  %vm279 = vcmp.eq.s32.totalorder %v125, %v151
  %vm280 = vcmp.eq.s32.totalorder %v125, %v152
  %vm281 = vcmp.eq.s32.totalorder %v125, %v153
  %vm282 = vcmp.eq.s32.totalorder %v125, %v154
  %vm283 = vcmp.eq.s32.totalorder %v125, %v155
  %vm284 = vcmp.eq.s32.totalorder %v125, %v156
  %vm285 = vcmp.eq.s32.totalorder %v125, %v157
  %vm286 = vcmp.eq.s32.totalorder %v125, %v158
  %vm287 = vcmp.eq.s32.totalorder %v125, %v159
  %vm288 = vcmp.eq.s32.totalorder %v125, %v160
  %vm289 = vcmp.eq.s32.totalorder %v125, %v161
  %vm290 = vcmp.eq.s32.totalorder %v125, %v162
  %vm291 = vcmp.eq.s32.totalorder %v125, %v163
  %vm292 = vcmp.eq.s32.totalorder %v125, %v164
  %vm293 = vcmp.eq.s32.totalorder %v125, %v165
  %vm294 = vcmp.eq.s32.totalorder %v126, %v150
  %vm295 = vcmp.eq.s32.totalorder %v126, %v151
  %vm296 = vcmp.eq.s32.totalorder %v126, %v152
  %vm297 = vcmp.eq.s32.totalorder %v126, %v153
  %vm298 = vcmp.eq.s32.totalorder %v126, %v154
  %vm299 = vcmp.eq.s32.totalorder %v126, %v155
  %vm300 = vcmp.eq.s32.totalorder %v126, %v156
  %vm301 = vcmp.eq.s32.totalorder %v126, %v157
  %vm302 = vcmp.eq.s32.totalorder %v126, %v158
  %vm303 = vcmp.eq.s32.totalorder %v126, %v159
  %vm304 = vcmp.eq.s32.totalorder %v126, %v160
  %vm305 = vcmp.eq.s32.totalorder %v126, %v161
  %vm306 = vcmp.eq.s32.totalorder %v126, %v162
  %vm307 = vcmp.eq.s32.totalorder %v126, %v163
  %vm308 = vcmp.eq.s32.totalorder %v126, %v164
  %vm309 = vcmp.eq.s32.totalorder %v126, %v165
  %vm310 = vcmp.eq.s32.totalorder %v127, %v150
  %vm311 = vcmp.eq.s32.totalorder %v127, %v151
  %vm312 = vcmp.eq.s32.totalorder %v127, %v152
  %vm313 = vcmp.eq.s32.totalorder %v127, %v153
  %vm314 = vcmp.eq.s32.totalorder %v127, %v154
  %vm315 = vcmp.eq.s32.totalorder %v127, %v155
  %vm316 = vcmp.eq.s32.totalorder %v127, %v156
  %vm317 = vcmp.eq.s32.totalorder %v127, %v157
  %vm318 = vcmp.eq.s32.totalorder %v127, %v158
  %vm319 = vcmp.eq.s32.totalorder %v127, %v159
  %vm320 = vcmp.eq.s32.totalorder %v127, %v160
  %vm321 = vcmp.eq.s32.totalorder %v127, %v161
  %vm322 = vcmp.eq.s32.totalorder %v127, %v162
  %vm323 = vcmp.eq.s32.totalorder %v127, %v163
  %vm324 = vcmp.eq.s32.totalorder %v127, %v164
  %vm325 = vcmp.eq.s32.totalorder %v127, %v165
  %vm326 = vcmp.eq.s32.totalorder %v128, %v150
  %vm327 = vcmp.eq.s32.totalorder %v128, %v151
  %vm328 = vcmp.eq.s32.totalorder %v128, %v152
  %vm329 = vcmp.eq.s32.totalorder %v128, %v153
  %vm330 = vcmp.eq.s32.totalorder %v128, %v154
  %vm331 = vcmp.eq.s32.totalorder %v128, %v155
  %vm332 = vcmp.eq.s32.totalorder %v128, %v156
  %vm333 = vcmp.eq.s32.totalorder %v128, %v157
  %vm334 = vcmp.eq.s32.totalorder %v128, %v158
  %vm335 = vcmp.eq.s32.totalorder %v128, %v159
  %vm336 = vcmp.eq.s32.totalorder %v128, %v160
  %vm337 = vcmp.eq.s32.totalorder %v128, %v161
  %vm338 = vcmp.eq.s32.totalorder %v128, %v162
  %vm339 = vcmp.eq.s32.totalorder %v128, %v163
  %vm340 = vcmp.eq.s32.totalorder %v128, %v164
  %vm341 = vcmp.eq.s32.totalorder %v128, %v165
  %vm342 = vcmp.eq.s32.totalorder %v129, %v150
  %vm343 = vcmp.eq.s32.totalorder %v129, %v151
  %vm344 = vcmp.eq.s32.totalorder %v129, %v152
  %vm345 = vcmp.eq.s32.totalorder %v129, %v153
  %vm346 = vcmp.eq.s32.totalorder %v129, %v154
  %vm347 = vcmp.eq.s32.totalorder %v129, %v155
  %vm348 = vcmp.eq.s32.totalorder %v129, %v156
  %vm349 = vcmp.eq.s32.totalorder %v129, %v157
  %vm350 = vcmp.eq.s32.totalorder %v129, %v158
  %vm351 = vcmp.eq.s32.totalorder %v129, %v159
  %vm352 = vcmp.eq.s32.totalorder %v129, %v160
  %vm353 = vcmp.eq.s32.totalorder %v129, %v161
  %vm354 = vcmp.eq.s32.totalorder %v129, %v162
  %vm355 = vcmp.eq.s32.totalorder %v129, %v163
  %vm356 = vcmp.eq.s32.totalorder %v129, %v164
  %vm357 = vcmp.eq.s32.totalorder %v129, %v165
  %vm358 = vcmp.eq.s32.totalorder %v130, %v150
  %vm359 = vcmp.eq.s32.totalorder %v130, %v151
  %vm360 = vcmp.eq.s32.totalorder %v130, %v152
  %vm361 = vcmp.eq.s32.totalorder %v130, %v153
  %vm362 = vcmp.eq.s32.totalorder %v130, %v154
  %vm363 = vcmp.eq.s32.totalorder %v130, %v155
  %vm364 = vcmp.eq.s32.totalorder %v130, %v156
  %vm365 = vcmp.eq.s32.totalorder %v130, %v157
  %vm366 = vcmp.eq.s32.totalorder %v130, %v158
  %vm367 = vcmp.eq.s32.totalorder %v130, %v159
  %vm368 = vcmp.eq.s32.totalorder %v130, %v160
  %vm369 = vcmp.eq.s32.totalorder %v130, %v161
  %vm370 = vcmp.eq.s32.totalorder %v130, %v162
  %vm371 = vcmp.eq.s32.totalorder %v130, %v163
  %vm372 = vcmp.eq.s32.totalorder %v130, %v164
  %vm373 = vcmp.eq.s32.totalorder %v130, %v165
  %vm374 = vcmp.eq.s32.totalorder %v131, %v150
  %vm375 = vcmp.eq.s32.totalorder %v131, %v151
  %vm376 = vcmp.eq.s32.totalorder %v131, %v152
  %vm377 = vcmp.eq.s32.totalorder %v131, %v153
  %vm378 = vcmp.eq.s32.totalorder %v131, %v154
  %vm379 = vcmp.eq.s32.totalorder %v131, %v155
  %vm380 = vcmp.eq.s32.totalorder %v131, %v156
  %vm381 = vcmp.eq.s32.totalorder %v131, %v157
  %vm382 = vcmp.eq.s32.totalorder %v131, %v158
  %vm383 = vcmp.eq.s32.totalorder %v131, %v159
  %vm384 = vcmp.eq.s32.totalorder %v131, %v160
  %vm385 = vcmp.eq.s32.totalorder %v131, %v161
  %vm386 = vcmp.eq.s32.totalorder %v131, %v162
  %vm387 = vcmp.eq.s32.totalorder %v131, %v163
  %vm388 = vcmp.eq.s32.totalorder %v131, %v164
  %vm389 = vcmp.eq.s32.totalorder %v131, %v165
  %vm390 = vcmp.eq.s32.totalorder %v132, %v150
  %vm391 = vcmp.eq.s32.totalorder %v132, %v151
  %vm392 = vcmp.eq.s32.totalorder %v132, %v152
  %vm393 = vcmp.eq.s32.totalorder %v132, %v153
  %vm394 = vcmp.eq.s32.totalorder %v132, %v154
  %vm395 = vcmp.eq.s32.totalorder %v132, %v155
  %vm396 = vcmp.eq.s32.totalorder %v132, %v156
  %vm397 = vcmp.eq.s32.totalorder %v132, %v157
  %vm398 = vcmp.eq.s32.totalorder %v132, %v158
  %vm399 = vcmp.eq.s32.totalorder %v132, %v159
  %vm400 = vcmp.eq.s32.totalorder %v132, %v160
  %vm401 = vcmp.eq.s32.totalorder %v132, %v161
  %vm402 = vcmp.eq.s32.totalorder %v132, %v162
  %vm403 = vcmp.eq.s32.totalorder %v132, %v163
  %vm404 = vcmp.eq.s32.totalorder %v132, %v164
  %vm405 = vcmp.eq.s32.totalorder %v132, %v165
  %vm406 = vcmp.eq.s32.totalorder %v133, %v150
  %vm407 = vcmp.eq.s32.totalorder %v133, %v151
  %vm408 = vcmp.eq.s32.totalorder %v133, %v152
  %vm409 = vcmp.eq.s32.totalorder %v133, %v153
  %vm410 = vcmp.eq.s32.totalorder %v133, %v154
  %vm411 = vcmp.eq.s32.totalorder %v133, %v155
  %vm412 = vcmp.eq.s32.totalorder %v133, %v156
  %vm413 = vcmp.eq.s32.totalorder %v133, %v157
  %vm414 = vcmp.eq.s32.totalorder %v133, %v158
  %vm415 = vcmp.eq.s32.totalorder %v133, %v159
  %vm416 = vcmp.eq.s32.totalorder %v133, %v160
  %vm417 = vcmp.eq.s32.totalorder %v133, %v161
  %vm418 = vcmp.eq.s32.totalorder %v133, %v162
  %vm419 = vcmp.eq.s32.totalorder %v133, %v163
  %vm420 = vcmp.eq.s32.totalorder %v133, %v164
  %vm421 = vcmp.eq.s32.totalorder %v133, %v165
  %vm422 = vcmp.eq.s32.totalorder %v134, %v150
  %vm423 = vcmp.eq.s32.totalorder %v134, %v151
  %vm424 = vcmp.eq.s32.totalorder %v134, %v152
  %vm425 = vcmp.eq.s32.totalorder %v134, %v153
  %vm426 = vcmp.eq.s32.totalorder %v134, %v154
  %vm427 = vcmp.eq.s32.totalorder %v134, %v155
  %vm428 = vcmp.eq.s32.totalorder %v134, %v156
  %vm429 = vcmp.eq.s32.totalorder %v134, %v157
  %vm430 = vcmp.eq.s32.totalorder %v134, %v158
  %vm431 = vcmp.eq.s32.totalorder %v134, %v159
  %vm432 = vcmp.eq.s32.totalorder %v134, %v160
  %vm433 = vcmp.eq.s32.totalorder %v134, %v161
  %vm434 = vcmp.eq.s32.totalorder %v134, %v162
  %vm435 = vcmp.eq.s32.totalorder %v134, %v163
  %vm436 = vcmp.eq.s32.totalorder %v134, %v164
  %vm437 = vcmp.eq.s32.totalorder %v134, %v165
  %vm438 = vcmp.eq.s32.totalorder %v135, %v150
  %vm439 = vcmp.eq.s32.totalorder %v135, %v151
  %vm440 = vcmp.eq.s32.totalorder %v135, %v152
  %vm441 = vcmp.eq.s32.totalorder %v135, %v153
  %vm442 = vcmp.eq.s32.totalorder %v135, %v154
  %vm443 = vcmp.eq.s32.totalorder %v135, %v155
  %vm444 = vcmp.eq.s32.totalorder %v135, %v156
  %vm445 = vcmp.eq.s32.totalorder %v135, %v157
  %vm446 = vcmp.eq.s32.totalorder %v135, %v158
  %vm447 = vcmp.eq.s32.totalorder %v135, %v159
  %vm448 = vcmp.eq.s32.totalorder %v135, %v160
  %vm449 = vcmp.eq.s32.totalorder %v135, %v161
  %vm450 = vcmp.eq.s32.totalorder %v135, %v162
  %vm451 = vcmp.eq.s32.totalorder %v135, %v163
  %vm452 = vcmp.eq.s32.totalorder %v135, %v164
  %vm453 = vcmp.eq.s32.totalorder %v135, %v165
  %vm454 = vcmp.eq.s32.totalorder %v136, %v150
  %vm455 = vcmp.eq.s32.totalorder %v136, %v151
  %vm456 = vcmp.eq.s32.totalorder %v136, %v152
  %vm457 = vcmp.eq.s32.totalorder %v136, %v153
  %vm458 = vcmp.eq.s32.totalorder %v136, %v154
  %vm459 = vcmp.eq.s32.totalorder %v136, %v155
  %vm460 = vcmp.eq.s32.totalorder %v136, %v156
  %vm461 = vcmp.eq.s32.totalorder %v136, %v157
  %vm462 = vcmp.eq.s32.totalorder %v136, %v158
  %vm463 = vcmp.eq.s32.totalorder %v136, %v159
  %vm464 = vcmp.eq.s32.totalorder %v136, %v160
  %vm465 = vcmp.eq.s32.totalorder %v136, %v161
  %vm466 = vcmp.eq.s32.totalorder %v136, %v162
  %vm467 = vcmp.eq.s32.totalorder %v136, %v163
  %vm468 = vcmp.eq.s32.totalorder %v136, %v164
  %vm469 = vcmp.eq.s32.totalorder %v136, %v165
  %vm470 = vcmp.eq.s32.totalorder %v137, %v150
  %vm471 = vcmp.eq.s32.totalorder %v137, %v151
  %vm472 = vcmp.eq.s32.totalorder %v137, %v152
  %vm473 = vcmp.eq.s32.totalorder %v137, %v153
  %vm474 = vcmp.eq.s32.totalorder %v137, %v154
  %vm475 = vcmp.eq.s32.totalorder %v137, %v155
  %vm476 = vcmp.eq.s32.totalorder %v137, %v156
  %vm477 = vcmp.eq.s32.totalorder %v137, %v157
  %vm478 = vcmp.eq.s32.totalorder %v137, %v158
  %vm479 = vcmp.eq.s32.totalorder %v137, %v159
  %vm480 = vcmp.eq.s32.totalorder %v137, %v160
  %vm481 = vcmp.eq.s32.totalorder %v137, %v161
  %vm482 = vcmp.eq.s32.totalorder %v137, %v162
  %vm483 = vcmp.eq.s32.totalorder %v137, %v163
  %vm484 = vcmp.eq.s32.totalorder %v137, %v164
  %vm485 = vcmp.eq.s32.totalorder %v137, %v165
  %vm486 = vcmp.eq.s32.totalorder %v138, %v150
  %vm487 = vcmp.eq.s32.totalorder %v138, %v151
  %vm488 = vcmp.eq.s32.totalorder %v138, %v152
  %vm489 = vcmp.eq.s32.totalorder %v138, %v153
  %vm490 = vcmp.eq.s32.totalorder %v138, %v154
  %vm491 = vcmp.eq.s32.totalorder %v138, %v155
  %vm492 = vcmp.eq.s32.totalorder %v138, %v156
  %vm493 = vcmp.eq.s32.totalorder %v138, %v157
  %vm494 = vcmp.eq.s32.totalorder %v138, %v158
  %vm495 = vcmp.eq.s32.totalorder %v138, %v159
  %vm496 = vcmp.eq.s32.totalorder %v138, %v160
  %vm497 = vcmp.eq.s32.totalorder %v138, %v161
  %vm498 = vcmp.eq.s32.totalorder %v138, %v162
  %vm499 = vcmp.eq.s32.totalorder %v138, %v163
  %vm500 = vcmp.eq.s32.totalorder %v138, %v164
  %vm501 = vcmp.eq.s32.totalorder %v138, %v165
  %vm502 = vcmp.eq.s32.totalorder %v139, %v150
  %vm503 = vcmp.eq.s32.totalorder %v139, %v151
  %vm504 = vcmp.eq.s32.totalorder %v139, %v152
  %vm505 = vcmp.eq.s32.totalorder %v139, %v153
  %vm506 = vcmp.eq.s32.totalorder %v139, %v154
  %vm507 = vcmp.eq.s32.totalorder %v139, %v155
  %vm508 = vcmp.eq.s32.totalorder %v139, %v156
  %vm509 = vcmp.eq.s32.totalorder %v139, %v157
  %vm510 = vcmp.eq.s32.totalorder %v139, %v158
  %vm511 = vcmp.eq.s32.totalorder %v139, %v159
  %vm512 = vcmp.eq.s32.totalorder %v139, %v160
  %vm513 = vcmp.eq.s32.totalorder %v139, %v161
  %vm514 = vcmp.eq.s32.totalorder %v139, %v162
  %vm515 = vcmp.eq.s32.totalorder %v139, %v163
  %vm516 = vcmp.eq.s32.totalorder %v139, %v164
  %vm517 = vcmp.eq.s32.totalorder %v139, %v165
  %vm518 = vcmp.eq.s32.totalorder %v140, %v150
  %vm519 = vcmp.eq.s32.totalorder %v140, %v151
  %vm520 = vcmp.eq.s32.totalorder %v140, %v152
  %vm521 = vcmp.eq.s32.totalorder %v140, %v153
  %vm522 = vcmp.eq.s32.totalorder %v140, %v154
  %vm523 = vcmp.eq.s32.totalorder %v140, %v155
  %vm524 = vcmp.eq.s32.totalorder %v140, %v156
  %vm525 = vcmp.eq.s32.totalorder %v140, %v157
  %vm526 = vcmp.eq.s32.totalorder %v140, %v158
  %vm527 = vcmp.eq.s32.totalorder %v140, %v159
  %vm528 = vcmp.eq.s32.totalorder %v140, %v160
  %vm529 = vcmp.eq.s32.totalorder %v140, %v161
  %vm530 = vcmp.eq.s32.totalorder %v140, %v162
  %vm531 = vcmp.eq.s32.totalorder %v140, %v163
  %vm532 = vcmp.eq.s32.totalorder %v140, %v164
  %vm533 = vcmp.eq.s32.totalorder %v140, %v165
  %vm534 = vcmp.eq.s32.totalorder %v141, %v150
  %vm535 = vcmp.eq.s32.totalorder %v141, %v151
  %vm536 = vcmp.eq.s32.totalorder %v141, %v152
  %vm537 = vcmp.eq.s32.totalorder %v141, %v153
  %vm538 = vcmp.eq.s32.totalorder %v141, %v154
  %vm539 = vcmp.eq.s32.totalorder %v141, %v155
  %vm540 = vcmp.eq.s32.totalorder %v141, %v156
  %vm541 = vcmp.eq.s32.totalorder %v141, %v157
  %vm542 = vcmp.eq.s32.totalorder %v141, %v158
  %vm543 = vcmp.eq.s32.totalorder %v141, %v159
  %vm544 = vcmp.eq.s32.totalorder %v141, %v160
  %vm545 = vcmp.eq.s32.totalorder %v141, %v161
  %vm546 = vcmp.eq.s32.totalorder %v141, %v162
  %vm547 = vcmp.eq.s32.totalorder %v141, %v163
  %vm548 = vcmp.eq.s32.totalorder %v141, %v164
  %vm549 = vcmp.eq.s32.totalorder %v141, %v165
  %vm550 = vcmp.eq.s32.totalorder %v142, %v150
  %vm551 = vcmp.eq.s32.totalorder %v142, %v151
  %vm552 = vcmp.eq.s32.totalorder %v142, %v152
  %vm553 = vcmp.eq.s32.totalorder %v142, %v153
  %vm554 = vcmp.eq.s32.totalorder %v142, %v154
  %vm555 = vcmp.eq.s32.totalorder %v142, %v155
  %vm556 = vcmp.eq.s32.totalorder %v142, %v156
  %vm557 = vcmp.eq.s32.totalorder %v142, %v157
  %vm558 = vcmp.eq.s32.totalorder %v142, %v158
  %vm559 = vcmp.eq.s32.totalorder %v142, %v159
  %vm560 = vcmp.eq.s32.totalorder %v142, %v160
  %vm561 = vcmp.eq.s32.totalorder %v142, %v161
  %vm562 = vcmp.eq.s32.totalorder %v142, %v162
  %vm563 = vcmp.eq.s32.totalorder %v142, %v163
  %vm564 = vcmp.eq.s32.totalorder %v142, %v164
  %vm565 = vcmp.eq.s32.totalorder %v142, %v165
  %vm566 = vcmp.eq.s32.totalorder %v143, %v150
  %vm567 = vcmp.eq.s32.totalorder %v143, %v151
  %vm568 = vcmp.eq.s32.totalorder %v143, %v152
  %vm569 = vcmp.eq.s32.totalorder %v143, %v153
  %vm570 = vcmp.eq.s32.totalorder %v143, %v154
  %vm571 = vcmp.eq.s32.totalorder %v143, %v155
  %vm572 = vcmp.eq.s32.totalorder %v143, %v156
  %vm573 = vcmp.eq.s32.totalorder %v143, %v157
  %vm574 = vcmp.eq.s32.totalorder %v143, %v158
  %vm575 = vcmp.eq.s32.totalorder %v143, %v159
  %vm576 = vcmp.eq.s32.totalorder %v143, %v160
  %vm577 = vcmp.eq.s32.totalorder %v143, %v161
  %vm578 = vcmp.eq.s32.totalorder %v143, %v162
  %vm579 = vcmp.eq.s32.totalorder %v143, %v163
  %vm580 = vcmp.eq.s32.totalorder %v143, %v164
  %vm581 = vcmp.eq.s32.totalorder %v143, %v165
  %vm582 = vcmp.eq.s32.totalorder %v144, %v150
  %vm583 = vcmp.eq.s32.totalorder %v144, %v151
  %vm584 = vcmp.eq.s32.totalorder %v144, %v152
  %vm585 = vcmp.eq.s32.totalorder %v144, %v153
  %vm586 = vcmp.eq.s32.totalorder %v144, %v154
  %vm587 = vcmp.eq.s32.totalorder %v144, %v155
  %vm588 = vcmp.eq.s32.totalorder %v144, %v156
  %vm589 = vcmp.eq.s32.totalorder %v144, %v157
  %vm590 = vcmp.eq.s32.totalorder %v144, %v158
  %vm591 = vcmp.eq.s32.totalorder %v144, %v159
  %vm592 = vcmp.eq.s32.totalorder %v144, %v160
  %vm593 = vcmp.eq.s32.totalorder %v144, %v161
  %vm594 = vcmp.eq.s32.totalorder %v144, %v162
  %vm595 = vcmp.eq.s32.totalorder %v144, %v163
  %vm596 = vcmp.eq.s32.totalorder %v144, %v164
  %vm597 = vcmp.eq.s32.totalorder %v144, %v165
  %vm598 = vcmp.eq.s32.totalorder %v145, %v150
  %vm599 = vcmp.eq.s32.totalorder %v145, %v151
  %vm600 = vcmp.eq.s32.totalorder %v145, %v152
  %vm601 = vcmp.eq.s32.totalorder %v145, %v153
  %vm602 = vcmp.eq.s32.totalorder %v145, %v154
  %vm603 = vcmp.eq.s32.totalorder %v145, %v155
  %vm604 = vcmp.eq.s32.totalorder %v145, %v156
  %vm605 = vcmp.eq.s32.totalorder %v145, %v157
  %vm606 = vcmp.eq.s32.totalorder %v145, %v158
  %vm607 = vcmp.eq.s32.totalorder %v145, %v159
  %vm608 = vcmp.eq.s32.totalorder %v145, %v160
  %vm609 = vcmp.eq.s32.totalorder %v145, %v161
  %vm610 = vcmp.eq.s32.totalorder %v145, %v162
  %vm611 = vcmp.eq.s32.totalorder %v145, %v163
  %vm612 = vcmp.eq.s32.totalorder %v145, %v164
  %vm613 = vcmp.eq.s32.totalorder %v145, %v165
  %vm614 = vcmp.eq.s32.totalorder %v146, %v150
  %vm615 = vcmp.eq.s32.totalorder %v146, %v151
  %vm616 = vcmp.eq.s32.totalorder %v146, %v152
  %vm617 = vcmp.eq.s32.totalorder %v146, %v153
  %vm618 = vcmp.eq.s32.totalorder %v146, %v154
  %vm619 = vcmp.eq.s32.totalorder %v146, %v155
  %vm620 = vcmp.eq.s32.totalorder %v146, %v156
  %vm621 = vcmp.eq.s32.totalorder %v146, %v157
  %vm622 = vcmp.eq.s32.totalorder %v146, %v158
  %vm623 = vcmp.eq.s32.totalorder %v146, %v159
  %vm624 = vcmp.eq.s32.totalorder %v146, %v160
  %vm625 = vcmp.eq.s32.totalorder %v146, %v161
  %vm626 = vcmp.eq.s32.totalorder %v146, %v162
  %vm627 = vcmp.eq.s32.totalorder %v146, %v163
  %vm628 = vcmp.eq.s32.totalorder %v146, %v164
  %vm629 = vcmp.eq.s32.totalorder %v146, %v165
  %vm630 = vcmp.eq.s32.totalorder %v147, %v150
  %vm631 = vcmp.eq.s32.totalorder %v147, %v151
  %vm632 = vcmp.eq.s32.totalorder %v147, %v152
  %vm633 = vcmp.eq.s32.totalorder %v147, %v153
  %vm634 = vcmp.eq.s32.totalorder %v147, %v154
  %vm635 = vcmp.eq.s32.totalorder %v147, %v155
  %vm636 = vcmp.eq.s32.totalorder %v147, %v156
  %vm637 = vcmp.eq.s32.totalorder %v147, %v157
  %vm638 = vcmp.eq.s32.totalorder %v147, %v158
  %vm639 = vcmp.eq.s32.totalorder %v147, %v159
  %vm640 = vcmp.eq.s32.totalorder %v147, %v160
  %vm641 = vcmp.eq.s32.totalorder %v147, %v161
  %vm642 = vcmp.eq.s32.totalorder %v147, %v162
  %vm643 = vcmp.eq.s32.totalorder %v147, %v163
  %vm644 = vcmp.eq.s32.totalorder %v147, %v164
  %vm645 = vcmp.eq.s32.totalorder %v147, %v165
  %vm646 = vcmp.eq.s32.totalorder %v148, %v150
  %vm647 = vcmp.eq.s32.totalorder %v148, %v151
  %vm648 = vcmp.eq.s32.totalorder %v148, %v152
  %vm649 = vcmp.eq.s32.totalorder %v148, %v153
  %vm650 = vcmp.eq.s32.totalorder %v148, %v154
  %vm651 = vcmp.eq.s32.totalorder %v148, %v155
  %vm652 = vcmp.eq.s32.totalorder %v148, %v156
  %vm653 = vcmp.eq.s32.totalorder %v148, %v157
  %vm654 = vcmp.eq.s32.totalorder %v148, %v158
  %vm655 = vcmp.eq.s32.totalorder %v148, %v159
  %vm656 = vcmp.eq.s32.totalorder %v148, %v160
  %vm657 = vcmp.eq.s32.totalorder %v148, %v161
  %vm658 = vcmp.eq.s32.totalorder %v148, %v162
  %vm659 = vcmp.eq.s32.totalorder %v148, %v163
  %vm660 = vcmp.eq.s32.totalorder %v148, %v164
  %vm661 = vcmp.eq.s32.totalorder %v148, %v165
  %vm662 = vcmp.eq.s32.totalorder %v149, %v150
  %vm663 = vcmp.eq.s32.totalorder %v149, %v151
  %vm664 = vcmp.eq.s32.totalorder %v149, %v152
  %vm665 = vcmp.eq.s32.totalorder %v149, %v153
  %vm666 = vcmp.eq.s32.totalorder %v149, %v154
  %vm667 = vcmp.eq.s32.totalorder %v149, %v155
  %vm668 = vcmp.eq.s32.totalorder %v149, %v156
  %vm669 = vcmp.eq.s32.totalorder %v149, %v157
  %vm670 = vcmp.eq.s32.totalorder %v149, %v158
  %vm671 = vcmp.eq.s32.totalorder %v149, %v159
  %vm672 = vcmp.eq.s32.totalorder %v149, %v160
  %vm673 = vcmp.eq.s32.totalorder %v149, %v161
  %vm674 = vcmp.eq.s32.totalorder %v149, %v162
  %vm675 = vcmp.eq.s32.totalorder %v149, %v163
  %vm676 = vcmp.eq.s32.totalorder %v149, %v164
  %vm677 = vcmp.eq.s32.totalorder %v149, %v165
  %v678 = vld [vmem:[%s1] sm:$0xff]
  %v679 = vld [vmem:[%s1 + $0x8] sm:$0xff]
  %v680 = vld [vmem:[%s1 + $0x10] sm:$0xff]
  %v681 = vld [vmem:[%s1 + $0x18] sm:$0xff]
  %v682 = vld [vmem:[%s1 + $0x20] sm:$0xff]
  %v683 = vld [vmem:[%s1 + $0x28] sm:$0xff]
  %v684 = vld [vmem:[%s1 + $0x30] sm:$0xff]
  %v685 = vld [vmem:[%s1 + $0x38] sm:$0xff]
  %v686 = vld [vmem:[%s1 + $0x40] sm:$0xff]
  %v687 = vld [vmem:[%s1 + $0x48] sm:$0xff]
  %v688 = vld [vmem:[%s1 + $0x50] sm:$0xff]
  %v689 = vld [vmem:[%s1 + $0x58] sm:$0xff]
  %v690 = vld [vmem:[%s1 + $0x60] sm:$0xff]
  %v691 = vld [vmem:[%s1 + $0x68] sm:$0xff]
  %v692 = vld [vmem:[%s1 + $0x70] sm:$0xff]
  %v693 = vld [vmem:[%s1 + $0x78] sm:$0xff]
  %v694 = vld [vmem:[%s1 + $0x80] sm:$0xff]
  %v695 = vld [vmem:[%s1 + $0x88] sm:$0xff]
  %v696 = vld [vmem:[%s1 + $0x90] sm:$0xff]
  %v697 = vld [vmem:[%s1 + $0x98] sm:$0xff]
  %v698 = vld [vmem:[%s1 + $0xa0] sm:$0xff]
  %v699 = vld [vmem:[%s1 + $0xa8] sm:$0xff]
  %v700 = vld [vmem:[%s1 + $0xb0] sm:$0xff]
  %v701 = vld [vmem:[%s1 + $0xb8] sm:$0xff]
  %v702 = vld [vmem:[%s1 + $0xc0] sm:$0xff]
  %v703 = vld [vmem:[%s1 + $0xc8] sm:$0xff]
  %v704 = vld [vmem:[%s1 + $0xd0] sm:$0xff]
  %v705 = vld [vmem:[%s1 + $0xd8] sm:$0xff]
  %v706 = vld [vmem:[%s1 + $0xe0] sm:$0xff]
  %v707 = vld [vmem:[%s1 + $0xe8] sm:$0xff]
  %v708 = vld [vmem:[%s1 + $0xf0] sm:$0xff]
  %v709 = vld [vmem:[%s1 + $0xf8] sm:$0xff]
  %v710 = vld [vmem:[%s1 + $0x100] sm:$0xff]
  %v711 = vld [vmem:[%s1 + $0x108] sm:$0xff]
  %v712 = vld [vmem:[%s1 + $0x110] sm:$0xff]
  %v713 = vld [vmem:[%s1 + $0x118] sm:$0xff]
  %v714 = vld [vmem:[%s1 + $0x120] sm:$0xff]
  %v715 = vld [vmem:[%s1 + $0x128] sm:$0xff]
  %v716 = vld [vmem:[%s1 + $0x130] sm:$0xff]
  %v717 = vld [vmem:[%s1 + $0x138] sm:$0xff]
  %v718 = vld [vmem:[%s1 + $0x140] sm:$0xff]
  %v719 = vld [vmem:[%s1 + $0x148] sm:$0xff]
  %v720 = vld [vmem:[%s1 + $0x150] sm:$0xff]
  %v721 = vld [vmem:[%s1 + $0x158] sm:$0xff]
  %v722 = vld [vmem:[%s1 + $0x160] sm:$0xff]
  %v723 = vld [vmem:[%s1 + $0x168] sm:$0xff]
  %v724 = vld [vmem:[%s1 + $0x170] sm:$0xff]
  %v725 = vld [vmem:[%s1 + $0x178] sm:$0xff]
  %v726 = vld [vmem:[%s1 + $0x180] sm:$0xff]
  %v727 = vld [vmem:[%s1 + $0x188] sm:$0xff]
  %v728 = vld [vmem:[%s1 + $0x190] sm:$0xff]
  %v729 = vld [vmem:[%s1 + $0x198] sm:$0xff]
  %v730 = vld [vmem:[%s1 + $0x1a0] sm:$0xff]
  %v731 = vld [vmem:[%s1 + $0x1a8] sm:$0xff]
  %v732 = vld [vmem:[%s1 + $0x1b0] sm:$0xff]
  %v733 = vld [vmem:[%s1 + $0x1b8] sm:$0xff]
  %v734 = vld [vmem:[%s1 + $0x1c0] sm:$0xff]
  %v735 = vld [vmem:[%s1 + $0x1c8] sm:$0xff]
  %v736 = vld [vmem:[%s1 + $0x1d0] sm:$0xff]
  %v737 = vld [vmem:[%s1 + $0x1d8] sm:$0xff]
  %v738 = vld [vmem:[%s1 + $0x1e0] sm:$0xff]
  %v739 = vld [vmem:[%s1 + $0x1e8] sm:$0xff]
  %v740 = vld [vmem:[%s1 + $0x1f0] sm:$0xff]
  %v741 = vld [vmem:[%s1 + $0x1f8] sm:$0xff]
  %v742 = vld [vmem:[%s1 + $0x200] sm:$0xff]
  %v743 = vld [vmem:[%s1 + $0x208] sm:$0xff]
  %v744 = vld [vmem:[%s1 + $0x210] sm:$0xff]
  %v745 = vld [vmem:[%s1 + $0x218] sm:$0xff]
  %v746 = vld [vmem:[%s1 + $0x220] sm:$0xff]
  %v747 = vld [vmem:[%s1 + $0x228] sm:$0xff]
  %v748 = vld [vmem:[%s1 + $0x230] sm:$0xff]
  %v749 = vld [vmem:[%s1 + $0x238] sm:$0xff]
  %v750 = vld [vmem:[%s1 + $0x240] sm:$0xff]
  %v751 = vld [vmem:[%s1 + $0x248] sm:$0xff]
  %v752 = vld [vmem:[%s1 + $0x250] sm:$0xff]
  %v753 = vld [vmem:[%s1 + $0x258] sm:$0xff]
  %v754 = vld [vmem:[%s1 + $0x260] sm:$0xff]
  %v755 = vld [vmem:[%s1 + $0x268] sm:$0xff]
  %v756 = vld [vmem:[%s1 + $0x270] sm:$0xff]
  %v757 = vld [vmem:[%s1 + $0x278] sm:$0xff]
  %v758 = vld [vmem:[%s1 + $0x280] sm:$0xff]
  %v759 = vld [vmem:[%s1 + $0x288] sm:$0xff]
  %v760 = vld [vmem:[%s1 + $0x290] sm:$0xff]
  %v761 = vld [vmem:[%s1 + $0x298] sm:$0xff]
  %v762 = vld [vmem:[%s1 + $0x2a0] sm:$0xff]
  %v763 = vld [vmem:[%s1 + $0x2a8] sm:$0xff]
  %v764 = vld [vmem:[%s1 + $0x2b0] sm:$0xff]
  %v765 = vld [vmem:[%s1 + $0x2b8] sm:$0xff]
  %v766 = vld [vmem:[%s1 + $0x2c0] sm:$0xff]
  %v767 = vld [vmem:[%s1 + $0x2c8] sm:$0xff]
  %v768 = vld [vmem:[%s1 + $0x2d0] sm:$0xff]
  %v769 = vld [vmem:[%s1 + $0x2d8] sm:$0xff]
  %v770 = vld [vmem:[%s1 + $0x2e0] sm:$0xff]
  %v771 = vld [vmem:[%s1 + $0x2e8] sm:$0xff]
  %v772 = vld [vmem:[%s1 + $0x2f0] sm:$0xff]
  %v773 = vld [vmem:[%s1 + $0x2f8] sm:$0xff]
  %v774 = vld [vmem:[%s1 + $0x300] sm:$0xff]
  %v775 = vld [vmem:[%s1 + $0x308] sm:$0xff]
  %v776 = vld [vmem:[%s1 + $0x310] sm:$0xff]
  %v777 = vld [vmem:[%s1 + $0x318] sm:$0xff]
  %v778 = vld [vmem:[%s1 + $0x320] sm:$0xff]
  %v779 = vld [vmem:[%s1 + $0x328] sm:$0xff]
  %v780 = vld [vmem:[%s1 + $0x330] sm:$0xff]
  %v781 = vld [vmem:[%s1 + $0x338] sm:$0xff]
  %v782 = vld [vmem:[%s1 + $0x340] sm:$0xff]
  %v783 = vld [vmem:[%s1 + $0x348] sm:$0xff]
  %v784 = vld [vmem:[%s1 + $0x350] sm:$0xff]
  %v785 = vld [vmem:[%s1 + $0x358] sm:$0xff]
  %v786 = vld [vmem:[%s1 + $0x360] sm:$0xff]
  %v787 = vld [vmem:[%s1 + $0x368] sm:$0xff]
  %v788 = vld [vmem:[%s1 + $0x370] sm:$0xff]
  %v789 = vld [vmem:[%s1 + $0x378] sm:$0xff]
  %v790 = vld [vmem:[%s1 + $0x380] sm:$0xff]
  %v791 = vld [vmem:[%s1 + $0x388] sm:$0xff]
  %v792 = vld [vmem:[%s1 + $0x390] sm:$0xff]
  %v793 = vld [vmem:[%s1 + $0x398] sm:$0xff]
  %v794 = vld [vmem:[%s1 + $0x3a0] sm:$0xff]
  %v795 = vld [vmem:[%s1 + $0x3a8] sm:$0xff]
  %v796 = vld [vmem:[%s1 + $0x3b0] sm:$0xff]
  %v797 = vld [vmem:[%s1 + $0x3b8] sm:$0xff]
  %v798 = vld [vmem:[%s1 + $0x3c0] sm:$0xff]
  %v799 = vld [vmem:[%s1 + $0x3c8] sm:$0xff]
  %v800 = vld [vmem:[%s1 + $0x3d0] sm:$0xff]
  %v801 = vld [vmem:[%s1 + $0x3d8] sm:$0xff]
  %v802 = vld [vmem:[%s1 + $0x3e0] sm:$0xff]
  %v803 = vld [vmem:[%s1 + $0x3e8] sm:$0xff]
  %v804 = vld [vmem:[%s1 + $0x3f0] sm:$0xff]
  %v805 = vld [vmem:[%s1 + $0x3f8] sm:$0xff]
  %v806 = vld [vmem:[%s1 + $0x400] sm:$0xff]
  %v807 = vld [vmem:[%s1 + $0x408] sm:$0xff]
  %v808 = vld [vmem:[%s1 + $0x410] sm:$0xff]
  %v809 = vld [vmem:[%s1 + $0x418] sm:$0xff]
  %v810 = vld [vmem:[%s1 + $0x420] sm:$0xff]
  %v811 = vld [vmem:[%s1 + $0x428] sm:$0xff]
  %v812 = vld [vmem:[%s1 + $0x430] sm:$0xff]
  %v813 = vld [vmem:[%s1 + $0x438] sm:$0xff]
  %v814 = vld [vmem:[%s1 + $0x440] sm:$0xff]
  %v815 = vld [vmem:[%s1 + $0x448] sm:$0xff]
  %v816 = vld [vmem:[%s1 + $0x450] sm:$0xff]
  %v817 = vld [vmem:[%s1 + $0x458] sm:$0xff]
  %v818 = vld [vmem:[%s1 + $0x460] sm:$0xff]
  %v819 = vld [vmem:[%s1 + $0x468] sm:$0xff]
  %v820 = vld [vmem:[%s1 + $0x470] sm:$0xff]
  %v821 = vld [vmem:[%s1 + $0x478] sm:$0xff]
  %v822 = vld [vmem:[%s1 + $0x480] sm:$0xff]
  %v823 = vld [vmem:[%s1 + $0x488] sm:$0xff]
  %v824 = vld [vmem:[%s1 + $0x490] sm:$0xff]
  %v825 = vld [vmem:[%s1 + $0x498] sm:$0xff]
  %v826 = vld [vmem:[%s1 + $0x4a0] sm:$0xff]
  %v827 = vld [vmem:[%s1 + $0x4a8] sm:$0xff]
  %v828 = vld [vmem:[%s1 + $0x4b0] sm:$0xff]
  %v829 = vld [vmem:[%s1 + $0x4b8] sm:$0xff]
  %v830 = vld [vmem:[%s1 + $0x4c0] sm:$0xff]
  %v831 = vld [vmem:[%s1 + $0x4c8] sm:$0xff]
  %v832 = vld [vmem:[%s1 + $0x4d0] sm:$0xff]
  %v833 = vld [vmem:[%s1 + $0x4d8] sm:$0xff]
  %v834 = vld [vmem:[%s1 + $0x4e0] sm:$0xff]
  %v835 = vld [vmem:[%s1 + $0x4e8] sm:$0xff]
  %v836 = vld [vmem:[%s1 + $0x4f0] sm:$0xff]
  %v837 = vld [vmem:[%s1 + $0x4f8] sm:$0xff]
  %v838 = vld [vmem:[%s1 + $0x500] sm:$0xff]
  %v839 = vld [vmem:[%s1 + $0x508] sm:$0xff]
  %v840 = vld [vmem:[%s1 + $0x510] sm:$0xff]
  %v841 = vld [vmem:[%s1 + $0x518] sm:$0xff]
  %v842 = vld [vmem:[%s1 + $0x520] sm:$0xff]
  %v843 = vld [vmem:[%s1 + $0x528] sm:$0xff]
  %v844 = vld [vmem:[%s1 + $0x530] sm:$0xff]
  %v845 = vld [vmem:[%s1 + $0x538] sm:$0xff]
  %v846 = vld [vmem:[%s1 + $0x540] sm:$0xff]
  %v847 = vld [vmem:[%s1 + $0x548] sm:$0xff]
  %v848 = vld [vmem:[%s1 + $0x550] sm:$0xff]
  %v849 = vld [vmem:[%s1 + $0x558] sm:$0xff]
  %v850 = vld [vmem:[%s1 + $0x560] sm:$0xff]
  %v851 = vld [vmem:[%s1 + $0x568] sm:$0xff]
  %v852 = vld [vmem:[%s1 + $0x570] sm:$0xff]
  %v853 = vld [vmem:[%s1 + $0x578] sm:$0xff]
  %v854 = vld [vmem:[%s1 + $0x580] sm:$0xff]
  %v855 = vld [vmem:[%s1 + $0x588] sm:$0xff]
  %v856 = vld [vmem:[%s1 + $0x590] sm:$0xff]
  %v857 = vld [vmem:[%s1 + $0x598] sm:$0xff]
  %v858 = vld [vmem:[%s1 + $0x5a0] sm:$0xff]
  %v859 = vld [vmem:[%s1 + $0x5a8] sm:$0xff]
  %v860 = vld [vmem:[%s1 + $0x5b0] sm:$0xff]
  %v861 = vld [vmem:[%s1 + $0x5b8] sm:$0xff]
  %v862 = vld [vmem:[%s1 + $0x5c0] sm:$0xff]
  %v863 = vld [vmem:[%s1 + $0x5c8] sm:$0xff]
  %v864 = vld [vmem:[%s1 + $0x5d0] sm:$0xff]
  %v865 = vld [vmem:[%s1 + $0x5d8] sm:$0xff]
  %v866 = vld [vmem:[%s1 + $0x5e0] sm:$0xff]
  %v867 = vld [vmem:[%s1 + $0x5e8] sm:$0xff]
  %v868 = vld [vmem:[%s1 + $0x5f0] sm:$0xff]
  %v869 = vld [vmem:[%s1 + $0x5f8] sm:$0xff]
  %v870 = vld [vmem:[%s1 + $0x600] sm:$0xff]
  %v871 = vld [vmem:[%s1 + $0x608] sm:$0xff]
  %v872 = vld [vmem:[%s1 + $0x610] sm:$0xff]
  %v873 = vld [vmem:[%s1 + $0x618] sm:$0xff]
  %v874 = vld [vmem:[%s1 + $0x620] sm:$0xff]
  %v875 = vld [vmem:[%s1 + $0x628] sm:$0xff]
  %v876 = vld [vmem:[%s1 + $0x630] sm:$0xff]
  %v877 = vld [vmem:[%s1 + $0x638] sm:$0xff]
  %v878 = vld [vmem:[%s1 + $0x640] sm:$0xff]
  %v879 = vld [vmem:[%s1 + $0x648] sm:$0xff]
  %v880 = vld [vmem:[%s1 + $0x650] sm:$0xff]
  %v881 = vld [vmem:[%s1 + $0x658] sm:$0xff]
  %v882 = vld [vmem:[%s1 + $0x660] sm:$0xff]
  %v883 = vld [vmem:[%s1 + $0x668] sm:$0xff]
  %v884 = vld [vmem:[%s1 + $0x670] sm:$0xff]
  %v885 = vld [vmem:[%s1 + $0x678] sm:$0xff]
  %v886 = vld [vmem:[%s1 + $0x680] sm:$0xff]
  %v887 = vld [vmem:[%s1 + $0x688] sm:$0xff]
  %v888 = vld [vmem:[%s1 + $0x690] sm:$0xff]
  %v889 = vld [vmem:[%s1 + $0x698] sm:$0xff]
  %v890 = vld [vmem:[%s1 + $0x6a0] sm:$0xff]
  %v891 = vld [vmem:[%s1 + $0x6a8] sm:$0xff]
  %v892 = vld [vmem:[%s1 + $0x6b0] sm:$0xff]
  %v893 = vld [vmem:[%s1 + $0x6b8] sm:$0xff]
  %v894 = vld [vmem:[%s1 + $0x6c0] sm:$0xff]
  %v895 = vld [vmem:[%s1 + $0x6c8] sm:$0xff]
  %v896 = vld [vmem:[%s1 + $0x6d0] sm:$0xff]
  %v897 = vld [vmem:[%s1 + $0x6d8] sm:$0xff]
  %v898 = vld [vmem:[%s1 + $0x6e0] sm:$0xff]
  %v899 = vld [vmem:[%s1 + $0x6e8] sm:$0xff]
  %v900 = vld [vmem:[%s1 + $0x6f0] sm:$0xff]
  %v901 = vld [vmem:[%s1 + $0x6f8] sm:$0xff]
  %v902 = vld [vmem:[%s1 + $0x700] sm:$0xff]
  %v903 = vld [vmem:[%s1 + $0x708] sm:$0xff]
  %v904 = vld [vmem:[%s1 + $0x710] sm:$0xff]
  %v905 = vld [vmem:[%s1 + $0x718] sm:$0xff]
  %v906 = vld [vmem:[%s1 + $0x720] sm:$0xff]
  %v907 = vld [vmem:[%s1 + $0x728] sm:$0xff]
  %v908 = vld [vmem:[%s1 + $0x730] sm:$0xff]
  %v909 = vld [vmem:[%s1 + $0x738] sm:$0xff]
  %v910 = vld [vmem:[%s1 + $0x740] sm:$0xff]
  %v911 = vld [vmem:[%s1 + $0x748] sm:$0xff]
  %v912 = vld [vmem:[%s1 + $0x750] sm:$0xff]
  %v913 = vld [vmem:[%s1 + $0x758] sm:$0xff]
  %v914 = vld [vmem:[%s1 + $0x760] sm:$0xff]
  %v915 = vld [vmem:[%s1 + $0x768] sm:$0xff]
  %v916 = vld [vmem:[%s1 + $0x770] sm:$0xff]
  %v917 = vld [vmem:[%s1 + $0x778] sm:$0xff]
  %v918 = vld [vmem:[%s1 + $0x780] sm:$0xff]
  %v919 = vld [vmem:[%s1 + $0x788] sm:$0xff]
  %v920 = vld [vmem:[%s1 + $0x790] sm:$0xff]
  %v921 = vld [vmem:[%s1 + $0x798] sm:$0xff]
  %v922 = vld [vmem:[%s1 + $0x7a0] sm:$0xff]
  %v923 = vld [vmem:[%s1 + $0x7a8] sm:$0xff]
  %v924 = vld [vmem:[%s1 + $0x7b0] sm:$0xff]
  %v925 = vld [vmem:[%s1 + $0x7b8] sm:$0xff]
  %v926 = vld [vmem:[%s1 + $0x7c0] sm:$0xff]
  %v927 = vld [vmem:[%s1 + $0x7c8] sm:$0xff]
  %v928 = vld [vmem:[%s1 + $0x7d0] sm:$0xff]
  %v929 = vld [vmem:[%s1 + $0x7d8] sm:$0xff]
  %v930 = vld [vmem:[%s1 + $0x7e0] sm:$0xff]
  %v931 = vld [vmem:[%s1 + $0x7e8] sm:$0xff]
  %v932 = vld [vmem:[%s1 + $0x7f0] sm:$0xff]
  %v933 = vld [vmem:[%s1 + $0x7f8] sm:$0xff]
  %v934 = vsel %vm166, 1, 0
  %v935 = vsel %vm167, 1, 0
  %v936 = vsel %vm168, 1, 0
  %v937 = vsel %vm169, 1, 0
  %v938 = vsel %vm170, 1, 0
  %v939 = vsel %vm171, 1, 0
  %v940 = vsel %vm172, 1, 0
  %v941 = vsel %vm173, 1, 0
  %v942 = vsel %vm174, 1, 0
  %v943 = vsel %vm175, 1, 0
  %v944 = vsel %vm176, 1, 0
  %v945 = vsel %vm177, 1, 0
  %v946 = vsel %vm178, 1, 0
  %v947 = vsel %vm179, 1, 0
  %v948 = vsel %vm180, 1, 0
  %v949 = vsel %vm181, 1, 0
  %v950 = vsel %vm182, 1, 0
  %v951 = vsel %vm183, 1, 0
  %v952 = vsel %vm184, 1, 0
  %v953 = vsel %vm185, 1, 0
  %v954 = vsel %vm186, 1, 0
  %v955 = vsel %vm187, 1, 0
  %v956 = vsel %vm188, 1, 0
  %v957 = vsel %vm189, 1, 0
  %v958 = vsel %vm190, 1, 0
  %v959 = vsel %vm191, 1, 0
  %v960 = vsel %vm192, 1, 0
  %v961 = vsel %vm193, 1, 0
  %v962 = vsel %vm194, 1, 0
  %v963 = vsel %vm195, 1, 0
  %v964 = vsel %vm196, 1, 0
  %v965 = vsel %vm197, 1, 0
  %v966 = vsel %vm198, 1, 0
  %v967 = vsel %vm199, 1, 0
  %v968 = vsel %vm200, 1, 0
  %v969 = vsel %vm201, 1, 0
  %v970 = vsel %vm202, 1, 0
  %v971 = vsel %vm203, 1, 0
  %v972 = vsel %vm204, 1, 0
  %v973 = vsel %vm205, 1, 0
  %v974 = vsel %vm206, 1, 0
  %v975 = vsel %vm207, 1, 0
  %v976 = vsel %vm208, 1, 0
  %v977 = vsel %vm209, 1, 0
  %v978 = vsel %vm210, 1, 0
  %v979 = vsel %vm211, 1, 0
  %v980 = vsel %vm212, 1, 0
  %v981 = vsel %vm213, 1, 0
  %v982 = vsel %vm214, 1, 0
  %v983 = vsel %vm215, 1, 0
  %v984 = vsel %vm216, 1, 0
  %v985 = vsel %vm217, 1, 0
  %v986 = vsel %vm218, 1, 0
  %v987 = vsel %vm219, 1, 0
  %v988 = vsel %vm220, 1, 0
  %v989 = vsel %vm221, 1, 0
  %v990 = vsel %vm222, 1, 0
  %v991 = vsel %vm223, 1, 0
  %v992 = vsel %vm224, 1, 0
  %v993 = vsel %vm225, 1, 0
  %v994 = vsel %vm226, 1, 0
  %v995 = vsel %vm227, 1, 0
  %v996 = vsel %vm228, 1, 0
  %v997 = vsel %vm229, 1, 0
  %v998 = vsel %vm230, 1, 0
  %v999 = vsel %vm231, 1, 0
  %v1000 = vsel %vm232, 1, 0
  %v1001 = vsel %vm233, 1, 0
  %v1002 = vsel %vm234, 1, 0
  %v1003 = vsel %vm235, 1, 0
  %v1004 = vsel %vm236, 1, 0
  %v1005 = vsel %vm237, 1, 0
  %v1006 = vsel %vm238, 1, 0
  %v1007 = vsel %vm239, 1, 0
  %v1008 = vsel %vm240, 1, 0
  %v1009 = vsel %vm241, 1, 0
  %v1010 = vsel %vm242, 1, 0
  %v1011 = vsel %vm243, 1, 0
  %v1012 = vsel %vm244, 1, 0
  %v1013 = vsel %vm245, 1, 0
  %v1014 = vsel %vm246, 1, 0
  %v1015 = vsel %vm247, 1, 0
  %v1016 = vsel %vm248, 1, 0
  %v1017 = vsel %vm249, 1, 0
  %v1018 = vsel %vm250, 1, 0
  %v1019 = vsel %vm251, 1, 0
  %v1020 = vsel %vm252, 1, 0
  %v1021 = vsel %vm253, 1, 0
  %v1022 = vsel %vm254, 1, 0
  %v1023 = vsel %vm255, 1, 0
  %v1024 = vsel %vm256, 1, 0
  %v1025 = vsel %vm257, 1, 0
  %v1026 = vsel %vm258, 1, 0
  %v1027 = vsel %vm259, 1, 0
  %v1028 = vsel %vm260, 1, 0
  %v1029 = vsel %vm261, 1, 0
  %v1030 = vsel %vm262, 1, 0
  %v1031 = vsel %vm263, 1, 0
  %v1032 = vsel %vm264, 1, 0
  %v1033 = vsel %vm265, 1, 0
  %v1034 = vsel %vm266, 1, 0
  %v1035 = vsel %vm267, 1, 0
  %v1036 = vsel %vm268, 1, 0
  %v1037 = vsel %vm269, 1, 0
  %v1038 = vsel %vm270, 1, 0
  %v1039 = vsel %vm271, 1, 0
  %v1040 = vsel %vm272, 1, 0
  %v1041 = vsel %vm273, 1, 0
  %v1042 = vsel %vm274, 1, 0
  %v1043 = vsel %vm275, 1, 0
  %v1044 = vsel %vm276, 1, 0
  %v1045 = vsel %vm277, 1, 0
  %v1046 = vsel %vm278, 1, 0
  %v1047 = vsel %vm279, 1, 0
  %v1048 = vsel %vm280, 1, 0
  %v1049 = vsel %vm281, 1, 0
  %v1050 = vsel %vm282, 1, 0
  %v1051 = vsel %vm283, 1, 0
  %v1052 = vsel %vm284, 1, 0
  %v1053 = vsel %vm285, 1, 0
  %v1054 = vsel %vm286, 1, 0
  %v1055 = vsel %vm287, 1, 0
  %v1056 = vsel %vm288, 1, 0
  %v1057 = vsel %vm289, 1, 0
  %v1058 = vsel %vm290, 1, 0
  %v1059 = vsel %vm291, 1, 0
  %v1060 = vsel %vm292, 1, 0
  %v1061 = vsel %vm293, 1, 0
  %v1062 = vsel %vm294, 1, 0
  %v1063 = vsel %vm295, 1, 0
  %v1064 = vsel %vm296, 1, 0
  %v1065 = vsel %vm297, 1, 0
  %v1066 = vsel %vm298, 1, 0
  %v1067 = vsel %vm299, 1, 0
  %v1068 = vsel %vm300, 1, 0
  %v1069 = vsel %vm301, 1, 0
  %v1070 = vsel %vm302, 1, 0
  %v1071 = vsel %vm303, 1, 0
  %v1072 = vsel %vm304, 1, 0
  %v1073 = vsel %vm305, 1, 0
  %v1074 = vsel %vm306, 1, 0
  %v1075 = vsel %vm307, 1, 0
  %v1076 = vsel %vm308, 1, 0
  %v1077 = vsel %vm309, 1, 0
  %v1078 = vsel %vm310, 1, 0
  %v1079 = vsel %vm311, 1, 0
  %v1080 = vsel %vm312, 1, 0
  %v1081 = vsel %vm313, 1, 0
  %v1082 = vsel %vm314, 1, 0
  %v1083 = vsel %vm315, 1, 0
  %v1084 = vsel %vm316, 1, 0
  %v1085 = vsel %vm317, 1, 0
  %v1086 = vsel %vm318, 1, 0
  %v1087 = vsel %vm319, 1, 0
  %v1088 = vsel %vm320, 1, 0
  %v1089 = vsel %vm321, 1, 0
  %v1090 = vsel %vm322, 1, 0
  %v1091 = vsel %vm323, 1, 0
  %v1092 = vsel %vm324, 1, 0
  %v1093 = vsel %vm325, 1, 0
  %v1094 = vsel %vm326, 1, 0
  %v1095 = vsel %vm327, 1, 0
  %v1096 = vsel %vm328, 1, 0
  %v1097 = vsel %vm329, 1, 0
  %v1098 = vsel %vm330, 1, 0
  %v1099 = vsel %vm331, 1, 0
  %v1100 = vsel %vm332, 1, 0
  %v1101 = vsel %vm333, 1, 0
  %v1102 = vsel %vm334, 1, 0
  %v1103 = vsel %vm335, 1, 0
  %v1104 = vsel %vm336, 1, 0
  %v1105 = vsel %vm337, 1, 0
  %v1106 = vsel %vm338, 1, 0
  %v1107 = vsel %vm339, 1, 0
  %v1108 = vsel %vm340, 1, 0
  %v1109 = vsel %vm341, 1, 0
  %v1110 = vsel %vm342, 1, 0
  %v1111 = vsel %vm343, 1, 0
  %v1112 = vsel %vm344, 1, 0
  %v1113 = vsel %vm345, 1, 0
  %v1114 = vsel %vm346, 1, 0
  %v1115 = vsel %vm347, 1, 0
  %v1116 = vsel %vm348, 1, 0
  %v1117 = vsel %vm349, 1, 0
  %v1118 = vsel %vm350, 1, 0
  %v1119 = vsel %vm351, 1, 0
  %v1120 = vsel %vm352, 1, 0
  %v1121 = vsel %vm353, 1, 0
  %v1122 = vsel %vm354, 1, 0
  %v1123 = vsel %vm355, 1, 0
  %v1124 = vsel %vm356, 1, 0
  %v1125 = vsel %vm357, 1, 0
  %v1126 = vsel %vm358, 1, 0
  %v1127 = vsel %vm359, 1, 0
  %v1128 = vsel %vm360, 1, 0
  %v1129 = vsel %vm361, 1, 0
  %v1130 = vsel %vm362, 1, 0
  %v1131 = vsel %vm363, 1, 0
  %v1132 = vsel %vm364, 1, 0
  %v1133 = vsel %vm365, 1, 0
  %v1134 = vsel %vm366, 1, 0
  %v1135 = vsel %vm367, 1, 0
  %v1136 = vsel %vm368, 1, 0
  %v1137 = vsel %vm369, 1, 0
  %v1138 = vsel %vm370, 1, 0
  %v1139 = vsel %vm371, 1, 0
  %v1140 = vsel %vm372, 1, 0
  %v1141 = vsel %vm373, 1, 0
  %v1142 = vsel %vm374, 1, 0
  %v1143 = vsel %vm375, 1, 0
  %v1144 = vsel %vm376, 1, 0
  %v1145 = vsel %vm377, 1, 0
  %v1146 = vsel %vm378, 1, 0
  %v1147 = vsel %vm379, 1, 0
  %v1148 = vsel %vm380, 1, 0
  %v1149 = vsel %vm381, 1, 0
  %v1150 = vsel %vm382, 1, 0
  %v1151 = vsel %vm383, 1, 0
  %v1152 = vsel %vm384, 1, 0
  %v1153 = vsel %vm385, 1, 0
  %v1154 = vsel %vm386, 1, 0
  %v1155 = vsel %vm387, 1, 0
  %v1156 = vsel %vm388, 1, 0
  %v1157 = vsel %vm389, 1, 0
  %v1158 = vsel %vm390, 1, 0
  %v1159 = vsel %vm391, 1, 0
  %v1160 = vsel %vm392, 1, 0
  %v1161 = vsel %vm393, 1, 0
  %v1162 = vsel %vm394, 1, 0
  %v1163 = vsel %vm395, 1, 0
  %v1164 = vsel %vm396, 1, 0
  %v1165 = vsel %vm397, 1, 0
  %v1166 = vsel %vm398, 1, 0
  %v1167 = vsel %vm399, 1, 0
  %v1168 = vsel %vm400, 1, 0
  %v1169 = vsel %vm401, 1, 0
  %v1170 = vsel %vm402, 1, 0
  %v1171 = vsel %vm403, 1, 0
  %v1172 = vsel %vm404, 1, 0
  %v1173 = vsel %vm405, 1, 0
  %v1174 = vsel %vm406, 1, 0
  %v1175 = vsel %vm407, 1, 0
  %v1176 = vsel %vm408, 1, 0
  %v1177 = vsel %vm409, 1, 0
  %v1178 = vsel %vm410, 1, 0
  %v1179 = vsel %vm411, 1, 0
  %v1180 = vsel %vm412, 1, 0
  %v1181 = vsel %vm413, 1, 0
  %v1182 = vsel %vm414, 1, 0
  %v1183 = vsel %vm415, 1, 0
  %v1184 = vsel %vm416, 1, 0
  %v1185 = vsel %vm417, 1, 0
  %v1186 = vsel %vm418, 1, 0
  %v1187 = vsel %vm419, 1, 0
  %v1188 = vsel %vm420, 1, 0
  %v1189 = vsel %vm421, 1, 0
  %v1190 = vsel %vm422, 1, 0
  %v1191 = vsel %vm423, 1, 0
  %v1192 = vsel %vm424, 1, 0
  %v1193 = vsel %vm425, 1, 0
  %v1194 = vsel %vm426, 1, 0
  %v1195 = vsel %vm427, 1, 0
  %v1196 = vsel %vm428, 1, 0
  %v1197 = vsel %vm429, 1, 0
  %v1198 = vsel %vm430, 1, 0
  %v1199 = vsel %vm431, 1, 0
  %v1200 = vsel %vm432, 1, 0
  %v1201 = vsel %vm433, 1, 0
  %v1202 = vsel %vm434, 1, 0
  %v1203 = vsel %vm435, 1, 0
  %v1204 = vsel %vm436, 1, 0
  %v1205 = vsel %vm437, 1, 0
  %v1206 = vsel %vm438, 1, 0
  %v1207 = vsel %vm439, 1, 0
  %v1208 = vsel %vm440, 1, 0
  %v1209 = vsel %vm441, 1, 0
  %v1210 = vsel %vm442, 1, 0
  %v1211 = vsel %vm443, 1, 0
  %v1212 = vsel %vm444, 1, 0
  %v1213 = vsel %vm445, 1, 0
  %v1214 = vsel %vm446, 1, 0
  %v1215 = vsel %vm447, 1, 0
  %v1216 = vsel %vm448, 1, 0
  %v1217 = vsel %vm449, 1, 0
  %v1218 = vsel %vm450, 1, 0
  %v1219 = vsel %vm451, 1, 0
  %v1220 = vsel %vm452, 1, 0
  %v1221 = vsel %vm453, 1, 0
  %v1222 = vsel %vm454, 1, 0
  %v1223 = vsel %vm455, 1, 0
  %v1224 = vsel %vm456, 1, 0
  %v1225 = vsel %vm457, 1, 0
  %v1226 = vsel %vm458, 1, 0
  %v1227 = vsel %vm459, 1, 0
  %v1228 = vsel %vm460, 1, 0
  %v1229 = vsel %vm461, 1, 0
  %v1230 = vsel %vm462, 1, 0
  %v1231 = vsel %vm463, 1, 0
  %v1232 = vsel %vm464, 1, 0
  %v1233 = vsel %vm465, 1, 0
  %v1234 = vsel %vm466, 1, 0
  %v1235 = vsel %vm467, 1, 0
  %v1236 = vsel %vm468, 1, 0
  %v1237 = vsel %vm469, 1, 0
  %v1238 = vsel %vm470, 1, 0
  %v1239 = vsel %vm471, 1, 0
  %v1240 = vsel %vm472, 1, 0
  %v1241 = vsel %vm473, 1, 0
  %v1242 = vsel %vm474, 1, 0
  %v1243 = vsel %vm475, 1, 0
  %v1244 = vsel %vm476, 1, 0
  %v1245 = vsel %vm477, 1, 0
  %v1246 = vsel %vm478, 1, 0
  %v1247 = vsel %vm479, 1, 0
  %v1248 = vsel %vm480, 1, 0
  %v1249 = vsel %vm481, 1, 0
  %v1250 = vsel %vm482, 1, 0
  %v1251 = vsel %vm483, 1, 0
  %v1252 = vsel %vm484, 1, 0
  %v1253 = vsel %vm485, 1, 0
  %v1254 = vsel %vm486, 1, 0
  %v1255 = vsel %vm487, 1, 0
  %v1256 = vsel %vm488, 1, 0
  %v1257 = vsel %vm489, 1, 0
  %v1258 = vsel %vm490, 1, 0
  %v1259 = vsel %vm491, 1, 0
  %v1260 = vsel %vm492, 1, 0
  %v1261 = vsel %vm493, 1, 0
  %v1262 = vsel %vm494, 1, 0
  %v1263 = vsel %vm495, 1, 0
  %v1264 = vsel %vm496, 1, 0
  %v1265 = vsel %vm497, 1, 0
  %v1266 = vsel %vm498, 1, 0
  %v1267 = vsel %vm499, 1, 0
  %v1268 = vsel %vm500, 1, 0
  %v1269 = vsel %vm501, 1, 0
  %v1270 = vsel %vm502, 1, 0
  %v1271 = vsel %vm503, 1, 0
  %v1272 = vsel %vm504, 1, 0
  %v1273 = vsel %vm505, 1, 0
  %v1274 = vsel %vm506, 1, 0
  %v1275 = vsel %vm507, 1, 0
  %v1276 = vsel %vm508, 1, 0
  %v1277 = vsel %vm509, 1, 0
  %v1278 = vsel %vm510, 1, 0
  %v1279 = vsel %vm511, 1, 0
  %v1280 = vsel %vm512, 1, 0
  %v1281 = vsel %vm513, 1, 0
  %v1282 = vsel %vm514, 1, 0
  %v1283 = vsel %vm515, 1, 0
  %v1284 = vsel %vm516, 1, 0
  %v1285 = vsel %vm517, 1, 0
  %v1286 = vsel %vm518, 1, 0
  %v1287 = vsel %vm519, 1, 0
  %v1288 = vsel %vm520, 1, 0
  %v1289 = vsel %vm521, 1, 0
  %v1290 = vsel %vm522, 1, 0
  %v1291 = vsel %vm523, 1, 0
  %v1292 = vsel %vm524, 1, 0
  %v1293 = vsel %vm525, 1, 0
  %v1294 = vsel %vm526, 1, 0
  %v1295 = vsel %vm527, 1, 0
  %v1296 = vsel %vm528, 1, 0
  %v1297 = vsel %vm529, 1, 0
  %v1298 = vsel %vm530, 1, 0
  %v1299 = vsel %vm531, 1, 0
  %v1300 = vsel %vm532, 1, 0
  %v1301 = vsel %vm533, 1, 0
  %v1302 = vsel %vm534, 1, 0
  %v1303 = vsel %vm535, 1, 0
  %v1304 = vsel %vm536, 1, 0
  %v1305 = vsel %vm537, 1, 0
  %v1306 = vsel %vm538, 1, 0
  %v1307 = vsel %vm539, 1, 0
  %v1308 = vsel %vm540, 1, 0
  %v1309 = vsel %vm541, 1, 0
  %v1310 = vsel %vm542, 1, 0
  %v1311 = vsel %vm543, 1, 0
  %v1312 = vsel %vm544, 1, 0
  %v1313 = vsel %vm545, 1, 0
  %v1314 = vsel %vm546, 1, 0
  %v1315 = vsel %vm547, 1, 0
  %v1316 = vsel %vm548, 1, 0
  %v1317 = vsel %vm549, 1, 0
  %v1318 = vsel %vm550, 1, 0
  %v1319 = vsel %vm551, 1, 0
  %v1320 = vsel %vm552, 1, 0
  %v1321 = vsel %vm553, 1, 0
  %v1322 = vsel %vm554, 1, 0
  %v1323 = vsel %vm555, 1, 0
  %v1324 = vsel %vm556, 1, 0
  %v1325 = vsel %vm557, 1, 0
  %v1326 = vsel %vm558, 1, 0
  %v1327 = vsel %vm559, 1, 0
  %v1328 = vsel %vm560, 1, 0
  %v1329 = vsel %vm561, 1, 0
  %v1330 = vsel %vm562, 1, 0
  %v1331 = vsel %vm563, 1, 0
  %v1332 = vsel %vm564, 1, 0
  %v1333 = vsel %vm565, 1, 0
  %v1334 = vsel %vm566, 1, 0
  %v1335 = vsel %vm567, 1, 0
  %v1336 = vsel %vm568, 1, 0
  %v1337 = vsel %vm569, 1, 0
  %v1338 = vsel %vm570, 1, 0
  %v1339 = vsel %vm571, 1, 0
  %v1340 = vsel %vm572, 1, 0
  %v1341 = vsel %vm573, 1, 0
  %v1342 = vsel %vm574, 1, 0
  %v1343 = vsel %vm575, 1, 0
  %v1344 = vsel %vm576, 1, 0
  %v1345 = vsel %vm577, 1, 0
  %v1346 = vsel %vm578, 1, 0
  %v1347 = vsel %vm579, 1, 0
  %v1348 = vsel %vm580, 1, 0
  %v1349 = vsel %vm581, 1, 0
  %v1350 = vsel %vm582, 1, 0
  %v1351 = vsel %vm583, 1, 0
  %v1352 = vsel %vm584, 1, 0
  %v1353 = vsel %vm585, 1, 0
  %v1354 = vsel %vm586, 1, 0
  %v1355 = vsel %vm587, 1, 0
  %v1356 = vsel %vm588, 1, 0
  %v1357 = vsel %vm589, 1, 0
  %v1358 = vsel %vm590, 1, 0
  %v1359 = vsel %vm591, 1, 0
  %v1360 = vsel %vm592, 1, 0
  %v1361 = vsel %vm593, 1, 0
  %v1362 = vsel %vm594, 1, 0
  %v1363 = vsel %vm595, 1, 0
  %v1364 = vsel %vm596, 1, 0
  %v1365 = vsel %vm597, 1, 0
  %v1366 = vsel %vm598, 1, 0
  %v1367 = vsel %vm599, 1, 0
  %v1368 = vsel %vm600, 1, 0
  %v1369 = vsel %vm601, 1, 0
  %v1370 = vsel %vm602, 1, 0
  %v1371 = vsel %vm603, 1, 0
  %v1372 = vsel %vm604, 1, 0
  %v1373 = vsel %vm605, 1, 0
  %v1374 = vsel %vm606, 1, 0
  %v1375 = vsel %vm607, 1, 0
  %v1376 = vsel %vm608, 1, 0
  %v1377 = vsel %vm609, 1, 0
  %v1378 = vsel %vm610, 1, 0
  %v1379 = vsel %vm611, 1, 0
  %v1380 = vsel %vm612, 1, 0
  %v1381 = vsel %vm613, 1, 0
  %v1382 = vsel %vm614, 1, 0
  %v1383 = vsel %vm615, 1, 0
  %v1384 = vsel %vm616, 1, 0
  %v1385 = vsel %vm617, 1, 0
  %v1386 = vsel %vm618, 1, 0
  %v1387 = vsel %vm619, 1, 0
  %v1388 = vsel %vm620, 1, 0
  %v1389 = vsel %vm621, 1, 0
  %v1390 = vsel %vm622, 1, 0
  %v1391 = vsel %vm623, 1, 0
  %v1392 = vsel %vm624, 1, 0
  %v1393 = vsel %vm625, 1, 0
  %v1394 = vsel %vm626, 1, 0
  %v1395 = vsel %vm627, 1, 0
  %v1396 = vsel %vm628, 1, 0
  %v1397 = vsel %vm629, 1, 0
  %v1398 = vsel %vm630, 1, 0
  %v1399 = vsel %vm631, 1, 0
  %v1400 = vsel %vm632, 1, 0
  %v1401 = vsel %vm633, 1, 0
  %v1402 = vsel %vm634, 1, 0
  %v1403 = vsel %vm635, 1, 0
  %v1404 = vsel %vm636, 1, 0
  %v1405 = vsel %vm637, 1, 0
  %v1406 = vsel %vm638, 1, 0
  %v1407 = vsel %vm639, 1, 0
  %v1408 = vsel %vm640, 1, 0
  %v1409 = vsel %vm641, 1, 0
  %v1410 = vsel %vm642, 1, 0
  %v1411 = vsel %vm643, 1, 0
  %v1412 = vsel %vm644, 1, 0
  %v1413 = vsel %vm645, 1, 0
  %v1414 = vsel %vm646, 1, 0
  %v1415 = vsel %vm647, 1, 0
  %v1416 = vsel %vm648, 1, 0
  %v1417 = vsel %vm649, 1, 0
  %v1418 = vsel %vm650, 1, 0
  %v1419 = vsel %vm651, 1, 0
  %v1420 = vsel %vm652, 1, 0
  %v1421 = vsel %vm653, 1, 0
  %v1422 = vsel %vm654, 1, 0
  %v1423 = vsel %vm655, 1, 0
  %v1424 = vsel %vm656, 1, 0
  %v1425 = vsel %vm657, 1, 0
  %v1426 = vsel %vm658, 1, 0
  %v1427 = vsel %vm659, 1, 0
  %v1428 = vsel %vm660, 1, 0
  %v1429 = vsel %vm661, 1, 0
  %v1430 = vsel %vm662, 1, 0
  %v1431 = vsel %vm663, 1, 0
  %v1432 = vsel %vm664, 1, 0
  %v1433 = vsel %vm665, 1, 0
  %v1434 = vsel %vm666, 1, 0
  %v1435 = vsel %vm667, 1, 0
  %v1436 = vsel %vm668, 1, 0
  %v1437 = vsel %vm669, 1, 0
  %v1438 = vsel %vm670, 1, 0
  %v1439 = vsel %vm671, 1, 0
  %v1440 = vsel %vm672, 1, 0
  %v1441 = vsel %vm673, 1, 0
  %v1442 = vsel %vm674, 1, 0
  %v1443 = vsel %vm675, 1, 0
  %v1444 = vsel %vm676, 1, 0
  %v1445 = vsel %vm677, 1, 0
  %v1446 = vcvt.s32.f32 %v934
  %v1447 = vcvt.s32.f32 %v935
  %v1448 = vcvt.s32.f32 %v936
  %v1449 = vcvt.s32.f32 %v937
  %v1450 = vcvt.s32.f32 %v938
  %v1451 = vcvt.s32.f32 %v939
  %v1452 = vcvt.s32.f32 %v940
  %v1453 = vcvt.s32.f32 %v941
  %v1454 = vcvt.s32.f32 %v942
  %v1455 = vcvt.s32.f32 %v943
  %v1456 = vcvt.s32.f32 %v944
  %v1457 = vcvt.s32.f32 %v945
  %v1458 = vcvt.s32.f32 %v946
  %v1459 = vcvt.s32.f32 %v947
  %v1460 = vcvt.s32.f32 %v948
  %v1461 = vcvt.s32.f32 %v949
  %v1462 = vcvt.s32.f32 %v950
  %v1463 = vcvt.s32.f32 %v951
  %v1464 = vcvt.s32.f32 %v952
  %v1465 = vcvt.s32.f32 %v953
  %v1466 = vcvt.s32.f32 %v954
  %v1467 = vcvt.s32.f32 %v955
  %v1468 = vcvt.s32.f32 %v956
  %v1469 = vcvt.s32.f32 %v957
  %v1470 = vcvt.s32.f32 %v958
  %v1471 = vcvt.s32.f32 %v959
  %v1472 = vcvt.s32.f32 %v960
  %v1473 = vcvt.s32.f32 %v961
  %v1474 = vcvt.s32.f32 %v962
  %v1475 = vcvt.s32.f32 %v963
  %v1476 = vcvt.s32.f32 %v964
  %v1477 = vcvt.s32.f32 %v965
  %v1478 = vcvt.s32.f32 %v966
  %v1479 = vcvt.s32.f32 %v967
  %v1480 = vcvt.s32.f32 %v968
  %v1481 = vcvt.s32.f32 %v969
  %v1482 = vcvt.s32.f32 %v970
  %v1483 = vcvt.s32.f32 %v971
  %v1484 = vcvt.s32.f32 %v972
  %v1485 = vcvt.s32.f32 %v973
  %v1486 = vcvt.s32.f32 %v974
  %v1487 = vcvt.s32.f32 %v975
  %v1488 = vcvt.s32.f32 %v976
  %v1489 = vcvt.s32.f32 %v977
  %v1490 = vcvt.s32.f32 %v978
  %v1491 = vcvt.s32.f32 %v979
  %v1492 = vcvt.s32.f32 %v980
  %v1493 = vcvt.s32.f32 %v981
  %v1494 = vcvt.s32.f32 %v982
  %v1495 = vcvt.s32.f32 %v983
  %v1496 = vcvt.s32.f32 %v984
  %v1497 = vcvt.s32.f32 %v985
  %v1498 = vcvt.s32.f32 %v986
  %v1499 = vcvt.s32.f32 %v987
  %v1500 = vcvt.s32.f32 %v988
  %v1501 = vcvt.s32.f32 %v989
  %v1502 = vcvt.s32.f32 %v990
  %v1503 = vcvt.s32.f32 %v991
  %v1504 = vcvt.s32.f32 %v992
  %v1505 = vcvt.s32.f32 %v993
  %v1506 = vcvt.s32.f32 %v994
  %v1507 = vcvt.s32.f32 %v995
  %v1508 = vcvt.s32.f32 %v996
  %v1509 = vcvt.s32.f32 %v997
  %v1510 = vcvt.s32.f32 %v998
  %v1511 = vcvt.s32.f32 %v999
  %v1512 = vcvt.s32.f32 %v1000
  %v1513 = vcvt.s32.f32 %v1001
  %v1514 = vcvt.s32.f32 %v1002
  %v1515 = vcvt.s32.f32 %v1003
  %v1516 = vcvt.s32.f32 %v1004
  %v1517 = vcvt.s32.f32 %v1005
  %v1518 = vcvt.s32.f32 %v1006
  %v1519 = vcvt.s32.f32 %v1007
  %v1520 = vcvt.s32.f32 %v1008
  %v1521 = vcvt.s32.f32 %v1009
  %v1522 = vcvt.s32.f32 %v1010
  %v1523 = vcvt.s32.f32 %v1011
  %v1524 = vcvt.s32.f32 %v1012
  %v1525 = vcvt.s32.f32 %v1013
  %v1526 = vcvt.s32.f32 %v1014
  %v1527 = vcvt.s32.f32 %v1015
  %v1528 = vcvt.s32.f32 %v1016
  %v1529 = vcvt.s32.f32 %v1017
  %v1530 = vcvt.s32.f32 %v1018
  %v1531 = vcvt.s32.f32 %v1019
  %v1532 = vcvt.s32.f32 %v1020
  %v1533 = vcvt.s32.f32 %v1021
  %v1534 = vcvt.s32.f32 %v1022
  %v1535 = vcvt.s32.f32 %v1023
  %v1536 = vcvt.s32.f32 %v1024
  %v1537 = vcvt.s32.f32 %v1025
  %v1538 = vcvt.s32.f32 %v1026
  %v1539 = vcvt.s32.f32 %v1027
  %v1540 = vcvt.s32.f32 %v1028
  %v1541 = vcvt.s32.f32 %v1029
  %v1542 = vcvt.s32.f32 %v1030
  %v1543 = vcvt.s32.f32 %v1031
  %v1544 = vcvt.s32.f32 %v1032
  %v1545 = vcvt.s32.f32 %v1033
  %v1546 = vcvt.s32.f32 %v1034
  %v1547 = vcvt.s32.f32 %v1035
  %v1548 = vcvt.s32.f32 %v1036
  %v1549 = vcvt.s32.f32 %v1037
  %v1550 = vcvt.s32.f32 %v1038
  %v1551 = vcvt.s32.f32 %v1039
  %v1552 = vcvt.s32.f32 %v1040
  %v1553 = vcvt.s32.f32 %v1041
  %v1554 = vcvt.s32.f32 %v1042
  %v1555 = vcvt.s32.f32 %v1043
  %v1556 = vcvt.s32.f32 %v1044
  %v1557 = vcvt.s32.f32 %v1045
  %v1558 = vcvt.s32.f32 %v1046
  %v1559 = vcvt.s32.f32 %v1047
  %v1560 = vcvt.s32.f32 %v1048
  %v1561 = vcvt.s32.f32 %v1049
  %v1562 = vcvt.s32.f32 %v1050
  %v1563 = vcvt.s32.f32 %v1051
  %v1564 = vcvt.s32.f32 %v1052
  %v1565 = vcvt.s32.f32 %v1053
  %v1566 = vcvt.s32.f32 %v1054
  %v1567 = vcvt.s32.f32 %v1055
  %v1568 = vcvt.s32.f32 %v1056
  %v1569 = vcvt.s32.f32 %v1057
  %v1570 = vcvt.s32.f32 %v1058
  %v1571 = vcvt.s32.f32 %v1059
  %v1572 = vcvt.s32.f32 %v1060
  %v1573 = vcvt.s32.f32 %v1061
  %v1574 = vcvt.s32.f32 %v1062
  %v1575 = vcvt.s32.f32 %v1063
  %v1576 = vcvt.s32.f32 %v1064
  %v1577 = vcvt.s32.f32 %v1065
  %v1578 = vcvt.s32.f32 %v1066
  %v1579 = vcvt.s32.f32 %v1067
  %v1580 = vcvt.s32.f32 %v1068
  %v1581 = vcvt.s32.f32 %v1069
  %v1582 = vcvt.s32.f32 %v1070
  %v1583 = vcvt.s32.f32 %v1071
  %v1584 = vcvt.s32.f32 %v1072
  %v1585 = vcvt.s32.f32 %v1073
  %v1586 = vcvt.s32.f32 %v1074
  %v1587 = vcvt.s32.f32 %v1075
  %v1588 = vcvt.s32.f32 %v1076
  %v1589 = vcvt.s32.f32 %v1077
  %v1590 = vcvt.s32.f32 %v1078
  %v1591 = vcvt.s32.f32 %v1079
  %v1592 = vcvt.s32.f32 %v1080
  %v1593 = vcvt.s32.f32 %v1081
  %v1594 = vcvt.s32.f32 %v1082
  %v1595 = vcvt.s32.f32 %v1083
  %v1596 = vcvt.s32.f32 %v1084
  %v1597 = vcvt.s32.f32 %v1085
  %v1598 = vcvt.s32.f32 %v1086
  %v1599 = vcvt.s32.f32 %v1087
  %v1600 = vcvt.s32.f32 %v1088
  %v1601 = vcvt.s32.f32 %v1089
  %v1602 = vcvt.s32.f32 %v1090
  %v1603 = vcvt.s32.f32 %v1091
  %v1604 = vcvt.s32.f32 %v1092
  %v1605 = vcvt.s32.f32 %v1093
  %v1606 = vcvt.s32.f32 %v1094
  %v1607 = vcvt.s32.f32 %v1095
  %v1608 = vcvt.s32.f32 %v1096
  %v1609 = vcvt.s32.f32 %v1097
  %v1610 = vcvt.s32.f32 %v1098
  %v1611 = vcvt.s32.f32 %v1099
  %v1612 = vcvt.s32.f32 %v1100
  %v1613 = vcvt.s32.f32 %v1101
  %v1614 = vcvt.s32.f32 %v1102
  %v1615 = vcvt.s32.f32 %v1103
  %v1616 = vcvt.s32.f32 %v1104
  %v1617 = vcvt.s32.f32 %v1105
  %v1618 = vcvt.s32.f32 %v1106
  %v1619 = vcvt.s32.f32 %v1107
  %v1620 = vcvt.s32.f32 %v1108
  %v1621 = vcvt.s32.f32 %v1109
  %v1622 = vcvt.s32.f32 %v1110
  %v1623 = vcvt.s32.f32 %v1111
  %v1624 = vcvt.s32.f32 %v1112
  %v1625 = vcvt.s32.f32 %v1113
  %v1626 = vcvt.s32.f32 %v1114
  %v1627 = vcvt.s32.f32 %v1115
  %v1628 = vcvt.s32.f32 %v1116
  %v1629 = vcvt.s32.f32 %v1117
  %v1630 = vcvt.s32.f32 %v1118
  %v1631 = vcvt.s32.f32 %v1119
  %v1632 = vcvt.s32.f32 %v1120
  %v1633 = vcvt.s32.f32 %v1121
  %v1634 = vcvt.s32.f32 %v1122
  %v1635 = vcvt.s32.f32 %v1123
  %v1636 = vcvt.s32.f32 %v1124
  %v1637 = vcvt.s32.f32 %v1125
  %v1638 = vcvt.s32.f32 %v1126
  %v1639 = vcvt.s32.f32 %v1127
  %v1640 = vcvt.s32.f32 %v1128
  %v1641 = vcvt.s32.f32 %v1129
  %v1642 = vcvt.s32.f32 %v1130
  %v1643 = vcvt.s32.f32 %v1131
  %v1644 = vcvt.s32.f32 %v1132
  %v1645 = vcvt.s32.f32 %v1133
  %v1646 = vcvt.s32.f32 %v1134
  %v1647 = vcvt.s32.f32 %v1135
  %v1648 = vcvt.s32.f32 %v1136
  %v1649 = vcvt.s32.f32 %v1137
  %v1650 = vcvt.s32.f32 %v1138
  %v1651 = vcvt.s32.f32 %v1139
  %v1652 = vcvt.s32.f32 %v1140
  %v1653 = vcvt.s32.f32 %v1141
  %v1654 = vcvt.s32.f32 %v1142
  %v1655 = vcvt.s32.f32 %v1143
  %v1656 = vcvt.s32.f32 %v1144
  %v1657 = vcvt.s32.f32 %v1145
  %v1658 = vcvt.s32.f32 %v1146
  %v1659 = vcvt.s32.f32 %v1147
  %v1660 = vcvt.s32.f32 %v1148
  %v1661 = vcvt.s32.f32 %v1149
  %v1662 = vcvt.s32.f32 %v1150
  %v1663 = vcvt.s32.f32 %v1151
  %v1664 = vcvt.s32.f32 %v1152
  %v1665 = vcvt.s32.f32 %v1153
  %v1666 = vcvt.s32.f32 %v1154
  %v1667 = vcvt.s32.f32 %v1155
  %v1668 = vcvt.s32.f32 %v1156
  %v1669 = vcvt.s32.f32 %v1157
  %v1670 = vcvt.s32.f32 %v1158
  %v1671 = vcvt.s32.f32 %v1159
  %v1672 = vcvt.s32.f32 %v1160
  %v1673 = vcvt.s32.f32 %v1161
  %v1674 = vcvt.s32.f32 %v1162
  %v1675 = vcvt.s32.f32 %v1163
  %v1676 = vcvt.s32.f32 %v1164
  %v1677 = vcvt.s32.f32 %v1165
  %v1678 = vcvt.s32.f32 %v1166
  %v1679 = vcvt.s32.f32 %v1167
  %v1680 = vcvt.s32.f32 %v1168
  %v1681 = vcvt.s32.f32 %v1169
  %v1682 = vcvt.s32.f32 %v1170
  %v1683 = vcvt.s32.f32 %v1171
  %v1684 = vcvt.s32.f32 %v1172
  %v1685 = vcvt.s32.f32 %v1173
  %v1686 = vcvt.s32.f32 %v1174
  %v1687 = vcvt.s32.f32 %v1175
  %v1688 = vcvt.s32.f32 %v1176
  %v1689 = vcvt.s32.f32 %v1177
  %v1690 = vcvt.s32.f32 %v1178
  %v1691 = vcvt.s32.f32 %v1179
  %v1692 = vcvt.s32.f32 %v1180
  %v1693 = vcvt.s32.f32 %v1181
  %v1694 = vcvt.s32.f32 %v1182
  %v1695 = vcvt.s32.f32 %v1183
  %v1696 = vcvt.s32.f32 %v1184
  %v1697 = vcvt.s32.f32 %v1185
  %v1698 = vcvt.s32.f32 %v1186
  %v1699 = vcvt.s32.f32 %v1187
  %v1700 = vcvt.s32.f32 %v1188
  %v1701 = vcvt.s32.f32 %v1189
  %v1702 = vcvt.s32.f32 %v1190
  %v1703 = vcvt.s32.f32 %v1191
  %v1704 = vcvt.s32.f32 %v1192
  %v1705 = vcvt.s32.f32 %v1193
  %v1706 = vcvt.s32.f32 %v1194
  %v1707 = vcvt.s32.f32 %v1195
  %v1708 = vcvt.s32.f32 %v1196
  %v1709 = vcvt.s32.f32 %v1197
  %v1710 = vcvt.s32.f32 %v1198
  %v1711 = vcvt.s32.f32 %v1199
  %v1712 = vcvt.s32.f32 %v1200
  %v1713 = vcvt.s32.f32 %v1201
  %v1714 = vcvt.s32.f32 %v1202
  %v1715 = vcvt.s32.f32 %v1203
  %v1716 = vcvt.s32.f32 %v1204
  %v1717 = vcvt.s32.f32 %v1205
  %v1718 = vcvt.s32.f32 %v1206
  %v1719 = vcvt.s32.f32 %v1207
  %v1720 = vcvt.s32.f32 %v1208
  %v1721 = vcvt.s32.f32 %v1209
  %v1722 = vcvt.s32.f32 %v1210
  %v1723 = vcvt.s32.f32 %v1211
  %v1724 = vcvt.s32.f32 %v1212
  %v1725 = vcvt.s32.f32 %v1213
  %v1726 = vcvt.s32.f32 %v1214
  %v1727 = vcvt.s32.f32 %v1215
  %v1728 = vcvt.s32.f32 %v1216
  %v1729 = vcvt.s32.f32 %v1217
  %v1730 = vcvt.s32.f32 %v1218
  %v1731 = vcvt.s32.f32 %v1219
  %v1732 = vcvt.s32.f32 %v1220
  %v1733 = vcvt.s32.f32 %v1221
  %v1734 = vcvt.s32.f32 %v1222
  %v1735 = vcvt.s32.f32 %v1223
  %v1736 = vcvt.s32.f32 %v1224
  %v1737 = vcvt.s32.f32 %v1225
  %v1738 = vcvt.s32.f32 %v1226
  %v1739 = vcvt.s32.f32 %v1227
  %v1740 = vcvt.s32.f32 %v1228
  %v1741 = vcvt.s32.f32 %v1229
  %v1742 = vcvt.s32.f32 %v1230
  %v1743 = vcvt.s32.f32 %v1231
  %v1744 = vcvt.s32.f32 %v1232
  %v1745 = vcvt.s32.f32 %v1233
  %v1746 = vcvt.s32.f32 %v1234
  %v1747 = vcvt.s32.f32 %v1235
  %v1748 = vcvt.s32.f32 %v1236
  %v1749 = vcvt.s32.f32 %v1237
  %v1750 = vcvt.s32.f32 %v1238
  %v1751 = vcvt.s32.f32 %v1239
  %v1752 = vcvt.s32.f32 %v1240
  %v1753 = vcvt.s32.f32 %v1241
  %v1754 = vcvt.s32.f32 %v1242
  %v1755 = vcvt.s32.f32 %v1243
  %v1756 = vcvt.s32.f32 %v1244
  %v1757 = vcvt.s32.f32 %v1245
  %v1758 = vcvt.s32.f32 %v1246
  %v1759 = vcvt.s32.f32 %v1247
  %v1760 = vcvt.s32.f32 %v1248
  %v1761 = vcvt.s32.f32 %v1249
  %v1762 = vcvt.s32.f32 %v1250
  %v1763 = vcvt.s32.f32 %v1251
  %v1764 = vcvt.s32.f32 %v1252
  %v1765 = vcvt.s32.f32 %v1253
  %v1766 = vcvt.s32.f32 %v1254
  %v1767 = vcvt.s32.f32 %v1255
  %v1768 = vcvt.s32.f32 %v1256
  %v1769 = vcvt.s32.f32 %v1257
  %v1770 = vcvt.s32.f32 %v1258
  %v1771 = vcvt.s32.f32 %v1259
  %v1772 = vcvt.s32.f32 %v1260
  %v1773 = vcvt.s32.f32 %v1261
  %v1774 = vcvt.s32.f32 %v1262
  %v1775 = vcvt.s32.f32 %v1263
  %v1776 = vcvt.s32.f32 %v1264
  %v1777 = vcvt.s32.f32 %v1265
  %v1778 = vcvt.s32.f32 %v1266
  %v1779 = vcvt.s32.f32 %v1267
  %v1780 = vcvt.s32.f32 %v1268
  %v1781 = vcvt.s32.f32 %v1269
  %v1782 = vcvt.s32.f32 %v1270
  %v1783 = vcvt.s32.f32 %v1271
  %v1784 = vcvt.s32.f32 %v1272
  %v1785 = vcvt.s32.f32 %v1273
  %v1786 = vcvt.s32.f32 %v1274
  %v1787 = vcvt.s32.f32 %v1275
  %v1788 = vcvt.s32.f32 %v1276
  %v1789 = vcvt.s32.f32 %v1277
  %v1790 = vcvt.s32.f32 %v1278
  %v1791 = vcvt.s32.f32 %v1279
  %v1792 = vcvt.s32.f32 %v1280
  %v1793 = vcvt.s32.f32 %v1281
  %v1794 = vcvt.s32.f32 %v1282
  %v1795 = vcvt.s32.f32 %v1283
  %v1796 = vcvt.s32.f32 %v1284
  %v1797 = vcvt.s32.f32 %v1285
  %v1798 = vcvt.s32.f32 %v1286
  %v1799 = vcvt.s32.f32 %v1287
  %v1800 = vcvt.s32.f32 %v1288
  %v1801 = vcvt.s32.f32 %v1289
  %v1802 = vcvt.s32.f32 %v1290
  %v1803 = vcvt.s32.f32 %v1291
  %v1804 = vcvt.s32.f32 %v1292
  %v1805 = vcvt.s32.f32 %v1293
  %v1806 = vcvt.s32.f32 %v1294
  %v1807 = vcvt.s32.f32 %v1295
  %v1808 = vcvt.s32.f32 %v1296
  %v1809 = vcvt.s32.f32 %v1297
  %v1810 = vcvt.s32.f32 %v1298
  %v1811 = vcvt.s32.f32 %v1299
  %v1812 = vcvt.s32.f32 %v1300
  %v1813 = vcvt.s32.f32 %v1301
  %v1814 = vcvt.s32.f32 %v1302
  %v1815 = vcvt.s32.f32 %v1303
  %v1816 = vcvt.s32.f32 %v1304
  %v1817 = vcvt.s32.f32 %v1305
  %v1818 = vcvt.s32.f32 %v1306
  %v1819 = vcvt.s32.f32 %v1307
  %v1820 = vcvt.s32.f32 %v1308
  %v1821 = vcvt.s32.f32 %v1309
  %v1822 = vcvt.s32.f32 %v1310
  %v1823 = vcvt.s32.f32 %v1311
  %v1824 = vcvt.s32.f32 %v1312
  %v1825 = vcvt.s32.f32 %v1313
  %v1826 = vcvt.s32.f32 %v1314
  %v1827 = vcvt.s32.f32 %v1315
  %v1828 = vcvt.s32.f32 %v1316
  %v1829 = vcvt.s32.f32 %v1317
  %v1830 = vcvt.s32.f32 %v1318
  %v1831 = vcvt.s32.f32 %v1319
  %v1832 = vcvt.s32.f32 %v1320
  %v1833 = vcvt.s32.f32 %v1321
  %v1834 = vcvt.s32.f32 %v1322
  %v1835 = vcvt.s32.f32 %v1323
  %v1836 = vcvt.s32.f32 %v1324
  %v1837 = vcvt.s32.f32 %v1325
  %v1838 = vcvt.s32.f32 %v1326
  %v1839 = vcvt.s32.f32 %v1327
  %v1840 = vcvt.s32.f32 %v1328
  %v1841 = vcvt.s32.f32 %v1329
  %v1842 = vcvt.s32.f32 %v1330
  %v1843 = vcvt.s32.f32 %v1331
  %v1844 = vcvt.s32.f32 %v1332
  %v1845 = vcvt.s32.f32 %v1333
  %v1846 = vcvt.s32.f32 %v1334
  %v1847 = vcvt.s32.f32 %v1335
  %v1848 = vcvt.s32.f32 %v1336
  %v1849 = vcvt.s32.f32 %v1337
  %v1850 = vcvt.s32.f32 %v1338
  %v1851 = vcvt.s32.f32 %v1339
  %v1852 = vcvt.s32.f32 %v1340
  %v1853 = vcvt.s32.f32 %v1341
  %v1854 = vcvt.s32.f32 %v1342
  %v1855 = vcvt.s32.f32 %v1343
  %v1856 = vcvt.s32.f32 %v1344
  %v1857 = vcvt.s32.f32 %v1345
  %v1858 = vcvt.s32.f32 %v1346
  %v1859 = vcvt.s32.f32 %v1347
  %v1860 = vcvt.s32.f32 %v1348
  %v1861 = vcvt.s32.f32 %v1349
  %v1862 = vcvt.s32.f32 %v1350
  %v1863 = vcvt.s32.f32 %v1351
  %v1864 = vcvt.s32.f32 %v1352
  %v1865 = vcvt.s32.f32 %v1353
  %v1866 = vcvt.s32.f32 %v1354
  %v1867 = vcvt.s32.f32 %v1355
  %v1868 = vcvt.s32.f32 %v1356
  %v1869 = vcvt.s32.f32 %v1357
  %v1870 = vcvt.s32.f32 %v1358
  %v1871 = vcvt.s32.f32 %v1359
  %v1872 = vcvt.s32.f32 %v1360
  %v1873 = vcvt.s32.f32 %v1361
  %v1874 = vcvt.s32.f32 %v1362
  %v1875 = vcvt.s32.f32 %v1363
  %v1876 = vcvt.s32.f32 %v1364
  %v1877 = vcvt.s32.f32 %v1365
  %v1878 = vcvt.s32.f32 %v1366
  %v1879 = vcvt.s32.f32 %v1367
  %v1880 = vcvt.s32.f32 %v1368
  %v1881 = vcvt.s32.f32 %v1369
  %v1882 = vcvt.s32.f32 %v1370
  %v1883 = vcvt.s32.f32 %v1371
  %v1884 = vcvt.s32.f32 %v1372
  %v1885 = vcvt.s32.f32 %v1373
  %v1886 = vcvt.s32.f32 %v1374
  %v1887 = vcvt.s32.f32 %v1375
  %v1888 = vcvt.s32.f32 %v1376
  %v1889 = vcvt.s32.f32 %v1377
  %v1890 = vcvt.s32.f32 %v1378
  %v1891 = vcvt.s32.f32 %v1379
  %v1892 = vcvt.s32.f32 %v1380
  %v1893 = vcvt.s32.f32 %v1381
  %v1894 = vcvt.s32.f32 %v1382
  %v1895 = vcvt.s32.f32 %v1383
  %v1896 = vcvt.s32.f32 %v1384
  %v1897 = vcvt.s32.f32 %v1385
  %v1898 = vcvt.s32.f32 %v1386
  %v1899 = vcvt.s32.f32 %v1387
  %v1900 = vcvt.s32.f32 %v1388
  %v1901 = vcvt.s32.f32 %v1389
  %v1902 = vcvt.s32.f32 %v1390
  %v1903 = vcvt.s32.f32 %v1391
  %v1904 = vcvt.s32.f32 %v1392
  %v1905 = vcvt.s32.f32 %v1393
  %v1906 = vcvt.s32.f32 %v1394
  %v1907 = vcvt.s32.f32 %v1395
  %v1908 = vcvt.s32.f32 %v1396
  %v1909 = vcvt.s32.f32 %v1397
  %v1910 = vcvt.s32.f32 %v1398
  %v1911 = vcvt.s32.f32 %v1399
  %v1912 = vcvt.s32.f32 %v1400
  %v1913 = vcvt.s32.f32 %v1401
  %v1914 = vcvt.s32.f32 %v1402
  %v1915 = vcvt.s32.f32 %v1403
  %v1916 = vcvt.s32.f32 %v1404
  %v1917 = vcvt.s32.f32 %v1405
  %v1918 = vcvt.s32.f32 %v1406
  %v1919 = vcvt.s32.f32 %v1407
  %v1920 = vcvt.s32.f32 %v1408
  %v1921 = vcvt.s32.f32 %v1409
  %v1922 = vcvt.s32.f32 %v1410
  %v1923 = vcvt.s32.f32 %v1411
  %v1924 = vcvt.s32.f32 %v1412
  %v1925 = vcvt.s32.f32 %v1413
  %v1926 = vcvt.s32.f32 %v1414
  %v1927 = vcvt.s32.f32 %v1415
  %v1928 = vcvt.s32.f32 %v1416
  %v1929 = vcvt.s32.f32 %v1417
  %v1930 = vcvt.s32.f32 %v1418
  %v1931 = vcvt.s32.f32 %v1419
  %v1932 = vcvt.s32.f32 %v1420
  %v1933 = vcvt.s32.f32 %v1421
  %v1934 = vcvt.s32.f32 %v1422
  %v1935 = vcvt.s32.f32 %v1423
  %v1936 = vcvt.s32.f32 %v1424
  %v1937 = vcvt.s32.f32 %v1425
  %v1938 = vcvt.s32.f32 %v1426
  %v1939 = vcvt.s32.f32 %v1427
  %v1940 = vcvt.s32.f32 %v1428
  %v1941 = vcvt.s32.f32 %v1429
  %v1942 = vcvt.s32.f32 %v1430
  %v1943 = vcvt.s32.f32 %v1431
  %v1944 = vcvt.s32.f32 %v1432
  %v1945 = vcvt.s32.f32 %v1433
  %v1946 = vcvt.s32.f32 %v1434
  %v1947 = vcvt.s32.f32 %v1435
  %v1948 = vcvt.s32.f32 %v1436
  %v1949 = vcvt.s32.f32 %v1437
  %v1950 = vcvt.s32.f32 %v1438
  %v1951 = vcvt.s32.f32 %v1439
  %v1952 = vcvt.s32.f32 %v1440
  %v1953 = vcvt.s32.f32 %v1441
  %v1954 = vcvt.s32.f32 %v1442
  %v1955 = vcvt.s32.f32 %v1443
  %v1956 = vcvt.s32.f32 %v1444
  %v1957 = vcvt.s32.f32 %v1445
  %v1958 = vld [vmem:[#allocation2] sm:$0xff]
  %v1959 = vld [vmem:[#allocation2 + $0x8] sm:$0xff]
  %v1960 = vld [vmem:[#allocation2 + $0x10] sm:$0xff]
  %v1961 = vld [vmem:[#allocation2 + $0x18] sm:$0xff]
  %v1962 = vld [vmem:[#allocation2 + $0x20] sm:$0xff]
  %v1963 = vld [vmem:[#allocation2 + $0x28] sm:$0xff]
  %v1964 = vld [vmem:[#allocation2 + $0x30] sm:$0xff]
  %v1965 = vld [vmem:[#allocation2 + $0x38] sm:$0xff]
  %v1966 = vld [vmem:[#allocation2 + $0x40] sm:$0xff]
  %v1967 = vld [vmem:[#allocation2 + $0x48] sm:$0xff]
  %v1968 = vld [vmem:[#allocation2 + $0x50] sm:$0xff]
  %v1969 = vld [vmem:[#allocation2 + $0x58] sm:$0xff]
  %v1970 = vld [vmem:[#allocation2 + $0x60] sm:$0xff]
  %v1971 = vld [vmem:[#allocation2 + $0x68] sm:$0xff]
  %v1972 = vld [vmem:[#allocation2 + $0x70] sm:$0xff]
  %v1973 = vld [vmem:[#allocation2 + $0x78] sm:$0xff]
  %v1974 = vld [vmem:[#allocation2 + $0x80] sm:$0xff]
  %v1975 = vld [vmem:[#allocation2 + $0x88] sm:$0xff]
  %v1976 = vld [vmem:[#allocation2 + $0x90] sm:$0xff]
  %v1977 = vld [vmem:[#allocation2 + $0x98] sm:$0xff]
  %v1978 = vld [vmem:[#allocation2 + $0xa0] sm:$0xff]
  %v1979 = vld [vmem:[#allocation2 + $0xa8] sm:$0xff]
  %v1980 = vld [vmem:[#allocation2 + $0xb0] sm:$0xff]
  %v1981 = vld [vmem:[#allocation2 + $0xb8] sm:$0xff]
  %v1982 = vld [vmem:[#allocation2 + $0xc0] sm:$0xff]
  %v1983 = vld [vmem:[#allocation2 + $0xc8] sm:$0xff]
  %v1984 = vld [vmem:[#allocation2 + $0xd0] sm:$0xff]
  %v1985 = vld [vmem:[#allocation2 + $0xd8] sm:$0xff]
  %v1986 = vld [vmem:[#allocation2 + $0xe0] sm:$0xff]
  %v1987 = vld [vmem:[#allocation2 + $0xe8] sm:$0xff]
  %v1988 = vld [vmem:[#allocation2 + $0xf0] sm:$0xff]
  %v1989 = vld [vmem:[#allocation2 + $0xf8] sm:$0xff]
  %1990 = vmatpush.msra.mxu0 %v693
  %1991 = vmatpush.msra.mxu0 %v692
  %1992 = vmatpush.msra.mxu0 %v691
  %1993 = vmatpush.msra.mxu0 %v690
  %1994 = vmatpush.msra.mxu0 %v689
  %1995 = vmatpush.msra.mxu0 %v688
  %1996 = vmatpush.msra.mxu0 %v687
  %1997 = vmatpush.msra.mxu0 %v686
  %1998 = vmatpush.msra.mxu0 %v685
  %1999 = vmatpush.msra.mxu0 %v684
  %2000 = vmatpush.msra.mxu0 %v683
  %2001 = vmatpush.msra.mxu0 %v682
  %2002 = vmatpush.msra.mxu0 %v681
  %2003 = vmatpush.msra.mxu0 %v680
  %2004 = vmatpush.msra.mxu0 %v679
  %2005 = vmatpush.msra.mxu0 %v678
  %2006 = vmatmul.f32.gmra.mxu0 %v1446
  %v2007 = vpop.f32.mrf.mxu0
  %v2008 = vadd.f32 0.0, %v2007
  %2009 = vmatmul.f32.gmra.mxu0 %v1462
  %v2010 = vpop.f32.mrf.mxu0
  %v2011 = vadd.f32 0.0, %v2010
  %2012 = vmatmul.f32.gmra.mxu0 %v1478
  %v2013 = vpop.f32.mrf.mxu0
  %v2014 = vadd.f32 0.0, %v2013
  %2015 = vmatmul.f32.gmra.mxu0 %v1494
  %v2016 = vpop.f32.mrf.mxu0
  %v2017 = vadd.f32 0.0, %v2016
  %2018 = vmatmul.f32.gmra.mxu0 %v1510
  %v2019 = vpop.f32.mrf.mxu0
  %v2020 = vadd.f32 0.0, %v2019
  %2021 = vmatmul.f32.gmra.mxu0 %v1526
  %v2022 = vpop.f32.mrf.mxu0
  %v2023 = vadd.f32 0.0, %v2022
  %2024 = vmatmul.f32.gmra.mxu0 %v1542
  %v2025 = vpop.f32.mrf.mxu0
  %v2026 = vadd.f32 0.0, %v2025
  %2027 = vmatmul.f32.gmra.mxu0 %v1558
  %v2028 = vpop.f32.mrf.mxu0
  %v2029 = vadd.f32 0.0, %v2028
  %2030 = vmatmul.f32.gmra.mxu0 %v1574
  %v2031 = vpop.f32.mrf.mxu0
  %v2032 = vadd.f32 0.0, %v2031
  %2033 = vmatmul.f32.gmra.mxu0 %v1590
  %v2034 = vpop.f32.mrf.mxu0
  %v2035 = vadd.f32 0.0, %v2034
  %2036 = vmatmul.f32.gmra.mxu0 %v1606
  %v2037 = vpop.f32.mrf.mxu0
  %v2038 = vadd.f32 0.0, %v2037
  %2039 = vmatmul.f32.gmra.mxu0 %v1622
  %v2040 = vpop.f32.mrf.mxu0
  %v2041 = vadd.f32 0.0, %v2040
  %2042 = vmatmul.f32.gmra.mxu0 %v1638
  %v2043 = vpop.f32.mrf.mxu0
  %v2044 = vadd.f32 0.0, %v2043
  %2045 = vmatmul.f32.gmra.mxu0 %v1654
  %v2046 = vpop.f32.mrf.mxu0
  %v2047 = vadd.f32 0.0, %v2046
  %2048 = vmatmul.f32.gmra.mxu0 %v1670
  %v2049 = vpop.f32.mrf.mxu0
  %v2050 = vadd.f32 0.0, %v2049
  %2051 = vmatmul.f32.gmra.mxu0 %v1686
  %v2052 = vpop.f32.mrf.mxu0
  %v2053 = vadd.f32 0.0, %v2052
  %2054 = vmatmul.f32.gmra.mxu0 %v1702
  %v2055 = vpop.f32.mrf.mxu0
  %v2056 = vadd.f32 0.0, %v2055
  %2057 = vmatmul.f32.gmra.mxu0 %v1718
  %v2058 = vpop.f32.mrf.mxu0
  %v2059 = vadd.f32 0.0, %v2058
  %2060 = vmatmul.f32.gmra.mxu0 %v1734
  %v2061 = vpop.f32.mrf.mxu0
  %v2062 = vadd.f32 0.0, %v2061
  %2063 = vmatmul.f32.gmra.mxu0 %v1750
  %v2064 = vpop.f32.mrf.mxu0
  %v2065 = vadd.f32 0.0, %v2064
  %2066 = vmatmul.f32.gmra.mxu0 %v1766
  %v2067 = vpop.f32.mrf.mxu0
  %v2068 = vadd.f32 0.0, %v2067
  %2069 = vmatmul.f32.gmra.mxu0 %v1782
  %v2070 = vpop.f32.mrf.mxu0
  %v2071 = vadd.f32 0.0, %v2070
  %2072 = vmatmul.f32.gmra.mxu0 %v1798
  %v2073 = vpop.f32.mrf.mxu0
  %v2074 = vadd.f32 0.0, %v2073
  %2075 = vmatmul.f32.gmra.mxu0 %v1814
  %v2076 = vpop.f32.mrf.mxu0
  %v2077 = vadd.f32 0.0, %v2076
  %2078 = vmatmul.f32.gmra.mxu0 %v1830
  %v2079 = vpop.f32.mrf.mxu0
  %v2080 = vadd.f32 0.0, %v2079
  %2081 = vmatmul.f32.gmra.mxu0 %v1846
  %v2082 = vpop.f32.mrf.mxu0
  %v2083 = vadd.f32 0.0, %v2082
  %2084 = vmatmul.f32.gmra.mxu0 %v1862
  %v2085 = vpop.f32.mrf.mxu0
  %v2086 = vadd.f32 0.0, %v2085
  %2087 = vmatmul.f32.gmra.mxu0 %v1878
  %v2088 = vpop.f32.mrf.mxu0
  %v2089 = vadd.f32 0.0, %v2088
  %2090 = vmatmul.f32.gmra.mxu0 %v1894
  %v2091 = vpop.f32.mrf.mxu0
  %v2092 = vadd.f32 0.0, %v2091
  %2093 = vmatmul.f32.gmra.mxu0 %v1910
  %v2094 = vpop.f32.mrf.mxu0
  %v2095 = vadd.f32 0.0, %v2094
  %2096 = vmatmul.f32.gmra.mxu0 %v1926
  %v2097 = vpop.f32.mrf.mxu0
  %v2098 = vadd.f32 0.0, %v2097
  %2099 = vmatmul.f32.gmra.mxu0 %v1942
  %v2100 = vpop.f32.mrf.mxu0
  %v2101 = vadd.f32 0.0, %v2100
  %2102 = vdwg.mxu0
  %2103 = vmatpush.msra.mxu0 %v709
  %2104 = vmatpush.msra.mxu0 %v708
  %2105 = vmatpush.msra.mxu0 %v707
  %2106 = vmatpush.msra.mxu0 %v706
  %2107 = vmatpush.msra.mxu0 %v705
  %2108 = vmatpush.msra.mxu0 %v704
  %2109 = vmatpush.msra.mxu0 %v703
  %2110 = vmatpush.msra.mxu0 %v702
  %2111 = vmatpush.msra.mxu0 %v701
  %2112 = vmatpush.msra.mxu0 %v700
  %2113 = vmatpush.msra.mxu0 %v699
  %2114 = vmatpush.msra.mxu0 %v698
  %2115 = vmatpush.msra.mxu0 %v697
  %2116 = vmatpush.msra.mxu0 %v696
  %2117 = vmatpush.msra.mxu0 %v695
  %2118 = vmatpush.msra.mxu0 %v694
  %2119 = vmatmul.f32.gmra.mxu0 %v1447
  %v2120 = vpop.f32.mrf.mxu0
  %v2121 = vadd.f32 %v2008, %v2120
  %2122 = vmatmul.f32.gmra.mxu0 %v1463
  %v2123 = vpop.f32.mrf.mxu0
  %v2124 = vadd.f32 %v2011, %v2123
  %2125 = vmatmul.f32.gmra.mxu0 %v1479
  %v2126 = vpop.f32.mrf.mxu0
  %v2127 = vadd.f32 %v2014, %v2126
  %2128 = vmatmul.f32.gmra.mxu0 %v1495
  %v2129 = vpop.f32.mrf.mxu0
  %v2130 = vadd.f32 %v2017, %v2129
  %2131 = vmatmul.f32.gmra.mxu0 %v1511
  %v2132 = vpop.f32.mrf.mxu0
  %v2133 = vadd.f32 %v2020, %v2132
  %2134 = vmatmul.f32.gmra.mxu0 %v1527
  %v2135 = vpop.f32.mrf.mxu0
  %v2136 = vadd.f32 %v2023, %v2135
  %2137 = vmatmul.f32.gmra.mxu0 %v1543
  %v2138 = vpop.f32.mrf.mxu0
  %v2139 = vadd.f32 %v2026, %v2138
  %2140 = vmatmul.f32.gmra.mxu0 %v1559
  %v2141 = vpop.f32.mrf.mxu0
  %v2142 = vadd.f32 %v2029, %v2141
  %2143 = vmatmul.f32.gmra.mxu0 %v1575
  %v2144 = vpop.f32.mrf.mxu0
  %v2145 = vadd.f32 %v2032, %v2144
  %2146 = vmatmul.f32.gmra.mxu0 %v1591
  %v2147 = vpop.f32.mrf.mxu0
  %v2148 = vadd.f32 %v2035, %v2147
  %2149 = vmatmul.f32.gmra.mxu0 %v1607
  %v2150 = vpop.f32.mrf.mxu0
  %v2151 = vadd.f32 %v2038, %v2150
  %2152 = vmatmul.f32.gmra.mxu0 %v1623
  %v2153 = vpop.f32.mrf.mxu0
  %v2154 = vadd.f32 %v2041, %v2153
  %2155 = vmatmul.f32.gmra.mxu0 %v1639
  %v2156 = vpop.f32.mrf.mxu0
  %v2157 = vadd.f32 %v2044, %v2156
  %2158 = vmatmul.f32.gmra.mxu0 %v1655
  %v2159 = vpop.f32.mrf.mxu0
  %v2160 = vadd.f32 %v2047, %v2159
  %2161 = vmatmul.f32.gmra.mxu0 %v1671
  %v2162 = vpop.f32.mrf.mxu0
  %v2163 = vadd.f32 %v2050, %v2162
  %2164 = vmatmul.f32.gmra.mxu0 %v1687
  %v2165 = vpop.f32.mrf.mxu0
  %v2166 = vadd.f32 %v2053, %v2165
  %2167 = vmatmul.f32.gmra.mxu0 %v1703
  %v2168 = vpop.f32.mrf.mxu0
  %v2169 = vadd.f32 %v2056, %v2168
  %2170 = vmatmul.f32.gmra.mxu0 %v1719
  %v2171 = vpop.f32.mrf.mxu0
  %v2172 = vadd.f32 %v2059, %v2171
  %2173 = vmatmul.f32.gmra.mxu0 %v1735
  %v2174 = vpop.f32.mrf.mxu0
  %v2175 = vadd.f32 %v2062, %v2174
  %2176 = vmatmul.f32.gmra.mxu0 %v1751
  %v2177 = vpop.f32.mrf.mxu0
  %v2178 = vadd.f32 %v2065, %v2177
  %2179 = vmatmul.f32.gmra.mxu0 %v1767
  %v2180 = vpop.f32.mrf.mxu0
  %v2181 = vadd.f32 %v2068, %v2180
  %2182 = vmatmul.f32.gmra.mxu0 %v1783
  %v2183 = vpop.f32.mrf.mxu0
  %v2184 = vadd.f32 %v2071, %v2183
  %2185 = vmatmul.f32.gmra.mxu0 %v1799
  %v2186 = vpop.f32.mrf.mxu0
  %v2187 = vadd.f32 %v2074, %v2186
  %2188 = vmatmul.f32.gmra.mxu0 %v1815
  %v2189 = vpop.f32.mrf.mxu0
  %v2190 = vadd.f32 %v2077, %v2189
  %2191 = vmatmul.f32.gmra.mxu0 %v1831
  %v2192 = vpop.f32.mrf.mxu0
  %v2193 = vadd.f32 %v2080, %v2192
  %2194 = vmatmul.f32.gmra.mxu0 %v1847
  %v2195 = vpop.f32.mrf.mxu0
  %v2196 = vadd.f32 %v2083, %v2195
  %2197 = vmatmul.f32.gmra.mxu0 %v1863
  %v2198 = vpop.f32.mrf.mxu0
  %v2199 = vadd.f32 %v2086, %v2198
  %2200 = vmatmul.f32.gmra.mxu0 %v1879
  %v2201 = vpop.f32.mrf.mxu0
  %v2202 = vadd.f32 %v2089, %v2201
  %2203 = vmatmul.f32.gmra.mxu0 %v1895
  %v2204 = vpop.f32.mrf.mxu0
  %v2205 = vadd.f32 %v2092, %v2204
  %2206 = vmatmul.f32.gmra.mxu0 %v1911
  %v2207 = vpop.f32.mrf.mxu0
  %v2208 = vadd.f32 %v2095, %v2207
  %2209 = vmatmul.f32.gmra.mxu0 %v1927
  %v2210 = vpop.f32.mrf.mxu0
  %v2211 = vadd.f32 %v2098, %v2210
  %2212 = vmatmul.f32.gmra.mxu0 %v1943
  %v2213 = vpop.f32.mrf.mxu0
  %v2214 = vadd.f32 %v2101, %v2213
  %2215 = vdwg.mxu0
  %2216 = vmatpush.msra.mxu0 %v725
  %2217 = vmatpush.msra.mxu0 %v724
  %2218 = vmatpush.msra.mxu0 %v723
  %2219 = vmatpush.msra.mxu0 %v722
  %2220 = vmatpush.msra.mxu0 %v721
  %2221 = vmatpush.msra.mxu0 %v720
  %2222 = vmatpush.msra.mxu0 %v719
  %2223 = vmatpush.msra.mxu0 %v718
  %2224 = vmatpush.msra.mxu0 %v717
  %2225 = vmatpush.msra.mxu0 %v716
  %2226 = vmatpush.msra.mxu0 %v715
  %2227 = vmatpush.msra.mxu0 %v714
  %2228 = vmatpush.msra.mxu0 %v713
  %2229 = vmatpush.msra.mxu0 %v712
  %2230 = vmatpush.msra.mxu0 %v711
  %2231 = vmatpush.msra.mxu0 %v710
  %2232 = vmatmul.f32.gmra.mxu0 %v1448
  %v2233 = vpop.f32.mrf.mxu0
  %v2234 = vadd.f32 %v2121, %v2233
  %2235 = vmatmul.f32.gmra.mxu0 %v1464
  %v2236 = vpop.f32.mrf.mxu0
  %v2237 = vadd.f32 %v2124, %v2236
  %2238 = vmatmul.f32.gmra.mxu0 %v1480
  %v2239 = vpop.f32.mrf.mxu0
  %v2240 = vadd.f32 %v2127, %v2239
  %2241 = vmatmul.f32.gmra.mxu0 %v1496
  %v2242 = vpop.f32.mrf.mxu0
  %v2243 = vadd.f32 %v2130, %v2242
  %2244 = vmatmul.f32.gmra.mxu0 %v1512
  %v2245 = vpop.f32.mrf.mxu0
  %v2246 = vadd.f32 %v2133, %v2245
  %2247 = vmatmul.f32.gmra.mxu0 %v1528
  %v2248 = vpop.f32.mrf.mxu0
  %v2249 = vadd.f32 %v2136, %v2248
  %2250 = vmatmul.f32.gmra.mxu0 %v1544
  %v2251 = vpop.f32.mrf.mxu0
  %v2252 = vadd.f32 %v2139, %v2251
  %2253 = vmatmul.f32.gmra.mxu0 %v1560
  %v2254 = vpop.f32.mrf.mxu0
  %v2255 = vadd.f32 %v2142, %v2254
  %2256 = vmatmul.f32.gmra.mxu0 %v1576
  %v2257 = vpop.f32.mrf.mxu0
  %v2258 = vadd.f32 %v2145, %v2257
  %2259 = vmatmul.f32.gmra.mxu0 %v1592
  %v2260 = vpop.f32.mrf.mxu0
  %v2261 = vadd.f32 %v2148, %v2260
  %2262 = vmatmul.f32.gmra.mxu0 %v1608
  %v2263 = vpop.f32.mrf.mxu0
  %v2264 = vadd.f32 %v2151, %v2263
  %2265 = vmatmul.f32.gmra.mxu0 %v1624
  %v2266 = vpop.f32.mrf.mxu0
  %v2267 = vadd.f32 %v2154, %v2266
  %2268 = vmatmul.f32.gmra.mxu0 %v1640
  %v2269 = vpop.f32.mrf.mxu0
  %v2270 = vadd.f32 %v2157, %v2269
  %2271 = vmatmul.f32.gmra.mxu0 %v1656
  %v2272 = vpop.f32.mrf.mxu0
  %v2273 = vadd.f32 %v2160, %v2272
  %2274 = vmatmul.f32.gmra.mxu0 %v1672
  %v2275 = vpop.f32.mrf.mxu0
  %v2276 = vadd.f32 %v2163, %v2275
  %2277 = vmatmul.f32.gmra.mxu0 %v1688
  %v2278 = vpop.f32.mrf.mxu0
  %v2279 = vadd.f32 %v2166, %v2278
  %2280 = vmatmul.f32.gmra.mxu0 %v1704
  %v2281 = vpop.f32.mrf.mxu0
  %v2282 = vadd.f32 %v2169, %v2281
  %2283 = vmatmul.f32.gmra.mxu0 %v1720
  %v2284 = vpop.f32.mrf.mxu0
  %v2285 = vadd.f32 %v2172, %v2284
  %2286 = vmatmul.f32.gmra.mxu0 %v1736
  %v2287 = vpop.f32.mrf.mxu0
  %v2288 = vadd.f32 %v2175, %v2287
  %2289 = vmatmul.f32.gmra.mxu0 %v1752
  %v2290 = vpop.f32.mrf.mxu0
  %v2291 = vadd.f32 %v2178, %v2290
  %2292 = vmatmul.f32.gmra.mxu0 %v1768
  %v2293 = vpop.f32.mrf.mxu0
  %v2294 = vadd.f32 %v2181, %v2293
  %2295 = vmatmul.f32.gmra.mxu0 %v1784
  %v2296 = vpop.f32.mrf.mxu0
  %v2297 = vadd.f32 %v2184, %v2296
  %2298 = vmatmul.f32.gmra.mxu0 %v1800
  %v2299 = vpop.f32.mrf.mxu0
  %v2300 = vadd.f32 %v2187, %v2299
  %2301 = vmatmul.f32.gmra.mxu0 %v1816
  %v2302 = vpop.f32.mrf.mxu0
  %v2303 = vadd.f32 %v2190, %v2302
  %2304 = vmatmul.f32.gmra.mxu0 %v1832
  %v2305 = vpop.f32.mrf.mxu0
  %v2306 = vadd.f32 %v2193, %v2305
  %2307 = vmatmul.f32.gmra.mxu0 %v1848
  %v2308 = vpop.f32.mrf.mxu0
  %v2309 = vadd.f32 %v2196, %v2308
  %2310 = vmatmul.f32.gmra.mxu0 %v1864
  %v2311 = vpop.f32.mrf.mxu0
  %v2312 = vadd.f32 %v2199, %v2311
  %2313 = vmatmul.f32.gmra.mxu0 %v1880
  %v2314 = vpop.f32.mrf.mxu0
  %v2315 = vadd.f32 %v2202, %v2314
  %2316 = vmatmul.f32.gmra.mxu0 %v1896
  %v2317 = vpop.f32.mrf.mxu0
  %v2318 = vadd.f32 %v2205, %v2317
  %2319 = vmatmul.f32.gmra.mxu0 %v1912
  %v2320 = vpop.f32.mrf.mxu0
  %v2321 = vadd.f32 %v2208, %v2320
  %2322 = vmatmul.f32.gmra.mxu0 %v1928
  %v2323 = vpop.f32.mrf.mxu0
  %v2324 = vadd.f32 %v2211, %v2323
  %2325 = vmatmul.f32.gmra.mxu0 %v1944
  %v2326 = vpop.f32.mrf.mxu0
  %v2327 = vadd.f32 %v2214, %v2326
  %2328 = vdwg.mxu0
  %2329 = vmatpush.msra.mxu0 %v741
  %2330 = vmatpush.msra.mxu0 %v740
  %2331 = vmatpush.msra.mxu0 %v739
  %2332 = vmatpush.msra.mxu0 %v738
  %2333 = vmatpush.msra.mxu0 %v737
  %2334 = vmatpush.msra.mxu0 %v736
  %2335 = vmatpush.msra.mxu0 %v735
  %2336 = vmatpush.msra.mxu0 %v734
  %2337 = vmatpush.msra.mxu0 %v733
  %2338 = vmatpush.msra.mxu0 %v732
  %2339 = vmatpush.msra.mxu0 %v731
  %2340 = vmatpush.msra.mxu0 %v730
  %2341 = vmatpush.msra.mxu0 %v729
  %2342 = vmatpush.msra.mxu0 %v728
  %2343 = vmatpush.msra.mxu0 %v727
  %2344 = vmatpush.msra.mxu0 %v726
  %2345 = vmatmul.f32.gmra.mxu0 %v1449
  %v2346 = vpop.f32.mrf.mxu0
  %v2347 = vadd.f32 %v2234, %v2346
  %2348 = vmatmul.f32.gmra.mxu0 %v1465
  %v2349 = vpop.f32.mrf.mxu0
  %v2350 = vadd.f32 %v2237, %v2349
  %2351 = vmatmul.f32.gmra.mxu0 %v1481
  %v2352 = vpop.f32.mrf.mxu0
  %v2353 = vadd.f32 %v2240, %v2352
  %2354 = vmatmul.f32.gmra.mxu0 %v1497
  %v2355 = vpop.f32.mrf.mxu0
  %v2356 = vadd.f32 %v2243, %v2355
  %2357 = vmatmul.f32.gmra.mxu0 %v1513
  %v2358 = vpop.f32.mrf.mxu0
  %v2359 = vadd.f32 %v2246, %v2358
  %2360 = vmatmul.f32.gmra.mxu0 %v1529
  %v2361 = vpop.f32.mrf.mxu0
  %v2362 = vadd.f32 %v2249, %v2361
  %2363 = vmatmul.f32.gmra.mxu0 %v1545
  %v2364 = vpop.f32.mrf.mxu0
  %v2365 = vadd.f32 %v2252, %v2364
  %2366 = vmatmul.f32.gmra.mxu0 %v1561
  %v2367 = vpop.f32.mrf.mxu0
  %v2368 = vadd.f32 %v2255, %v2367
  %2369 = vmatmul.f32.gmra.mxu0 %v1577
  %v2370 = vpop.f32.mrf.mxu0
  %v2371 = vadd.f32 %v2258, %v2370
  %2372 = vmatmul.f32.gmra.mxu0 %v1593
  %v2373 = vpop.f32.mrf.mxu0
  %v2374 = vadd.f32 %v2261, %v2373
  %2375 = vmatmul.f32.gmra.mxu0 %v1609
  %v2376 = vpop.f32.mrf.mxu0
  %v2377 = vadd.f32 %v2264, %v2376
  %2378 = vmatmul.f32.gmra.mxu0 %v1625
  %v2379 = vpop.f32.mrf.mxu0
  %v2380 = vadd.f32 %v2267, %v2379
  %2381 = vmatmul.f32.gmra.mxu0 %v1641
  %v2382 = vpop.f32.mrf.mxu0
  %v2383 = vadd.f32 %v2270, %v2382
  %2384 = vmatmul.f32.gmra.mxu0 %v1657
  %v2385 = vpop.f32.mrf.mxu0
  %v2386 = vadd.f32 %v2273, %v2385
  %2387 = vmatmul.f32.gmra.mxu0 %v1673
  %v2388 = vpop.f32.mrf.mxu0
  %v2389 = vadd.f32 %v2276, %v2388
  %2390 = vmatmul.f32.gmra.mxu0 %v1689
  %v2391 = vpop.f32.mrf.mxu0
  %v2392 = vadd.f32 %v2279, %v2391
  %2393 = vmatmul.f32.gmra.mxu0 %v1705
  %v2394 = vpop.f32.mrf.mxu0
  %v2395 = vadd.f32 %v2282, %v2394
  %2396 = vmatmul.f32.gmra.mxu0 %v1721
  %v2397 = vpop.f32.mrf.mxu0
  %v2398 = vadd.f32 %v2285, %v2397
  %2399 = vmatmul.f32.gmra.mxu0 %v1737
  %v2400 = vpop.f32.mrf.mxu0
  %v2401 = vadd.f32 %v2288, %v2400
  %2402 = vmatmul.f32.gmra.mxu0 %v1753
  %v2403 = vpop.f32.mrf.mxu0
  %v2404 = vadd.f32 %v2291, %v2403
  %2405 = vmatmul.f32.gmra.mxu0 %v1769
  %v2406 = vpop.f32.mrf.mxu0
  %v2407 = vadd.f32 %v2294, %v2406
  %2408 = vmatmul.f32.gmra.mxu0 %v1785
  %v2409 = vpop.f32.mrf.mxu0
  %v2410 = vadd.f32 %v2297, %v2409
  %2411 = vmatmul.f32.gmra.mxu0 %v1801
  %v2412 = vpop.f32.mrf.mxu0
  %v2413 = vadd.f32 %v2300, %v2412
  %2414 = vmatmul.f32.gmra.mxu0 %v1817
  %v2415 = vpop.f32.mrf.mxu0
  %v2416 = vadd.f32 %v2303, %v2415
  %2417 = vmatmul.f32.gmra.mxu0 %v1833
  %v2418 = vpop.f32.mrf.mxu0
  %v2419 = vadd.f32 %v2306, %v2418
  %2420 = vmatmul.f32.gmra.mxu0 %v1849
  %v2421 = vpop.f32.mrf.mxu0
  %v2422 = vadd.f32 %v2309, %v2421
  %2423 = vmatmul.f32.gmra.mxu0 %v1865
  %v2424 = vpop.f32.mrf.mxu0
  %v2425 = vadd.f32 %v2312, %v2424
  %2426 = vmatmul.f32.gmra.mxu0 %v1881
  %v2427 = vpop.f32.mrf.mxu0
  %v2428 = vadd.f32 %v2315, %v2427
  %2429 = vmatmul.f32.gmra.mxu0 %v1897
  %v2430 = vpop.f32.mrf.mxu0
  %v2431 = vadd.f32 %v2318, %v2430
  %2432 = vmatmul.f32.gmra.mxu0 %v1913
  %v2433 = vpop.f32.mrf.mxu0
  %v2434 = vadd.f32 %v2321, %v2433
  %2435 = vmatmul.f32.gmra.mxu0 %v1929
  %v2436 = vpop.f32.mrf.mxu0
  %v2437 = vadd.f32 %v2324, %v2436
  %2438 = vmatmul.f32.gmra.mxu0 %v1945
  %v2439 = vpop.f32.mrf.mxu0
  %v2440 = vadd.f32 %v2327, %v2439
  %2441 = vdwg.mxu0
  %2442 = vmatpush.msra.mxu0 %v757
  %2443 = vmatpush.msra.mxu0 %v756
  %2444 = vmatpush.msra.mxu0 %v755
  %2445 = vmatpush.msra.mxu0 %v754
  %2446 = vmatpush.msra.mxu0 %v753
  %2447 = vmatpush.msra.mxu0 %v752
  %2448 = vmatpush.msra.mxu0 %v751
  %2449 = vmatpush.msra.mxu0 %v750
  %2450 = vmatpush.msra.mxu0 %v749
  %2451 = vmatpush.msra.mxu0 %v748
  %2452 = vmatpush.msra.mxu0 %v747
  %2453 = vmatpush.msra.mxu0 %v746
  %2454 = vmatpush.msra.mxu0 %v745
  %2455 = vmatpush.msra.mxu0 %v744
  %2456 = vmatpush.msra.mxu0 %v743
  %2457 = vmatpush.msra.mxu0 %v742
  %2458 = vmatmul.f32.gmra.mxu0 %v1450
  %v2459 = vpop.f32.mrf.mxu0
  %v2460 = vadd.f32 %v2347, %v2459
  %2461 = vmatmul.f32.gmra.mxu0 %v1466
  %v2462 = vpop.f32.mrf.mxu0
  %v2463 = vadd.f32 %v2350, %v2462
  %2464 = vmatmul.f32.gmra.mxu0 %v1482
  %v2465 = vpop.f32.mrf.mxu0
  %v2466 = vadd.f32 %v2353, %v2465
  %2467 = vmatmul.f32.gmra.mxu0 %v1498
  %v2468 = vpop.f32.mrf.mxu0
  %v2469 = vadd.f32 %v2356, %v2468
  %2470 = vmatmul.f32.gmra.mxu0 %v1514
  %v2471 = vpop.f32.mrf.mxu0
  %v2472 = vadd.f32 %v2359, %v2471
  %2473 = vmatmul.f32.gmra.mxu0 %v1530
  %v2474 = vpop.f32.mrf.mxu0
  %v2475 = vadd.f32 %v2362, %v2474
  %2476 = vmatmul.f32.gmra.mxu0 %v1546
  %v2477 = vpop.f32.mrf.mxu0
  %v2478 = vadd.f32 %v2365, %v2477
  %2479 = vmatmul.f32.gmra.mxu0 %v1562
  %v2480 = vpop.f32.mrf.mxu0
  %v2481 = vadd.f32 %v2368, %v2480
  %2482 = vmatmul.f32.gmra.mxu0 %v1578
  %v2483 = vpop.f32.mrf.mxu0
  %v2484 = vadd.f32 %v2371, %v2483
  %2485 = vmatmul.f32.gmra.mxu0 %v1594
  %v2486 = vpop.f32.mrf.mxu0
  %v2487 = vadd.f32 %v2374, %v2486
  %2488 = vmatmul.f32.gmra.mxu0 %v1610
  %v2489 = vpop.f32.mrf.mxu0
  %v2490 = vadd.f32 %v2377, %v2489
  %2491 = vmatmul.f32.gmra.mxu0 %v1626
  %v2492 = vpop.f32.mrf.mxu0
  %v2493 = vadd.f32 %v2380, %v2492
  %2494 = vmatmul.f32.gmra.mxu0 %v1642
  %v2495 = vpop.f32.mrf.mxu0
  %v2496 = vadd.f32 %v2383, %v2495
  %2497 = vmatmul.f32.gmra.mxu0 %v1658
  %v2498 = vpop.f32.mrf.mxu0
  %v2499 = vadd.f32 %v2386, %v2498
  %2500 = vmatmul.f32.gmra.mxu0 %v1674
  %v2501 = vpop.f32.mrf.mxu0
  %v2502 = vadd.f32 %v2389, %v2501
  %2503 = vmatmul.f32.gmra.mxu0 %v1690
  %v2504 = vpop.f32.mrf.mxu0
  %v2505 = vadd.f32 %v2392, %v2504
  %2506 = vmatmul.f32.gmra.mxu0 %v1706
  %v2507 = vpop.f32.mrf.mxu0
  %v2508 = vadd.f32 %v2395, %v2507
  %2509 = vmatmul.f32.gmra.mxu0 %v1722
  %v2510 = vpop.f32.mrf.mxu0
  %v2511 = vadd.f32 %v2398, %v2510
  %2512 = vmatmul.f32.gmra.mxu0 %v1738
  %v2513 = vpop.f32.mrf.mxu0
  %v2514 = vadd.f32 %v2401, %v2513
  %2515 = vmatmul.f32.gmra.mxu0 %v1754
  %v2516 = vpop.f32.mrf.mxu0
  %v2517 = vadd.f32 %v2404, %v2516
  %2518 = vmatmul.f32.gmra.mxu0 %v1770
  %v2519 = vpop.f32.mrf.mxu0
  %v2520 = vadd.f32 %v2407, %v2519
  %2521 = vmatmul.f32.gmra.mxu0 %v1786
  %v2522 = vpop.f32.mrf.mxu0
  %v2523 = vadd.f32 %v2410, %v2522
  %2524 = vmatmul.f32.gmra.mxu0 %v1802
  %v2525 = vpop.f32.mrf.mxu0
  %v2526 = vadd.f32 %v2413, %v2525
  %2527 = vmatmul.f32.gmra.mxu0 %v1818
  %v2528 = vpop.f32.mrf.mxu0
  %v2529 = vadd.f32 %v2416, %v2528
  %2530 = vmatmul.f32.gmra.mxu0 %v1834
  %v2531 = vpop.f32.mrf.mxu0
  %v2532 = vadd.f32 %v2419, %v2531
  %2533 = vmatmul.f32.gmra.mxu0 %v1850
  %v2534 = vpop.f32.mrf.mxu0
  %v2535 = vadd.f32 %v2422, %v2534
  %2536 = vmatmul.f32.gmra.mxu0 %v1866
  %v2537 = vpop.f32.mrf.mxu0
  %v2538 = vadd.f32 %v2425, %v2537
  %2539 = vmatmul.f32.gmra.mxu0 %v1882
  %v2540 = vpop.f32.mrf.mxu0
  %v2541 = vadd.f32 %v2428, %v2540
  %2542 = vmatmul.f32.gmra.mxu0 %v1898
  %v2543 = vpop.f32.mrf.mxu0
  %v2544 = vadd.f32 %v2431, %v2543
  %2545 = vmatmul.f32.gmra.mxu0 %v1914
  %v2546 = vpop.f32.mrf.mxu0
  %v2547 = vadd.f32 %v2434, %v2546
  %2548 = vmatmul.f32.gmra.mxu0 %v1930
  %v2549 = vpop.f32.mrf.mxu0
  %v2550 = vadd.f32 %v2437, %v2549
  %2551 = vmatmul.f32.gmra.mxu0 %v1946
  %v2552 = vpop.f32.mrf.mxu0
  %v2553 = vadd.f32 %v2440, %v2552
  %2554 = vdwg.mxu0
  %2555 = vmatpush.msra.mxu0 %v773
  %2556 = vmatpush.msra.mxu0 %v772
  %2557 = vmatpush.msra.mxu0 %v771
  %2558 = vmatpush.msra.mxu0 %v770
  %2559 = vmatpush.msra.mxu0 %v769
  %2560 = vmatpush.msra.mxu0 %v768
  %2561 = vmatpush.msra.mxu0 %v767
  %2562 = vmatpush.msra.mxu0 %v766
  %2563 = vmatpush.msra.mxu0 %v765
  %2564 = vmatpush.msra.mxu0 %v764
  %2565 = vmatpush.msra.mxu0 %v763
  %2566 = vmatpush.msra.mxu0 %v762
  %2567 = vmatpush.msra.mxu0 %v761
  %2568 = vmatpush.msra.mxu0 %v760
  %2569 = vmatpush.msra.mxu0 %v759
  %2570 = vmatpush.msra.mxu0 %v758
  %2571 = vmatmul.f32.gmra.mxu0 %v1451
  %v2572 = vpop.f32.mrf.mxu0
  %v2573 = vadd.f32 %v2460, %v2572
  %2574 = vmatmul.f32.gmra.mxu0 %v1467
  %v2575 = vpop.f32.mrf.mxu0
  %v2576 = vadd.f32 %v2463, %v2575
  %2577 = vmatmul.f32.gmra.mxu0 %v1483
  %v2578 = vpop.f32.mrf.mxu0
  %v2579 = vadd.f32 %v2466, %v2578
  %2580 = vmatmul.f32.gmra.mxu0 %v1499
  %v2581 = vpop.f32.mrf.mxu0
  %v2582 = vadd.f32 %v2469, %v2581
  %2583 = vmatmul.f32.gmra.mxu0 %v1515
  %v2584 = vpop.f32.mrf.mxu0
  %v2585 = vadd.f32 %v2472, %v2584
  %2586 = vmatmul.f32.gmra.mxu0 %v1531
  %v2587 = vpop.f32.mrf.mxu0
  %v2588 = vadd.f32 %v2475, %v2587
  %2589 = vmatmul.f32.gmra.mxu0 %v1547
  %v2590 = vpop.f32.mrf.mxu0
  %v2591 = vadd.f32 %v2478, %v2590
  %2592 = vmatmul.f32.gmra.mxu0 %v1563
  %v2593 = vpop.f32.mrf.mxu0
  %v2594 = vadd.f32 %v2481, %v2593
  %2595 = vmatmul.f32.gmra.mxu0 %v1579
  %v2596 = vpop.f32.mrf.mxu0
  %v2597 = vadd.f32 %v2484, %v2596
  %2598 = vmatmul.f32.gmra.mxu0 %v1595
  %v2599 = vpop.f32.mrf.mxu0
  %v2600 = vadd.f32 %v2487, %v2599
  %2601 = vmatmul.f32.gmra.mxu0 %v1611
  %v2602 = vpop.f32.mrf.mxu0
  %v2603 = vadd.f32 %v2490, %v2602
  %2604 = vmatmul.f32.gmra.mxu0 %v1627
  %v2605 = vpop.f32.mrf.mxu0
  %v2606 = vadd.f32 %v2493, %v2605
  %2607 = vmatmul.f32.gmra.mxu0 %v1643
  %v2608 = vpop.f32.mrf.mxu0
  %v2609 = vadd.f32 %v2496, %v2608
  %2610 = vmatmul.f32.gmra.mxu0 %v1659
  %v2611 = vpop.f32.mrf.mxu0
  %v2612 = vadd.f32 %v2499, %v2611
  %2613 = vmatmul.f32.gmra.mxu0 %v1675
  %v2614 = vpop.f32.mrf.mxu0
  %v2615 = vadd.f32 %v2502, %v2614
  %2616 = vmatmul.f32.gmra.mxu0 %v1691
  %v2617 = vpop.f32.mrf.mxu0
  %v2618 = vadd.f32 %v2505, %v2617
  %2619 = vmatmul.f32.gmra.mxu0 %v1707
  %v2620 = vpop.f32.mrf.mxu0
  %v2621 = vadd.f32 %v2508, %v2620
  %2622 = vmatmul.f32.gmra.mxu0 %v1723
  %v2623 = vpop.f32.mrf.mxu0
  %v2624 = vadd.f32 %v2511, %v2623
  %2625 = vmatmul.f32.gmra.mxu0 %v1739
  %v2626 = vpop.f32.mrf.mxu0
  %v2627 = vadd.f32 %v2514, %v2626
  %2628 = vmatmul.f32.gmra.mxu0 %v1755
  %v2629 = vpop.f32.mrf.mxu0
  %v2630 = vadd.f32 %v2517, %v2629
  %2631 = vmatmul.f32.gmra.mxu0 %v1771
  %v2632 = vpop.f32.mrf.mxu0
  %v2633 = vadd.f32 %v2520, %v2632
  %2634 = vmatmul.f32.gmra.mxu0 %v1787
  %v2635 = vpop.f32.mrf.mxu0
  %v2636 = vadd.f32 %v2523, %v2635
  %2637 = vmatmul.f32.gmra.mxu0 %v1803
  %v2638 = vpop.f32.mrf.mxu0
  %v2639 = vadd.f32 %v2526, %v2638
  %2640 = vmatmul.f32.gmra.mxu0 %v1819
  %v2641 = vpop.f32.mrf.mxu0
  %v2642 = vadd.f32 %v2529, %v2641
  %2643 = vmatmul.f32.gmra.mxu0 %v1835
  %v2644 = vpop.f32.mrf.mxu0
  %v2645 = vadd.f32 %v2532, %v2644
  %2646 = vmatmul.f32.gmra.mxu0 %v1851
  %v2647 = vpop.f32.mrf.mxu0
  %v2648 = vadd.f32 %v2535, %v2647
  %2649 = vmatmul.f32.gmra.mxu0 %v1867
  %v2650 = vpop.f32.mrf.mxu0
  %v2651 = vadd.f32 %v2538, %v2650
  %2652 = vmatmul.f32.gmra.mxu0 %v1883
  %v2653 = vpop.f32.mrf.mxu0
  %v2654 = vadd.f32 %v2541, %v2653
  %2655 = vmatmul.f32.gmra.mxu0 %v1899
  %v2656 = vpop.f32.mrf.mxu0
  %v2657 = vadd.f32 %v2544, %v2656
  %2658 = vmatmul.f32.gmra.mxu0 %v1915
  %v2659 = vpop.f32.mrf.mxu0
  %v2660 = vadd.f32 %v2547, %v2659
  %2661 = vmatmul.f32.gmra.mxu0 %v1931
  %v2662 = vpop.f32.mrf.mxu0
  %v2663 = vadd.f32 %v2550, %v2662
  %2664 = vmatmul.f32.gmra.mxu0 %v1947
  %v2665 = vpop.f32.mrf.mxu0
  %v2666 = vadd.f32 %v2553, %v2665
  %2667 = vdwg.mxu0
  %2668 = vmatpush.msra.mxu0 %v789
  %2669 = vmatpush.msra.mxu0 %v788
  %2670 = vmatpush.msra.mxu0 %v787
  %2671 = vmatpush.msra.mxu0 %v786
  %2672 = vmatpush.msra.mxu0 %v785
  %2673 = vmatpush.msra.mxu0 %v784
  %2674 = vmatpush.msra.mxu0 %v783
  %2675 = vmatpush.msra.mxu0 %v782
  %2676 = vmatpush.msra.mxu0 %v781
  %2677 = vmatpush.msra.mxu0 %v780
  %2678 = vmatpush.msra.mxu0 %v779
  %2679 = vmatpush.msra.mxu0 %v778
  %2680 = vmatpush.msra.mxu0 %v777
  %2681 = vmatpush.msra.mxu0 %v776
  %2682 = vmatpush.msra.mxu0 %v775
  %2683 = vmatpush.msra.mxu0 %v774
  %2684 = vmatmul.f32.gmra.mxu0 %v1452
  %v2685 = vpop.f32.mrf.mxu0
  %v2686 = vadd.f32 %v2573, %v2685
  %2687 = vmatmul.f32.gmra.mxu0 %v1468
  %v2688 = vpop.f32.mrf.mxu0
  %v2689 = vadd.f32 %v2576, %v2688
  %2690 = vmatmul.f32.gmra.mxu0 %v1484
  %v2691 = vpop.f32.mrf.mxu0
  %v2692 = vadd.f32 %v2579, %v2691
  %2693 = vmatmul.f32.gmra.mxu0 %v1500
  %v2694 = vpop.f32.mrf.mxu0
  %v2695 = vadd.f32 %v2582, %v2694
  %2696 = vmatmul.f32.gmra.mxu0 %v1516
  %v2697 = vpop.f32.mrf.mxu0
  %v2698 = vadd.f32 %v2585, %v2697
  %2699 = vmatmul.f32.gmra.mxu0 %v1532
  %v2700 = vpop.f32.mrf.mxu0
  %v2701 = vadd.f32 %v2588, %v2700
  %2702 = vmatmul.f32.gmra.mxu0 %v1548
  %v2703 = vpop.f32.mrf.mxu0
  %v2704 = vadd.f32 %v2591, %v2703
  %2705 = vmatmul.f32.gmra.mxu0 %v1564
  %v2706 = vpop.f32.mrf.mxu0
  %v2707 = vadd.f32 %v2594, %v2706
  %2708 = vmatmul.f32.gmra.mxu0 %v1580
  %v2709 = vpop.f32.mrf.mxu0
  %v2710 = vadd.f32 %v2597, %v2709
  %2711 = vmatmul.f32.gmra.mxu0 %v1596
  %v2712 = vpop.f32.mrf.mxu0
  %v2713 = vadd.f32 %v2600, %v2712
  %2714 = vmatmul.f32.gmra.mxu0 %v1612
  %v2715 = vpop.f32.mrf.mxu0
  %v2716 = vadd.f32 %v2603, %v2715
  %2717 = vmatmul.f32.gmra.mxu0 %v1628
  %v2718 = vpop.f32.mrf.mxu0
  %v2719 = vadd.f32 %v2606, %v2718
  %2720 = vmatmul.f32.gmra.mxu0 %v1644
  %v2721 = vpop.f32.mrf.mxu0
  %v2722 = vadd.f32 %v2609, %v2721
  %2723 = vmatmul.f32.gmra.mxu0 %v1660
  %v2724 = vpop.f32.mrf.mxu0
  %v2725 = vadd.f32 %v2612, %v2724
  %2726 = vmatmul.f32.gmra.mxu0 %v1676
  %v2727 = vpop.f32.mrf.mxu0
  %v2728 = vadd.f32 %v2615, %v2727
  %2729 = vmatmul.f32.gmra.mxu0 %v1692
  %v2730 = vpop.f32.mrf.mxu0
  %v2731 = vadd.f32 %v2618, %v2730
  %2732 = vmatmul.f32.gmra.mxu0 %v1708
  %v2733 = vpop.f32.mrf.mxu0
  %v2734 = vadd.f32 %v2621, %v2733
  %2735 = vmatmul.f32.gmra.mxu0 %v1724
  %v2736 = vpop.f32.mrf.mxu0
  %v2737 = vadd.f32 %v2624, %v2736
  %2738 = vmatmul.f32.gmra.mxu0 %v1740
  %v2739 = vpop.f32.mrf.mxu0
  %v2740 = vadd.f32 %v2627, %v2739
  %2741 = vmatmul.f32.gmra.mxu0 %v1756
  %v2742 = vpop.f32.mrf.mxu0
  %v2743 = vadd.f32 %v2630, %v2742
  %2744 = vmatmul.f32.gmra.mxu0 %v1772
  %v2745 = vpop.f32.mrf.mxu0
  %v2746 = vadd.f32 %v2633, %v2745
  %2747 = vmatmul.f32.gmra.mxu0 %v1788
  %v2748 = vpop.f32.mrf.mxu0
  %v2749 = vadd.f32 %v2636, %v2748
  %2750 = vmatmul.f32.gmra.mxu0 %v1804
  %v2751 = vpop.f32.mrf.mxu0
  %v2752 = vadd.f32 %v2639, %v2751
  %2753 = vmatmul.f32.gmra.mxu0 %v1820
  %v2754 = vpop.f32.mrf.mxu0
  %v2755 = vadd.f32 %v2642, %v2754
  %2756 = vmatmul.f32.gmra.mxu0 %v1836
  %v2757 = vpop.f32.mrf.mxu0
  %v2758 = vadd.f32 %v2645, %v2757
  %2759 = vmatmul.f32.gmra.mxu0 %v1852
  %v2760 = vpop.f32.mrf.mxu0
  %v2761 = vadd.f32 %v2648, %v2760
  %2762 = vmatmul.f32.gmra.mxu0 %v1868
  %v2763 = vpop.f32.mrf.mxu0
  %v2764 = vadd.f32 %v2651, %v2763
  %2765 = vmatmul.f32.gmra.mxu0 %v1884
  %v2766 = vpop.f32.mrf.mxu0
  %v2767 = vadd.f32 %v2654, %v2766
  %2768 = vmatmul.f32.gmra.mxu0 %v1900
  %v2769 = vpop.f32.mrf.mxu0
  %v2770 = vadd.f32 %v2657, %v2769
  %2771 = vmatmul.f32.gmra.mxu0 %v1916
  %v2772 = vpop.f32.mrf.mxu0
  %v2773 = vadd.f32 %v2660, %v2772
  %2774 = vmatmul.f32.gmra.mxu0 %v1932
  %v2775 = vpop.f32.mrf.mxu0
  %v2776 = vadd.f32 %v2663, %v2775
  %2777 = vmatmul.f32.gmra.mxu0 %v1948
  %v2778 = vpop.f32.mrf.mxu0
  %v2779 = vadd.f32 %v2666, %v2778
  %2780 = vdwg.mxu0
  %2781 = vmatpush.msra.mxu0 %v805
  %2782 = vmatpush.msra.mxu0 %v804
  %2783 = vmatpush.msra.mxu0 %v803
  %2784 = vmatpush.msra.mxu0 %v802
  %2785 = vmatpush.msra.mxu0 %v801
  %2786 = vmatpush.msra.mxu0 %v800
  %2787 = vmatpush.msra.mxu0 %v799
  %2788 = vmatpush.msra.mxu0 %v798
  %2789 = vmatpush.msra.mxu0 %v797
  %2790 = vmatpush.msra.mxu0 %v796
  %2791 = vmatpush.msra.mxu0 %v795
  %2792 = vmatpush.msra.mxu0 %v794
  %2793 = vmatpush.msra.mxu0 %v793
  %2794 = vmatpush.msra.mxu0 %v792
  %2795 = vmatpush.msra.mxu0 %v791
  %2796 = vmatpush.msra.mxu0 %v790
  %2797 = vmatmul.f32.gmra.mxu0 %v1453
  %v2798 = vpop.f32.mrf.mxu0
  %v2799 = vadd.f32 %v2686, %v2798
  %2800 = vmatmul.f32.gmra.mxu0 %v1469
  %v2801 = vpop.f32.mrf.mxu0
  %v2802 = vadd.f32 %v2689, %v2801
  %2803 = vmatmul.f32.gmra.mxu0 %v1485
  %v2804 = vpop.f32.mrf.mxu0
  %v2805 = vadd.f32 %v2692, %v2804
  %2806 = vmatmul.f32.gmra.mxu0 %v1501
  %v2807 = vpop.f32.mrf.mxu0
  %v2808 = vadd.f32 %v2695, %v2807
  %2809 = vmatmul.f32.gmra.mxu0 %v1517
  %v2810 = vpop.f32.mrf.mxu0
  %v2811 = vadd.f32 %v2698, %v2810
  %2812 = vmatmul.f32.gmra.mxu0 %v1533
  %v2813 = vpop.f32.mrf.mxu0
  %v2814 = vadd.f32 %v2701, %v2813
  %2815 = vmatmul.f32.gmra.mxu0 %v1549
  %v2816 = vpop.f32.mrf.mxu0
  %v2817 = vadd.f32 %v2704, %v2816
  %2818 = vmatmul.f32.gmra.mxu0 %v1565
  %v2819 = vpop.f32.mrf.mxu0
  %v2820 = vadd.f32 %v2707, %v2819
  %2821 = vmatmul.f32.gmra.mxu0 %v1581
  %v2822 = vpop.f32.mrf.mxu0
  %v2823 = vadd.f32 %v2710, %v2822
  %2824 = vmatmul.f32.gmra.mxu0 %v1597
  %v2825 = vpop.f32.mrf.mxu0
  %v2826 = vadd.f32 %v2713, %v2825
  %2827 = vmatmul.f32.gmra.mxu0 %v1613
  %v2828 = vpop.f32.mrf.mxu0
  %v2829 = vadd.f32 %v2716, %v2828
  %2830 = vmatmul.f32.gmra.mxu0 %v1629
  %v2831 = vpop.f32.mrf.mxu0
  %v2832 = vadd.f32 %v2719, %v2831
  %2833 = vmatmul.f32.gmra.mxu0 %v1645
  %v2834 = vpop.f32.mrf.mxu0
  %v2835 = vadd.f32 %v2722, %v2834
  %2836 = vmatmul.f32.gmra.mxu0 %v1661
  %v2837 = vpop.f32.mrf.mxu0
  %v2838 = vadd.f32 %v2725, %v2837
  %2839 = vmatmul.f32.gmra.mxu0 %v1677
  %v2840 = vpop.f32.mrf.mxu0
  %v2841 = vadd.f32 %v2728, %v2840
  %2842 = vmatmul.f32.gmra.mxu0 %v1693
  %v2843 = vpop.f32.mrf.mxu0
  %v2844 = vadd.f32 %v2731, %v2843
  %2845 = vmatmul.f32.gmra.mxu0 %v1709
  %v2846 = vpop.f32.mrf.mxu0
  %v2847 = vadd.f32 %v2734, %v2846
  %2848 = vmatmul.f32.gmra.mxu0 %v1725
  %v2849 = vpop.f32.mrf.mxu0
  %v2850 = vadd.f32 %v2737, %v2849
  %2851 = vmatmul.f32.gmra.mxu0 %v1741
  %v2852 = vpop.f32.mrf.mxu0
  %v2853 = vadd.f32 %v2740, %v2852
  %2854 = vmatmul.f32.gmra.mxu0 %v1757
  %v2855 = vpop.f32.mrf.mxu0
  %v2856 = vadd.f32 %v2743, %v2855
  %2857 = vmatmul.f32.gmra.mxu0 %v1773
  %v2858 = vpop.f32.mrf.mxu0
  %v2859 = vadd.f32 %v2746, %v2858
  %2860 = vmatmul.f32.gmra.mxu0 %v1789
  %v2861 = vpop.f32.mrf.mxu0
  %v2862 = vadd.f32 %v2749, %v2861
  %2863 = vmatmul.f32.gmra.mxu0 %v1805
  %v2864 = vpop.f32.mrf.mxu0
  %v2865 = vadd.f32 %v2752, %v2864
  %2866 = vmatmul.f32.gmra.mxu0 %v1821
  %v2867 = vpop.f32.mrf.mxu0
  %v2868 = vadd.f32 %v2755, %v2867
  %2869 = vmatmul.f32.gmra.mxu0 %v1837
  %v2870 = vpop.f32.mrf.mxu0
  %v2871 = vadd.f32 %v2758, %v2870
  %2872 = vmatmul.f32.gmra.mxu0 %v1853
  %v2873 = vpop.f32.mrf.mxu0
  %v2874 = vadd.f32 %v2761, %v2873
  %2875 = vmatmul.f32.gmra.mxu0 %v1869
  %v2876 = vpop.f32.mrf.mxu0
  %v2877 = vadd.f32 %v2764, %v2876
  %2878 = vmatmul.f32.gmra.mxu0 %v1885
  %v2879 = vpop.f32.mrf.mxu0
  %v2880 = vadd.f32 %v2767, %v2879
  %2881 = vmatmul.f32.gmra.mxu0 %v1901
  %v2882 = vpop.f32.mrf.mxu0
  %v2883 = vadd.f32 %v2770, %v2882
  %2884 = vmatmul.f32.gmra.mxu0 %v1917
  %v2885 = vpop.f32.mrf.mxu0
  %v2886 = vadd.f32 %v2773, %v2885
  %2887 = vmatmul.f32.gmra.mxu0 %v1933
  %v2888 = vpop.f32.mrf.mxu0
  %v2889 = vadd.f32 %v2776, %v2888
  %2890 = vmatmul.f32.gmra.mxu0 %v1949
  %v2891 = vpop.f32.mrf.mxu0
  %v2892 = vadd.f32 %v2779, %v2891
  %2893 = vdwg.mxu0
  %2894 = vmatpush.msra.mxu0 %v821
  %2895 = vmatpush.msra.mxu0 %v820
  %2896 = vmatpush.msra.mxu0 %v819
  %2897 = vmatpush.msra.mxu0 %v818
  %2898 = vmatpush.msra.mxu0 %v817
  %2899 = vmatpush.msra.mxu0 %v816
  %2900 = vmatpush.msra.mxu0 %v815
  %2901 = vmatpush.msra.mxu0 %v814
  %2902 = vmatpush.msra.mxu0 %v813
  %2903 = vmatpush.msra.mxu0 %v812
  %2904 = vmatpush.msra.mxu0 %v811
  %2905 = vmatpush.msra.mxu0 %v810
  %2906 = vmatpush.msra.mxu0 %v809
  %2907 = vmatpush.msra.mxu0 %v808
  %2908 = vmatpush.msra.mxu0 %v807
  %2909 = vmatpush.msra.mxu0 %v806
  %2910 = vmatmul.f32.gmra.mxu0 %v1454
  %v2911 = vpop.f32.mrf.mxu0
  %v2912 = vadd.f32 %v2799, %v2911
  %2913 = vmatmul.f32.gmra.mxu0 %v1470
  %v2914 = vpop.f32.mrf.mxu0
  %v2915 = vadd.f32 %v2802, %v2914
  %2916 = vmatmul.f32.gmra.mxu0 %v1486
  %v2917 = vpop.f32.mrf.mxu0
  %v2918 = vadd.f32 %v2805, %v2917
  %2919 = vmatmul.f32.gmra.mxu0 %v1502
  %v2920 = vpop.f32.mrf.mxu0
  %v2921 = vadd.f32 %v2808, %v2920
  %2922 = vmatmul.f32.gmra.mxu0 %v1518
  %v2923 = vpop.f32.mrf.mxu0
  %v2924 = vadd.f32 %v2811, %v2923
  %2925 = vmatmul.f32.gmra.mxu0 %v1534
  %v2926 = vpop.f32.mrf.mxu0
  %v2927 = vadd.f32 %v2814, %v2926
  %2928 = vmatmul.f32.gmra.mxu0 %v1550
  %v2929 = vpop.f32.mrf.mxu0
  %v2930 = vadd.f32 %v2817, %v2929
  %2931 = vmatmul.f32.gmra.mxu0 %v1566
  %v2932 = vpop.f32.mrf.mxu0
  %v2933 = vadd.f32 %v2820, %v2932
  %2934 = vmatmul.f32.gmra.mxu0 %v1582
  %v2935 = vpop.f32.mrf.mxu0
  %v2936 = vadd.f32 %v2823, %v2935
  %2937 = vmatmul.f32.gmra.mxu0 %v1598
  %v2938 = vpop.f32.mrf.mxu0
  %v2939 = vadd.f32 %v2826, %v2938
  %2940 = vmatmul.f32.gmra.mxu0 %v1614
  %v2941 = vpop.f32.mrf.mxu0
  %v2942 = vadd.f32 %v2829, %v2941
  %2943 = vmatmul.f32.gmra.mxu0 %v1630
  %v2944 = vpop.f32.mrf.mxu0
  %v2945 = vadd.f32 %v2832, %v2944
  %2946 = vmatmul.f32.gmra.mxu0 %v1646
  %v2947 = vpop.f32.mrf.mxu0
  %v2948 = vadd.f32 %v2835, %v2947
  %2949 = vmatmul.f32.gmra.mxu0 %v1662
  %v2950 = vpop.f32.mrf.mxu0
  %v2951 = vadd.f32 %v2838, %v2950
  %2952 = vmatmul.f32.gmra.mxu0 %v1678
  %v2953 = vpop.f32.mrf.mxu0
  %v2954 = vadd.f32 %v2841, %v2953
  %2955 = vmatmul.f32.gmra.mxu0 %v1694
  %v2956 = vpop.f32.mrf.mxu0
  %v2957 = vadd.f32 %v2844, %v2956
  %2958 = vmatmul.f32.gmra.mxu0 %v1710
  %v2959 = vpop.f32.mrf.mxu0
  %v2960 = vadd.f32 %v2847, %v2959
  %2961 = vmatmul.f32.gmra.mxu0 %v1726
  %v2962 = vpop.f32.mrf.mxu0
  %v2963 = vadd.f32 %v2850, %v2962
  %2964 = vmatmul.f32.gmra.mxu0 %v1742
  %v2965 = vpop.f32.mrf.mxu0
  %v2966 = vadd.f32 %v2853, %v2965
  %2967 = vmatmul.f32.gmra.mxu0 %v1758
  %v2968 = vpop.f32.mrf.mxu0
  %v2969 = vadd.f32 %v2856, %v2968
  %2970 = vmatmul.f32.gmra.mxu0 %v1774
  %v2971 = vpop.f32.mrf.mxu0
  %v2972 = vadd.f32 %v2859, %v2971
  %2973 = vmatmul.f32.gmra.mxu0 %v1790
  %v2974 = vpop.f32.mrf.mxu0
  %v2975 = vadd.f32 %v2862, %v2974
  %2976 = vmatmul.f32.gmra.mxu0 %v1806
  %v2977 = vpop.f32.mrf.mxu0
  %v2978 = vadd.f32 %v2865, %v2977
  %2979 = vmatmul.f32.gmra.mxu0 %v1822
  %v2980 = vpop.f32.mrf.mxu0
  %v2981 = vadd.f32 %v2868, %v2980
  %2982 = vmatmul.f32.gmra.mxu0 %v1838
  %v2983 = vpop.f32.mrf.mxu0
  %v2984 = vadd.f32 %v2871, %v2983
  %2985 = vmatmul.f32.gmra.mxu0 %v1854
  %v2986 = vpop.f32.mrf.mxu0
  %v2987 = vadd.f32 %v2874, %v2986
  %2988 = vmatmul.f32.gmra.mxu0 %v1870
  %v2989 = vpop.f32.mrf.mxu0
  %v2990 = vadd.f32 %v2877, %v2989
  %2991 = vmatmul.f32.gmra.mxu0 %v1886
  %v2992 = vpop.f32.mrf.mxu0
  %v2993 = vadd.f32 %v2880, %v2992
  %2994 = vmatmul.f32.gmra.mxu0 %v1902
  %v2995 = vpop.f32.mrf.mxu0
  %v2996 = vadd.f32 %v2883, %v2995
  %2997 = vmatmul.f32.gmra.mxu0 %v1918
  %v2998 = vpop.f32.mrf.mxu0
  %v2999 = vadd.f32 %v2886, %v2998
  %3000 = vmatmul.f32.gmra.mxu0 %v1934
  %v3001 = vpop.f32.mrf.mxu0
  %v3002 = vadd.f32 %v2889, %v3001
  %3003 = vmatmul.f32.gmra.mxu0 %v1950
  %v3004 = vpop.f32.mrf.mxu0
  %v3005 = vadd.f32 %v2892, %v3004
  %3006 = vdwg.mxu0
  %3007 = vmatpush.msra.mxu0 %v837
  %3008 = vmatpush.msra.mxu0 %v836
  %3009 = vmatpush.msra.mxu0 %v835
  %3010 = vmatpush.msra.mxu0 %v834
  %3011 = vmatpush.msra.mxu0 %v833
  %3012 = vmatpush.msra.mxu0 %v832
  %3013 = vmatpush.msra.mxu0 %v831
  %3014 = vmatpush.msra.mxu0 %v830
  %3015 = vmatpush.msra.mxu0 %v829
  %3016 = vmatpush.msra.mxu0 %v828
  %3017 = vmatpush.msra.mxu0 %v827
  %3018 = vmatpush.msra.mxu0 %v826
  %3019 = vmatpush.msra.mxu0 %v825
  %3020 = vmatpush.msra.mxu0 %v824
  %3021 = vmatpush.msra.mxu0 %v823
  %3022 = vmatpush.msra.mxu0 %v822
  %3023 = vmatmul.f32.gmra.mxu0 %v1455
  %v3024 = vpop.f32.mrf.mxu0
  %v3025 = vadd.f32 %v2912, %v3024
  %3026 = vmatmul.f32.gmra.mxu0 %v1471
  %v3027 = vpop.f32.mrf.mxu0
  %v3028 = vadd.f32 %v2915, %v3027
  %3029 = vmatmul.f32.gmra.mxu0 %v1487
  %v3030 = vpop.f32.mrf.mxu0
  %v3031 = vadd.f32 %v2918, %v3030
  %3032 = vmatmul.f32.gmra.mxu0 %v1503
  %v3033 = vpop.f32.mrf.mxu0
  %v3034 = vadd.f32 %v2921, %v3033
  %3035 = vmatmul.f32.gmra.mxu0 %v1519
  %v3036 = vpop.f32.mrf.mxu0
  %v3037 = vadd.f32 %v2924, %v3036
  %3038 = vmatmul.f32.gmra.mxu0 %v1535
  %v3039 = vpop.f32.mrf.mxu0
  %v3040 = vadd.f32 %v2927, %v3039
  %3041 = vmatmul.f32.gmra.mxu0 %v1551
  %v3042 = vpop.f32.mrf.mxu0
  %v3043 = vadd.f32 %v2930, %v3042
  %3044 = vmatmul.f32.gmra.mxu0 %v1567
  %v3045 = vpop.f32.mrf.mxu0
  %v3046 = vadd.f32 %v2933, %v3045
  %3047 = vmatmul.f32.gmra.mxu0 %v1583
  %v3048 = vpop.f32.mrf.mxu0
  %v3049 = vadd.f32 %v2936, %v3048
  %3050 = vmatmul.f32.gmra.mxu0 %v1599
  %v3051 = vpop.f32.mrf.mxu0
  %v3052 = vadd.f32 %v2939, %v3051
  %3053 = vmatmul.f32.gmra.mxu0 %v1615
  %v3054 = vpop.f32.mrf.mxu0
  %v3055 = vadd.f32 %v2942, %v3054
  %3056 = vmatmul.f32.gmra.mxu0 %v1631
  %v3057 = vpop.f32.mrf.mxu0
  %v3058 = vadd.f32 %v2945, %v3057
  %3059 = vmatmul.f32.gmra.mxu0 %v1647
  %v3060 = vpop.f32.mrf.mxu0
  %v3061 = vadd.f32 %v2948, %v3060
  %3062 = vmatmul.f32.gmra.mxu0 %v1663
  %v3063 = vpop.f32.mrf.mxu0
  %v3064 = vadd.f32 %v2951, %v3063
  %3065 = vmatmul.f32.gmra.mxu0 %v1679
  %v3066 = vpop.f32.mrf.mxu0
  %v3067 = vadd.f32 %v2954, %v3066
  %3068 = vmatmul.f32.gmra.mxu0 %v1695
  %v3069 = vpop.f32.mrf.mxu0
  %v3070 = vadd.f32 %v2957, %v3069
  %3071 = vmatmul.f32.gmra.mxu0 %v1711
  %v3072 = vpop.f32.mrf.mxu0
  %v3073 = vadd.f32 %v2960, %v3072
  %3074 = vmatmul.f32.gmra.mxu0 %v1727
  %v3075 = vpop.f32.mrf.mxu0
  %v3076 = vadd.f32 %v2963, %v3075
  %3077 = vmatmul.f32.gmra.mxu0 %v1743
  %v3078 = vpop.f32.mrf.mxu0
  %v3079 = vadd.f32 %v2966, %v3078
  %3080 = vmatmul.f32.gmra.mxu0 %v1759
  %v3081 = vpop.f32.mrf.mxu0
  %v3082 = vadd.f32 %v2969, %v3081
  %3083 = vmatmul.f32.gmra.mxu0 %v1775
  %v3084 = vpop.f32.mrf.mxu0
  %v3085 = vadd.f32 %v2972, %v3084
  %3086 = vmatmul.f32.gmra.mxu0 %v1791
  %v3087 = vpop.f32.mrf.mxu0
  %v3088 = vadd.f32 %v2975, %v3087
  %3089 = vmatmul.f32.gmra.mxu0 %v1807
  %v3090 = vpop.f32.mrf.mxu0
  %v3091 = vadd.f32 %v2978, %v3090
  %3092 = vmatmul.f32.gmra.mxu0 %v1823
  %v3093 = vpop.f32.mrf.mxu0
  %v3094 = vadd.f32 %v2981, %v3093
  %3095 = vmatmul.f32.gmra.mxu0 %v1839
  %v3096 = vpop.f32.mrf.mxu0
  %v3097 = vadd.f32 %v2984, %v3096
  %3098 = vmatmul.f32.gmra.mxu0 %v1855
  %v3099 = vpop.f32.mrf.mxu0
  %v3100 = vadd.f32 %v2987, %v3099
  %3101 = vmatmul.f32.gmra.mxu0 %v1871
  %v3102 = vpop.f32.mrf.mxu0
  %v3103 = vadd.f32 %v2990, %v3102
  %3104 = vmatmul.f32.gmra.mxu0 %v1887
  %v3105 = vpop.f32.mrf.mxu0
  %v3106 = vadd.f32 %v2993, %v3105
  %3107 = vmatmul.f32.gmra.mxu0 %v1903
  %v3108 = vpop.f32.mrf.mxu0
  %v3109 = vadd.f32 %v2996, %v3108
  %3110 = vmatmul.f32.gmra.mxu0 %v1919
  %v3111 = vpop.f32.mrf.mxu0
  %v3112 = vadd.f32 %v2999, %v3111
  %3113 = vmatmul.f32.gmra.mxu0 %v1935
  %v3114 = vpop.f32.mrf.mxu0
  %v3115 = vadd.f32 %v3002, %v3114
  %3116 = vmatmul.f32.gmra.mxu0 %v1951
  %v3117 = vpop.f32.mrf.mxu0
  %v3118 = vadd.f32 %v3005, %v3117
  %3119 = vdwg.mxu0
  %3120 = vmatpush.msra.mxu0 %v853
  %3121 = vmatpush.msra.mxu0 %v852
  %3122 = vmatpush.msra.mxu0 %v851
  %3123 = vmatpush.msra.mxu0 %v850
  %3124 = vmatpush.msra.mxu0 %v849
  %3125 = vmatpush.msra.mxu0 %v848
  %3126 = vmatpush.msra.mxu0 %v847
  %3127 = vmatpush.msra.mxu0 %v846
  %3128 = vmatpush.msra.mxu0 %v845
  %3129 = vmatpush.msra.mxu0 %v844
  %3130 = vmatpush.msra.mxu0 %v843
  %3131 = vmatpush.msra.mxu0 %v842
  %3132 = vmatpush.msra.mxu0 %v841
  %3133 = vmatpush.msra.mxu0 %v840
  %3134 = vmatpush.msra.mxu0 %v839
  %3135 = vmatpush.msra.mxu0 %v838
  %3136 = vmatmul.f32.gmra.mxu0 %v1456
  %v3137 = vpop.f32.mrf.mxu0
  %v3138 = vadd.f32 %v3025, %v3137
  %3139 = vmatmul.f32.gmra.mxu0 %v1472
  %v3140 = vpop.f32.mrf.mxu0
  %v3141 = vadd.f32 %v3028, %v3140
  %3142 = vmatmul.f32.gmra.mxu0 %v1488
  %v3143 = vpop.f32.mrf.mxu0
  %v3144 = vadd.f32 %v3031, %v3143
  %3145 = vmatmul.f32.gmra.mxu0 %v1504
  %v3146 = vpop.f32.mrf.mxu0
  %v3147 = vadd.f32 %v3034, %v3146
  %3148 = vmatmul.f32.gmra.mxu0 %v1520
  %v3149 = vpop.f32.mrf.mxu0
  %v3150 = vadd.f32 %v3037, %v3149
  %3151 = vmatmul.f32.gmra.mxu0 %v1536
  %v3152 = vpop.f32.mrf.mxu0
  %v3153 = vadd.f32 %v3040, %v3152
  %3154 = vmatmul.f32.gmra.mxu0 %v1552
  %v3155 = vpop.f32.mrf.mxu0
  %v3156 = vadd.f32 %v3043, %v3155
  %3157 = vmatmul.f32.gmra.mxu0 %v1568
  %v3158 = vpop.f32.mrf.mxu0
  %v3159 = vadd.f32 %v3046, %v3158
  %3160 = vmatmul.f32.gmra.mxu0 %v1584
  %v3161 = vpop.f32.mrf.mxu0
  %v3162 = vadd.f32 %v3049, %v3161
  %3163 = vmatmul.f32.gmra.mxu0 %v1600
  %v3164 = vpop.f32.mrf.mxu0
  %v3165 = vadd.f32 %v3052, %v3164
  %3166 = vmatmul.f32.gmra.mxu0 %v1616
  %v3167 = vpop.f32.mrf.mxu0
  %v3168 = vadd.f32 %v3055, %v3167
  %3169 = vmatmul.f32.gmra.mxu0 %v1632
  %v3170 = vpop.f32.mrf.mxu0
  %v3171 = vadd.f32 %v3058, %v3170
  %3172 = vmatmul.f32.gmra.mxu0 %v1648
  %v3173 = vpop.f32.mrf.mxu0
  %v3174 = vadd.f32 %v3061, %v3173
  %3175 = vmatmul.f32.gmra.mxu0 %v1664
  %v3176 = vpop.f32.mrf.mxu0
  %v3177 = vadd.f32 %v3064, %v3176
  %3178 = vmatmul.f32.gmra.mxu0 %v1680
  %v3179 = vpop.f32.mrf.mxu0
  %v3180 = vadd.f32 %v3067, %v3179
  %3181 = vmatmul.f32.gmra.mxu0 %v1696
  %v3182 = vpop.f32.mrf.mxu0
  %v3183 = vadd.f32 %v3070, %v3182
  %3184 = vmatmul.f32.gmra.mxu0 %v1712
  %v3185 = vpop.f32.mrf.mxu0
  %v3186 = vadd.f32 %v3073, %v3185
  %3187 = vmatmul.f32.gmra.mxu0 %v1728
  %v3188 = vpop.f32.mrf.mxu0
  %v3189 = vadd.f32 %v3076, %v3188
  %3190 = vmatmul.f32.gmra.mxu0 %v1744
  %v3191 = vpop.f32.mrf.mxu0
  %v3192 = vadd.f32 %v3079, %v3191
  %3193 = vmatmul.f32.gmra.mxu0 %v1760
  %v3194 = vpop.f32.mrf.mxu0
  %v3195 = vadd.f32 %v3082, %v3194
  %3196 = vmatmul.f32.gmra.mxu0 %v1776
  %v3197 = vpop.f32.mrf.mxu0
  %v3198 = vadd.f32 %v3085, %v3197
  %3199 = vmatmul.f32.gmra.mxu0 %v1792
  %v3200 = vpop.f32.mrf.mxu0
  %v3201 = vadd.f32 %v3088, %v3200
  %3202 = vmatmul.f32.gmra.mxu0 %v1808
  %v3203 = vpop.f32.mrf.mxu0
  %v3204 = vadd.f32 %v3091, %v3203
  %3205 = vmatmul.f32.gmra.mxu0 %v1824
  %v3206 = vpop.f32.mrf.mxu0
  %v3207 = vadd.f32 %v3094, %v3206
  %3208 = vmatmul.f32.gmra.mxu0 %v1840
  %v3209 = vpop.f32.mrf.mxu0
  %v3210 = vadd.f32 %v3097, %v3209
  %3211 = vmatmul.f32.gmra.mxu0 %v1856
  %v3212 = vpop.f32.mrf.mxu0
  %v3213 = vadd.f32 %v3100, %v3212
  %3214 = vmatmul.f32.gmra.mxu0 %v1872
  %v3215 = vpop.f32.mrf.mxu0
  %v3216 = vadd.f32 %v3103, %v3215
  %3217 = vmatmul.f32.gmra.mxu0 %v1888
  %v3218 = vpop.f32.mrf.mxu0
  %v3219 = vadd.f32 %v3106, %v3218
  %3220 = vmatmul.f32.gmra.mxu0 %v1904
  %v3221 = vpop.f32.mrf.mxu0
  %v3222 = vadd.f32 %v3109, %v3221
  %3223 = vmatmul.f32.gmra.mxu0 %v1920
  %v3224 = vpop.f32.mrf.mxu0
  %v3225 = vadd.f32 %v3112, %v3224
  %3226 = vmatmul.f32.gmra.mxu0 %v1936
  %v3227 = vpop.f32.mrf.mxu0
  %v3228 = vadd.f32 %v3115, %v3227
  %3229 = vmatmul.f32.gmra.mxu0 %v1952
  %v3230 = vpop.f32.mrf.mxu0
  %v3231 = vadd.f32 %v3118, %v3230
  %3232 = vdwg.mxu0
  %3233 = vmatpush.msra.mxu0 %v869
  %3234 = vmatpush.msra.mxu0 %v868
  %3235 = vmatpush.msra.mxu0 %v867
  %3236 = vmatpush.msra.mxu0 %v866
  %3237 = vmatpush.msra.mxu0 %v865
  %3238 = vmatpush.msra.mxu0 %v864
  %3239 = vmatpush.msra.mxu0 %v863
  %3240 = vmatpush.msra.mxu0 %v862
  %3241 = vmatpush.msra.mxu0 %v861
  %3242 = vmatpush.msra.mxu0 %v860
  %3243 = vmatpush.msra.mxu0 %v859
  %3244 = vmatpush.msra.mxu0 %v858
  %3245 = vmatpush.msra.mxu0 %v857
  %3246 = vmatpush.msra.mxu0 %v856
  %3247 = vmatpush.msra.mxu0 %v855
  %3248 = vmatpush.msra.mxu0 %v854
  %3249 = vmatmul.f32.gmra.mxu0 %v1457
  %v3250 = vpop.f32.mrf.mxu0
  %v3251 = vadd.f32 %v3138, %v3250
  %3252 = vmatmul.f32.gmra.mxu0 %v1473
  %v3253 = vpop.f32.mrf.mxu0
  %v3254 = vadd.f32 %v3141, %v3253
  %3255 = vmatmul.f32.gmra.mxu0 %v1489
  %v3256 = vpop.f32.mrf.mxu0
  %v3257 = vadd.f32 %v3144, %v3256
  %3258 = vmatmul.f32.gmra.mxu0 %v1505
  %v3259 = vpop.f32.mrf.mxu0
  %v3260 = vadd.f32 %v3147, %v3259
  %3261 = vmatmul.f32.gmra.mxu0 %v1521
  %v3262 = vpop.f32.mrf.mxu0
  %v3263 = vadd.f32 %v3150, %v3262
  %3264 = vmatmul.f32.gmra.mxu0 %v1537
  %v3265 = vpop.f32.mrf.mxu0
  %v3266 = vadd.f32 %v3153, %v3265
  %3267 = vmatmul.f32.gmra.mxu0 %v1553
  %v3268 = vpop.f32.mrf.mxu0
  %v3269 = vadd.f32 %v3156, %v3268
  %3270 = vmatmul.f32.gmra.mxu0 %v1569
  %v3271 = vpop.f32.mrf.mxu0
  %v3272 = vadd.f32 %v3159, %v3271
  %3273 = vmatmul.f32.gmra.mxu0 %v1585
  %v3274 = vpop.f32.mrf.mxu0
  %v3275 = vadd.f32 %v3162, %v3274
  %3276 = vmatmul.f32.gmra.mxu0 %v1601
  %v3277 = vpop.f32.mrf.mxu0
  %v3278 = vadd.f32 %v3165, %v3277
  %3279 = vmatmul.f32.gmra.mxu0 %v1617
  %v3280 = vpop.f32.mrf.mxu0
  %v3281 = vadd.f32 %v3168, %v3280
  %3282 = vmatmul.f32.gmra.mxu0 %v1633
  %v3283 = vpop.f32.mrf.mxu0
  %v3284 = vadd.f32 %v3171, %v3283
  %3285 = vmatmul.f32.gmra.mxu0 %v1649
  %v3286 = vpop.f32.mrf.mxu0
  %v3287 = vadd.f32 %v3174, %v3286
  %3288 = vmatmul.f32.gmra.mxu0 %v1665
  %v3289 = vpop.f32.mrf.mxu0
  %v3290 = vadd.f32 %v3177, %v3289
  %3291 = vmatmul.f32.gmra.mxu0 %v1681
  %v3292 = vpop.f32.mrf.mxu0
  %v3293 = vadd.f32 %v3180, %v3292
  %3294 = vmatmul.f32.gmra.mxu0 %v1697
  %v3295 = vpop.f32.mrf.mxu0
  %v3296 = vadd.f32 %v3183, %v3295
  %3297 = vmatmul.f32.gmra.mxu0 %v1713
  %v3298 = vpop.f32.mrf.mxu0
  %v3299 = vadd.f32 %v3186, %v3298
  %3300 = vmatmul.f32.gmra.mxu0 %v1729
  %v3301 = vpop.f32.mrf.mxu0
  %v3302 = vadd.f32 %v3189, %v3301
  %3303 = vmatmul.f32.gmra.mxu0 %v1745
  %v3304 = vpop.f32.mrf.mxu0
  %v3305 = vadd.f32 %v3192, %v3304
  %3306 = vmatmul.f32.gmra.mxu0 %v1761
  %v3307 = vpop.f32.mrf.mxu0
  %v3308 = vadd.f32 %v3195, %v3307
  %3309 = vmatmul.f32.gmra.mxu0 %v1777
  %v3310 = vpop.f32.mrf.mxu0
  %v3311 = vadd.f32 %v3198, %v3310
  %3312 = vmatmul.f32.gmra.mxu0 %v1793
  %v3313 = vpop.f32.mrf.mxu0
  %v3314 = vadd.f32 %v3201, %v3313
  %3315 = vmatmul.f32.gmra.mxu0 %v1809
  %v3316 = vpop.f32.mrf.mxu0
  %v3317 = vadd.f32 %v3204, %v3316
  %3318 = vmatmul.f32.gmra.mxu0 %v1825
  %v3319 = vpop.f32.mrf.mxu0
  %v3320 = vadd.f32 %v3207, %v3319
  %3321 = vmatmul.f32.gmra.mxu0 %v1841
  %v3322 = vpop.f32.mrf.mxu0
  %v3323 = vadd.f32 %v3210, %v3322
  %3324 = vmatmul.f32.gmra.mxu0 %v1857
  %v3325 = vpop.f32.mrf.mxu0
  %v3326 = vadd.f32 %v3213, %v3325
  %3327 = vmatmul.f32.gmra.mxu0 %v1873
  %v3328 = vpop.f32.mrf.mxu0
  %v3329 = vadd.f32 %v3216, %v3328
  %3330 = vmatmul.f32.gmra.mxu0 %v1889
  %v3331 = vpop.f32.mrf.mxu0
  %v3332 = vadd.f32 %v3219, %v3331
  %3333 = vmatmul.f32.gmra.mxu0 %v1905
  %v3334 = vpop.f32.mrf.mxu0
  %v3335 = vadd.f32 %v3222, %v3334
  %3336 = vmatmul.f32.gmra.mxu0 %v1921
  %v3337 = vpop.f32.mrf.mxu0
  %v3338 = vadd.f32 %v3225, %v3337
  %3339 = vmatmul.f32.gmra.mxu0 %v1937
  %v3340 = vpop.f32.mrf.mxu0
  %v3341 = vadd.f32 %v3228, %v3340
  %3342 = vmatmul.f32.gmra.mxu0 %v1953
  %v3343 = vpop.f32.mrf.mxu0
  %v3344 = vadd.f32 %v3231, %v3343
  %3345 = vdwg.mxu0
  %3346 = vmatpush.msra.mxu0 %v885
  %3347 = vmatpush.msra.mxu0 %v884
  %3348 = vmatpush.msra.mxu0 %v883
  %3349 = vmatpush.msra.mxu0 %v882
  %3350 = vmatpush.msra.mxu0 %v881
  %3351 = vmatpush.msra.mxu0 %v880
  %3352 = vmatpush.msra.mxu0 %v879
  %3353 = vmatpush.msra.mxu0 %v878
  %3354 = vmatpush.msra.mxu0 %v877
  %3355 = vmatpush.msra.mxu0 %v876
  %3356 = vmatpush.msra.mxu0 %v875
  %3357 = vmatpush.msra.mxu0 %v874
  %3358 = vmatpush.msra.mxu0 %v873
  %3359 = vmatpush.msra.mxu0 %v872
  %3360 = vmatpush.msra.mxu0 %v871
  %3361 = vmatpush.msra.mxu0 %v870
  %3362 = vmatmul.f32.gmra.mxu0 %v1458
  %v3363 = vpop.f32.mrf.mxu0
  %v3364 = vadd.f32 %v3251, %v3363
  %3365 = vmatmul.f32.gmra.mxu0 %v1474
  %v3366 = vpop.f32.mrf.mxu0
  %v3367 = vadd.f32 %v3254, %v3366
  %3368 = vmatmul.f32.gmra.mxu0 %v1490
  %v3369 = vpop.f32.mrf.mxu0
  %v3370 = vadd.f32 %v3257, %v3369
  %3371 = vmatmul.f32.gmra.mxu0 %v1506
  %v3372 = vpop.f32.mrf.mxu0
  %v3373 = vadd.f32 %v3260, %v3372
  %3374 = vmatmul.f32.gmra.mxu0 %v1522
  %v3375 = vpop.f32.mrf.mxu0
  %v3376 = vadd.f32 %v3263, %v3375
  %3377 = vmatmul.f32.gmra.mxu0 %v1538
  %v3378 = vpop.f32.mrf.mxu0
  %v3379 = vadd.f32 %v3266, %v3378
  %3380 = vmatmul.f32.gmra.mxu0 %v1554
  %v3381 = vpop.f32.mrf.mxu0
  %v3382 = vadd.f32 %v3269, %v3381
  %3383 = vmatmul.f32.gmra.mxu0 %v1570
  %v3384 = vpop.f32.mrf.mxu0
  %v3385 = vadd.f32 %v3272, %v3384
  %3386 = vmatmul.f32.gmra.mxu0 %v1586
  %v3387 = vpop.f32.mrf.mxu0
  %v3388 = vadd.f32 %v3275, %v3387
  %3389 = vmatmul.f32.gmra.mxu0 %v1602
  %v3390 = vpop.f32.mrf.mxu0
  %v3391 = vadd.f32 %v3278, %v3390
  %3392 = vmatmul.f32.gmra.mxu0 %v1618
  %v3393 = vpop.f32.mrf.mxu0
  %v3394 = vadd.f32 %v3281, %v3393
  %3395 = vmatmul.f32.gmra.mxu0 %v1634
  %v3396 = vpop.f32.mrf.mxu0
  %v3397 = vadd.f32 %v3284, %v3396
  %3398 = vmatmul.f32.gmra.mxu0 %v1650
  %v3399 = vpop.f32.mrf.mxu0
  %v3400 = vadd.f32 %v3287, %v3399
  %3401 = vmatmul.f32.gmra.mxu0 %v1666
  %v3402 = vpop.f32.mrf.mxu0
  %v3403 = vadd.f32 %v3290, %v3402
  %3404 = vmatmul.f32.gmra.mxu0 %v1682
  %v3405 = vpop.f32.mrf.mxu0
  %v3406 = vadd.f32 %v3293, %v3405
  %3407 = vmatmul.f32.gmra.mxu0 %v1698
  %v3408 = vpop.f32.mrf.mxu0
  %v3409 = vadd.f32 %v3296, %v3408
  %3410 = vmatmul.f32.gmra.mxu0 %v1714
  %v3411 = vpop.f32.mrf.mxu0
  %v3412 = vadd.f32 %v3299, %v3411
  %3413 = vmatmul.f32.gmra.mxu0 %v1730
  %v3414 = vpop.f32.mrf.mxu0
  %v3415 = vadd.f32 %v3302, %v3414
  %3416 = vmatmul.f32.gmra.mxu0 %v1746
  %v3417 = vpop.f32.mrf.mxu0
  %v3418 = vadd.f32 %v3305, %v3417
  %3419 = vmatmul.f32.gmra.mxu0 %v1762
  %v3420 = vpop.f32.mrf.mxu0
  %v3421 = vadd.f32 %v3308, %v3420
  %3422 = vmatmul.f32.gmra.mxu0 %v1778
  %v3423 = vpop.f32.mrf.mxu0
  %v3424 = vadd.f32 %v3311, %v3423
  %3425 = vmatmul.f32.gmra.mxu0 %v1794
  %v3426 = vpop.f32.mrf.mxu0
  %v3427 = vadd.f32 %v3314, %v3426
  %3428 = vmatmul.f32.gmra.mxu0 %v1810
  %v3429 = vpop.f32.mrf.mxu0
  %v3430 = vadd.f32 %v3317, %v3429
  %3431 = vmatmul.f32.gmra.mxu0 %v1826
  %v3432 = vpop.f32.mrf.mxu0
  %v3433 = vadd.f32 %v3320, %v3432
  %3434 = vmatmul.f32.gmra.mxu0 %v1842
  %v3435 = vpop.f32.mrf.mxu0
  %v3436 = vadd.f32 %v3323, %v3435
  %3437 = vmatmul.f32.gmra.mxu0 %v1858
  %v3438 = vpop.f32.mrf.mxu0
  %v3439 = vadd.f32 %v3326, %v3438
  %3440 = vmatmul.f32.gmra.mxu0 %v1874
  %v3441 = vpop.f32.mrf.mxu0
  %v3442 = vadd.f32 %v3329, %v3441
  %3443 = vmatmul.f32.gmra.mxu0 %v1890
  %v3444 = vpop.f32.mrf.mxu0
  %v3445 = vadd.f32 %v3332, %v3444
  %3446 = vmatmul.f32.gmra.mxu0 %v1906
  %v3447 = vpop.f32.mrf.mxu0
  %v3448 = vadd.f32 %v3335, %v3447
  %3449 = vmatmul.f32.gmra.mxu0 %v1922
  %v3450 = vpop.f32.mrf.mxu0
  %v3451 = vadd.f32 %v3338, %v3450
  %3452 = vmatmul.f32.gmra.mxu0 %v1938
  %v3453 = vpop.f32.mrf.mxu0
  %v3454 = vadd.f32 %v3341, %v3453
  %3455 = vmatmul.f32.gmra.mxu0 %v1954
  %v3456 = vpop.f32.mrf.mxu0
  %v3457 = vadd.f32 %v3344, %v3456
  %3458 = vdwg.mxu0
  %3459 = vmatpush.msra.mxu0 %v901
  %3460 = vmatpush.msra.mxu0 %v900
  %3461 = vmatpush.msra.mxu0 %v899
  %3462 = vmatpush.msra.mxu0 %v898
  %3463 = vmatpush.msra.mxu0 %v897
  %3464 = vmatpush.msra.mxu0 %v896
  %3465 = vmatpush.msra.mxu0 %v895
  %3466 = vmatpush.msra.mxu0 %v894
  %3467 = vmatpush.msra.mxu0 %v893
  %3468 = vmatpush.msra.mxu0 %v892
  %3469 = vmatpush.msra.mxu0 %v891
  %3470 = vmatpush.msra.mxu0 %v890
  %3471 = vmatpush.msra.mxu0 %v889
  %3472 = vmatpush.msra.mxu0 %v888
  %3473 = vmatpush.msra.mxu0 %v887
  %3474 = vmatpush.msra.mxu0 %v886
  %3475 = vmatmul.f32.gmra.mxu0 %v1459
  %v3476 = vpop.f32.mrf.mxu0
  %v3477 = vadd.f32 %v3364, %v3476
  %3478 = vmatmul.f32.gmra.mxu0 %v1475
  %v3479 = vpop.f32.mrf.mxu0
  %v3480 = vadd.f32 %v3367, %v3479
  %3481 = vmatmul.f32.gmra.mxu0 %v1491
  %v3482 = vpop.f32.mrf.mxu0
  %v3483 = vadd.f32 %v3370, %v3482
  %3484 = vmatmul.f32.gmra.mxu0 %v1507
  %v3485 = vpop.f32.mrf.mxu0
  %v3486 = vadd.f32 %v3373, %v3485
  %3487 = vmatmul.f32.gmra.mxu0 %v1523
  %v3488 = vpop.f32.mrf.mxu0
  %v3489 = vadd.f32 %v3376, %v3488
  %3490 = vmatmul.f32.gmra.mxu0 %v1539
  %v3491 = vpop.f32.mrf.mxu0
  %v3492 = vadd.f32 %v3379, %v3491
  %3493 = vmatmul.f32.gmra.mxu0 %v1555
  %v3494 = vpop.f32.mrf.mxu0
  %v3495 = vadd.f32 %v3382, %v3494
  %3496 = vmatmul.f32.gmra.mxu0 %v1571
  %v3497 = vpop.f32.mrf.mxu0
  %v3498 = vadd.f32 %v3385, %v3497
  %3499 = vmatmul.f32.gmra.mxu0 %v1587
  %v3500 = vpop.f32.mrf.mxu0
  %v3501 = vadd.f32 %v3388, %v3500
  %3502 = vmatmul.f32.gmra.mxu0 %v1603
  %v3503 = vpop.f32.mrf.mxu0
  %v3504 = vadd.f32 %v3391, %v3503
  %3505 = vmatmul.f32.gmra.mxu0 %v1619
  %v3506 = vpop.f32.mrf.mxu0
  %v3507 = vadd.f32 %v3394, %v3506
  %3508 = vmatmul.f32.gmra.mxu0 %v1635
  %v3509 = vpop.f32.mrf.mxu0
  %v3510 = vadd.f32 %v3397, %v3509
  %3511 = vmatmul.f32.gmra.mxu0 %v1651
  %v3512 = vpop.f32.mrf.mxu0
  %v3513 = vadd.f32 %v3400, %v3512
  %3514 = vmatmul.f32.gmra.mxu0 %v1667
  %v3515 = vpop.f32.mrf.mxu0
  %v3516 = vadd.f32 %v3403, %v3515
  %3517 = vmatmul.f32.gmra.mxu0 %v1683
  %v3518 = vpop.f32.mrf.mxu0
  %v3519 = vadd.f32 %v3406, %v3518
  %3520 = vmatmul.f32.gmra.mxu0 %v1699
  %v3521 = vpop.f32.mrf.mxu0
  %v3522 = vadd.f32 %v3409, %v3521
  %3523 = vmatmul.f32.gmra.mxu0 %v1715
  %v3524 = vpop.f32.mrf.mxu0
  %v3525 = vadd.f32 %v3412, %v3524
  %3526 = vmatmul.f32.gmra.mxu0 %v1731
  %v3527 = vpop.f32.mrf.mxu0
  %v3528 = vadd.f32 %v3415, %v3527
  %3529 = vmatmul.f32.gmra.mxu0 %v1747
  %v3530 = vpop.f32.mrf.mxu0
  %v3531 = vadd.f32 %v3418, %v3530
  %3532 = vmatmul.f32.gmra.mxu0 %v1763
  %v3533 = vpop.f32.mrf.mxu0
  %v3534 = vadd.f32 %v3421, %v3533
  %3535 = vmatmul.f32.gmra.mxu0 %v1779
  %v3536 = vpop.f32.mrf.mxu0
  %v3537 = vadd.f32 %v3424, %v3536
  %3538 = vmatmul.f32.gmra.mxu0 %v1795
  %v3539 = vpop.f32.mrf.mxu0
  %v3540 = vadd.f32 %v3427, %v3539
  %3541 = vmatmul.f32.gmra.mxu0 %v1811
  %v3542 = vpop.f32.mrf.mxu0
  %v3543 = vadd.f32 %v3430, %v3542
  %3544 = vmatmul.f32.gmra.mxu0 %v1827
  %v3545 = vpop.f32.mrf.mxu0
  %v3546 = vadd.f32 %v3433, %v3545
  %3547 = vmatmul.f32.gmra.mxu0 %v1843
  %v3548 = vpop.f32.mrf.mxu0
  %v3549 = vadd.f32 %v3436, %v3548
  %3550 = vmatmul.f32.gmra.mxu0 %v1859
  %v3551 = vpop.f32.mrf.mxu0
  %v3552 = vadd.f32 %v3439, %v3551
  %3553 = vmatmul.f32.gmra.mxu0 %v1875
  %v3554 = vpop.f32.mrf.mxu0
  %v3555 = vadd.f32 %v3442, %v3554
  %3556 = vmatmul.f32.gmra.mxu0 %v1891
  %v3557 = vpop.f32.mrf.mxu0
  %v3558 = vadd.f32 %v3445, %v3557
  %3559 = vmatmul.f32.gmra.mxu0 %v1907
  %v3560 = vpop.f32.mrf.mxu0
  %v3561 = vadd.f32 %v3448, %v3560
  %3562 = vmatmul.f32.gmra.mxu0 %v1923
  %v3563 = vpop.f32.mrf.mxu0
  %v3564 = vadd.f32 %v3451, %v3563
  %3565 = vmatmul.f32.gmra.mxu0 %v1939
  %v3566 = vpop.f32.mrf.mxu0
  %v3567 = vadd.f32 %v3454, %v3566
  %3568 = vmatmul.f32.gmra.mxu0 %v1955
  %v3569 = vpop.f32.mrf.mxu0
  %v3570 = vadd.f32 %v3457, %v3569
  %3571 = vdwg.mxu0
  %3572 = vmatpush.msra.mxu0 %v917
  %3573 = vmatpush.msra.mxu0 %v916
  %3574 = vmatpush.msra.mxu0 %v915
  %3575 = vmatpush.msra.mxu0 %v914
  %3576 = vmatpush.msra.mxu0 %v913
  %3577 = vmatpush.msra.mxu0 %v912
  %3578 = vmatpush.msra.mxu0 %v911
  %3579 = vmatpush.msra.mxu0 %v910
  %3580 = vmatpush.msra.mxu0 %v909
  %3581 = vmatpush.msra.mxu0 %v908
  %3582 = vmatpush.msra.mxu0 %v907
  %3583 = vmatpush.msra.mxu0 %v906
  %3584 = vmatpush.msra.mxu0 %v905
  %3585 = vmatpush.msra.mxu0 %v904
  %3586 = vmatpush.msra.mxu0 %v903
  %3587 = vmatpush.msra.mxu0 %v902
  %3588 = vmatmul.f32.gmra.mxu0 %v1460
  %v3589 = vpop.f32.mrf.mxu0
  %v3590 = vadd.f32 %v3477, %v3589
  %3591 = vmatmul.f32.gmra.mxu0 %v1476
  %v3592 = vpop.f32.mrf.mxu0
  %v3593 = vadd.f32 %v3480, %v3592
  %3594 = vmatmul.f32.gmra.mxu0 %v1492
  %v3595 = vpop.f32.mrf.mxu0
  %v3596 = vadd.f32 %v3483, %v3595
  %3597 = vmatmul.f32.gmra.mxu0 %v1508
  %v3598 = vpop.f32.mrf.mxu0
  %v3599 = vadd.f32 %v3486, %v3598
  %3600 = vmatmul.f32.gmra.mxu0 %v1524
  %v3601 = vpop.f32.mrf.mxu0
  %v3602 = vadd.f32 %v3489, %v3601
  %3603 = vmatmul.f32.gmra.mxu0 %v1540
  %v3604 = vpop.f32.mrf.mxu0
  %v3605 = vadd.f32 %v3492, %v3604
  %3606 = vmatmul.f32.gmra.mxu0 %v1556
  %v3607 = vpop.f32.mrf.mxu0
  %v3608 = vadd.f32 %v3495, %v3607
  %3609 = vmatmul.f32.gmra.mxu0 %v1572
  %v3610 = vpop.f32.mrf.mxu0
  %v3611 = vadd.f32 %v3498, %v3610
  %3612 = vmatmul.f32.gmra.mxu0 %v1588
  %v3613 = vpop.f32.mrf.mxu0
  %v3614 = vadd.f32 %v3501, %v3613
  %3615 = vmatmul.f32.gmra.mxu0 %v1604
  %v3616 = vpop.f32.mrf.mxu0
  %v3617 = vadd.f32 %v3504, %v3616
  %3618 = vmatmul.f32.gmra.mxu0 %v1620
  %v3619 = vpop.f32.mrf.mxu0
  %v3620 = vadd.f32 %v3507, %v3619
  %3621 = vmatmul.f32.gmra.mxu0 %v1636
  %v3622 = vpop.f32.mrf.mxu0
  %v3623 = vadd.f32 %v3510, %v3622
  %3624 = vmatmul.f32.gmra.mxu0 %v1652
  %v3625 = vpop.f32.mrf.mxu0
  %v3626 = vadd.f32 %v3513, %v3625
  %3627 = vmatmul.f32.gmra.mxu0 %v1668
  %v3628 = vpop.f32.mrf.mxu0
  %v3629 = vadd.f32 %v3516, %v3628
  %3630 = vmatmul.f32.gmra.mxu0 %v1684
  %v3631 = vpop.f32.mrf.mxu0
  %v3632 = vadd.f32 %v3519, %v3631
  %3633 = vmatmul.f32.gmra.mxu0 %v1700
  %v3634 = vpop.f32.mrf.mxu0
  %v3635 = vadd.f32 %v3522, %v3634
  %3636 = vmatmul.f32.gmra.mxu0 %v1716
  %v3637 = vpop.f32.mrf.mxu0
  %v3638 = vadd.f32 %v3525, %v3637
  %3639 = vmatmul.f32.gmra.mxu0 %v1732
  %v3640 = vpop.f32.mrf.mxu0
  %v3641 = vadd.f32 %v3528, %v3640
  %3642 = vmatmul.f32.gmra.mxu0 %v1748
  %v3643 = vpop.f32.mrf.mxu0
  %v3644 = vadd.f32 %v3531, %v3643
  %3645 = vmatmul.f32.gmra.mxu0 %v1764
  %v3646 = vpop.f32.mrf.mxu0
  %v3647 = vadd.f32 %v3534, %v3646
  %3648 = vmatmul.f32.gmra.mxu0 %v1780
  %v3649 = vpop.f32.mrf.mxu0
  %v3650 = vadd.f32 %v3537, %v3649
  %3651 = vmatmul.f32.gmra.mxu0 %v1796
  %v3652 = vpop.f32.mrf.mxu0
  %v3653 = vadd.f32 %v3540, %v3652
  %3654 = vmatmul.f32.gmra.mxu0 %v1812
  %v3655 = vpop.f32.mrf.mxu0
  %v3656 = vadd.f32 %v3543, %v3655
  %3657 = vmatmul.f32.gmra.mxu0 %v1828
  %v3658 = vpop.f32.mrf.mxu0
  %v3659 = vadd.f32 %v3546, %v3658
  %3660 = vmatmul.f32.gmra.mxu0 %v1844
  %v3661 = vpop.f32.mrf.mxu0
  %v3662 = vadd.f32 %v3549, %v3661
  %3663 = vmatmul.f32.gmra.mxu0 %v1860
  %v3664 = vpop.f32.mrf.mxu0
  %v3665 = vadd.f32 %v3552, %v3664
  %3666 = vmatmul.f32.gmra.mxu0 %v1876
  %v3667 = vpop.f32.mrf.mxu0
  %v3668 = vadd.f32 %v3555, %v3667
  %3669 = vmatmul.f32.gmra.mxu0 %v1892
  %v3670 = vpop.f32.mrf.mxu0
  %v3671 = vadd.f32 %v3558, %v3670
  %3672 = vmatmul.f32.gmra.mxu0 %v1908
  %v3673 = vpop.f32.mrf.mxu0
  %v3674 = vadd.f32 %v3561, %v3673
  %3675 = vmatmul.f32.gmra.mxu0 %v1924
  %v3676 = vpop.f32.mrf.mxu0
  %v3677 = vadd.f32 %v3564, %v3676
  %3678 = vmatmul.f32.gmra.mxu0 %v1940
  %v3679 = vpop.f32.mrf.mxu0
  %v3680 = vadd.f32 %v3567, %v3679
  %3681 = vmatmul.f32.gmra.mxu0 %v1956
  %v3682 = vpop.f32.mrf.mxu0
  %v3683 = vadd.f32 %v3570, %v3682
  %3684 = vdwg.mxu0
  %3685 = vmatpush.msra.mxu0 %v933
  %3686 = vmatpush.msra.mxu0 %v932
  %3687 = vmatpush.msra.mxu0 %v931
  %3688 = vmatpush.msra.mxu0 %v930
  %3689 = vmatpush.msra.mxu0 %v929
  %3690 = vmatpush.msra.mxu0 %v928
  %3691 = vmatpush.msra.mxu0 %v927
  %3692 = vmatpush.msra.mxu0 %v926
  %3693 = vmatpush.msra.mxu0 %v925
  %3694 = vmatpush.msra.mxu0 %v924
  %3695 = vmatpush.msra.mxu0 %v923
  %3696 = vmatpush.msra.mxu0 %v922
  %3697 = vmatpush.msra.mxu0 %v921
  %3698 = vmatpush.msra.mxu0 %v920
  %3699 = vmatpush.msra.mxu0 %v919
  %3700 = vmatpush.msra.mxu0 %v918
  %3701 = vmatmul.f32.gmra.mxu0 %v1461
  %v3702 = vpop.f32.mrf.mxu0
  %v3703 = vadd.f32 %v3590, %v3702
  %3704 = vmatmul.f32.gmra.mxu0 %v1477
  %v3705 = vpop.f32.mrf.mxu0
  %v3706 = vadd.f32 %v3593, %v3705
  %3707 = vmatmul.f32.gmra.mxu0 %v1493
  %v3708 = vpop.f32.mrf.mxu0
  %v3709 = vadd.f32 %v3596, %v3708
  %3710 = vmatmul.f32.gmra.mxu0 %v1509
  %v3711 = vpop.f32.mrf.mxu0
  %v3712 = vadd.f32 %v3599, %v3711
  %3713 = vmatmul.f32.gmra.mxu0 %v1525
  %v3714 = vpop.f32.mrf.mxu0
  %v3715 = vadd.f32 %v3602, %v3714
  %3716 = vmatmul.f32.gmra.mxu0 %v1541
  %v3717 = vpop.f32.mrf.mxu0
  %v3718 = vadd.f32 %v3605, %v3717
  %3719 = vmatmul.f32.gmra.mxu0 %v1557
  %v3720 = vpop.f32.mrf.mxu0
  %v3721 = vadd.f32 %v3608, %v3720
  %3722 = vmatmul.f32.gmra.mxu0 %v1573
  %v3723 = vpop.f32.mrf.mxu0
  %v3724 = vadd.f32 %v3611, %v3723
  %3725 = vmatmul.f32.gmra.mxu0 %v1589
  %v3726 = vpop.f32.mrf.mxu0
  %v3727 = vadd.f32 %v3614, %v3726
  %3728 = vmatmul.f32.gmra.mxu0 %v1605
  %v3729 = vpop.f32.mrf.mxu0
  %v3730 = vadd.f32 %v3617, %v3729
  %3731 = vmatmul.f32.gmra.mxu0 %v1621
  %v3732 = vpop.f32.mrf.mxu0
  %v3733 = vadd.f32 %v3620, %v3732
  %3734 = vmatmul.f32.gmra.mxu0 %v1637
  %v3735 = vpop.f32.mrf.mxu0
  %v3736 = vadd.f32 %v3623, %v3735
  %3737 = vmatmul.f32.gmra.mxu0 %v1653
  %v3738 = vpop.f32.mrf.mxu0
  %v3739 = vadd.f32 %v3626, %v3738
  %3740 = vmatmul.f32.gmra.mxu0 %v1669
  %v3741 = vpop.f32.mrf.mxu0
  %v3742 = vadd.f32 %v3629, %v3741
  %3743 = vmatmul.f32.gmra.mxu0 %v1685
  %v3744 = vpop.f32.mrf.mxu0
  %v3745 = vadd.f32 %v3632, %v3744
  %3746 = vmatmul.f32.gmra.mxu0 %v1701
  %v3747 = vpop.f32.mrf.mxu0
  %v3748 = vadd.f32 %v3635, %v3747
  %3749 = vmatmul.f32.gmra.mxu0 %v1717
  %v3750 = vpop.f32.mrf.mxu0
  %v3751 = vadd.f32 %v3638, %v3750
  %3752 = vmatmul.f32.gmra.mxu0 %v1733
  %v3753 = vpop.f32.mrf.mxu0
  %v3754 = vadd.f32 %v3641, %v3753
  %3755 = vmatmul.f32.gmra.mxu0 %v1749
  %v3756 = vpop.f32.mrf.mxu0
  %v3757 = vadd.f32 %v3644, %v3756
  %3758 = vmatmul.f32.gmra.mxu0 %v1765
  %v3759 = vpop.f32.mrf.mxu0
  %v3760 = vadd.f32 %v3647, %v3759
  %3761 = vmatmul.f32.gmra.mxu0 %v1781
  %v3762 = vpop.f32.mrf.mxu0
  %v3763 = vadd.f32 %v3650, %v3762
  %3764 = vmatmul.f32.gmra.mxu0 %v1797
  %v3765 = vpop.f32.mrf.mxu0
  %v3766 = vadd.f32 %v3653, %v3765
  %3767 = vmatmul.f32.gmra.mxu0 %v1813
  %v3768 = vpop.f32.mrf.mxu0
  %v3769 = vadd.f32 %v3656, %v3768
  %3770 = vmatmul.f32.gmra.mxu0 %v1829
  %v3771 = vpop.f32.mrf.mxu0
  %v3772 = vadd.f32 %v3659, %v3771
  %3773 = vmatmul.f32.gmra.mxu0 %v1845
  %v3774 = vpop.f32.mrf.mxu0
  %v3775 = vadd.f32 %v3662, %v3774
  %3776 = vmatmul.f32.gmra.mxu0 %v1861
  %v3777 = vpop.f32.mrf.mxu0
  %v3778 = vadd.f32 %v3665, %v3777
  %3779 = vmatmul.f32.gmra.mxu0 %v1877
  %v3780 = vpop.f32.mrf.mxu0
  %v3781 = vadd.f32 %v3668, %v3780
  %3782 = vmatmul.f32.gmra.mxu0 %v1893
  %v3783 = vpop.f32.mrf.mxu0
  %v3784 = vadd.f32 %v3671, %v3783
  %3785 = vmatmul.f32.gmra.mxu0 %v1909
  %v3786 = vpop.f32.mrf.mxu0
  %v3787 = vadd.f32 %v3674, %v3786
  %3788 = vmatmul.f32.gmra.mxu0 %v1925
  %v3789 = vpop.f32.mrf.mxu0
  %v3790 = vadd.f32 %v3677, %v3789
  %3791 = vmatmul.f32.gmra.mxu0 %v1941
  %v3792 = vpop.f32.mrf.mxu0
  %v3793 = vadd.f32 %v3680, %v3792
  %3794 = vmatmul.f32.gmra.mxu0 %v1957
  %v3795 = vpop.f32.mrf.mxu0
  %v3796 = vadd.f32 %v3683, %v3795
  %3797 = vdwg.mxu0
  %v3798 = vadd.f32 %v1958, %v3703
  %v3799 = vadd.f32 %v1959, %v3706
  %v3800 = vadd.f32 %v1960, %v3709
  %v3801 = vadd.f32 %v1961, %v3712
  %v3802 = vadd.f32 %v1962, %v3715
  %v3803 = vadd.f32 %v1963, %v3718
  %v3804 = vadd.f32 %v1964, %v3721
  %v3805 = vadd.f32 %v1965, %v3724
  %v3806 = vadd.f32 %v1966, %v3727
  %v3807 = vadd.f32 %v1967, %v3730
  %v3808 = vadd.f32 %v1968, %v3733
  %v3809 = vadd.f32 %v1969, %v3736
  %v3810 = vadd.f32 %v1970, %v3739
  %v3811 = vadd.f32 %v1971, %v3742
  %v3812 = vadd.f32 %v1972, %v3745
  %v3813 = vadd.f32 %v1973, %v3748
  %v3814 = vadd.f32 %v1974, %v3751
  %v3815 = vadd.f32 %v1975, %v3754
  %v3816 = vadd.f32 %v1976, %v3757
  %v3817 = vadd.f32 %v1977, %v3760
  %v3818 = vadd.f32 %v1978, %v3763
  %v3819 = vadd.f32 %v1979, %v3766
  %v3820 = vadd.f32 %v1980, %v3769
  %v3821 = vadd.f32 %v1981, %v3772
  %v3822 = vadd.f32 %v1982, %v3775
  %v3823 = vadd.f32 %v1983, %v3778
  %v3824 = vadd.f32 %v1984, %v3781
  %v3825 = vadd.f32 %v1985, %v3784
  %v3826 = vadd.f32 %v1986, %v3787
  %v3827 = vadd.f32 %v1987, %v3790
  %v3828 = vadd.f32 %v1988, %v3793
  %v3829 = vadd.f32 %v1989, %v3796
  %vm3830 = vcmask 261120
  %3831 = vst.msk [vmem:[#allocation2] sm:$0xff] %vm3830, %v3798
  %3832 = vst.msk [vmem:[#allocation2 + $0x8] sm:$0xff] %vm3830, %v3799
  %3833 = vst.msk [vmem:[#allocation2 + $0x10] sm:$0xff] %vm3830, %v3800
  %3834 = vst.msk [vmem:[#allocation2 + $0x18] sm:$0xff] %vm3830, %v3801
  %3835 = vst.msk [vmem:[#allocation2 + $0x20] sm:$0xff] %vm3830, %v3802
  %3836 = vst.msk [vmem:[#allocation2 + $0x28] sm:$0xff] %vm3830, %v3803
  %3837 = vst.msk [vmem:[#allocation2 + $0x30] sm:$0xff] %vm3830, %v3804
  %3838 = vst.msk [vmem:[#allocation2 + $0x38] sm:$0xff] %vm3830, %v3805
  %3839 = vst.msk [vmem:[#allocation2 + $0x40] sm:$0xff] %vm3830, %v3806
  %3840 = vst.msk [vmem:[#allocation2 + $0x48] sm:$0xff] %vm3830, %v3807
  %3841 = vst.msk [vmem:[#allocation2 + $0x50] sm:$0xff] %vm3830, %v3808
  %3842 = vst.msk [vmem:[#allocation2 + $0x58] sm:$0xff] %vm3830, %v3809
  %3843 = vst.msk [vmem:[#allocation2 + $0x60] sm:$0xff] %vm3830, %v3810
  %3844 = vst.msk [vmem:[#allocation2 + $0x68] sm:$0xff] %vm3830, %v3811
  %3845 = vst.msk [vmem:[#allocation2 + $0x70] sm:$0xff] %vm3830, %v3812
  %3846 = vst.msk [vmem:[#allocation2 + $0x78] sm:$0xff] %vm3830, %v3813
  %3847 = vst.msk [vmem:[#allocation2 + $0x80] sm:$0xff] %vm3830, %v3814
  %3848 = vst.msk [vmem:[#allocation2 + $0x88] sm:$0xff] %vm3830, %v3815
  %3849 = vst.msk [vmem:[#allocation2 + $0x90] sm:$0xff] %vm3830, %v3816
  %3850 = vst.msk [vmem:[#allocation2 + $0x98] sm:$0xff] %vm3830, %v3817
  %3851 = vst.msk [vmem:[#allocation2 + $0xa0] sm:$0xff] %vm3830, %v3818
  %3852 = vst.msk [vmem:[#allocation2 + $0xa8] sm:$0xff] %vm3830, %v3819
  %3853 = vst.msk [vmem:[#allocation2 + $0xb0] sm:$0xff] %vm3830, %v3820
  %3854 = vst.msk [vmem:[#allocation2 + $0xb8] sm:$0xff] %vm3830, %v3821
  %3855 = vst.msk [vmem:[#allocation2 + $0xc0] sm:$0xff] %vm3830, %v3822
  %3856 = vst.msk [vmem:[#allocation2 + $0xc8] sm:$0xff] %vm3830, %v3823
  %3857 = vst.msk [vmem:[#allocation2 + $0xd0] sm:$0xff] %vm3830, %v3824
  %3858 = vst.msk [vmem:[#allocation2 + $0xd8] sm:$0xff] %vm3830, %v3825
  %3859 = vst.msk [vmem:[#allocation2 + $0xe0] sm:$0xff] %vm3830, %v3826
  %3860 = vst.msk [vmem:[#allocation2 + $0xe8] sm:$0xff] %vm3830, %v3827
  %3861 = vst.msk [vmem:[#allocation2 + $0xf0] sm:$0xff] %vm3830, %v3828
  %3862 = vst.msk [vmem:[#allocation2 + $0xf8] sm:$0xff] %vm3830, %v3829
  %v3863 = vld [vmem:[#allocation3] sm:$0xff]
  %v3864 = vld [vmem:[#allocation3 + $0x8] sm:$0xff]
  %v3865 = vld [vmem:[#allocation3 + $0x10] sm:$0xff]
  %v3866 = vld [vmem:[#allocation3 + $0x18] sm:$0xff]
  %v3867 = vld [vmem:[#allocation3 + $0x20] sm:$0xff]
  %v3868 = vld [vmem:[#allocation3 + $0x28] sm:$0xff]
  %v3869 = vld [vmem:[#allocation3 + $0x30] sm:$0xff]
  %v3870 = vld [vmem:[#allocation3 + $0x38] sm:$0xff]
  %v3871 = vld [vmem:[#allocation3 + $0x40] sm:$0xff]
  %v3872 = vld [vmem:[#allocation3 + $0x48] sm:$0xff]
  %v3873 = vld [vmem:[#allocation3 + $0x50] sm:$0xff]
  %v3874 = vld [vmem:[#allocation3 + $0x58] sm:$0xff]
  %v3875 = vld [vmem:[#allocation3 + $0x60] sm:$0xff]
  %v3876 = vld [vmem:[#allocation3 + $0x68] sm:$0xff]
  %v3877 = vld [vmem:[#allocation3 + $0x70] sm:$0xff]
  %v3878 = vld [vmem:[#allocation3 + $0x78] sm:$0xff]
  %v3879 = vld [vmem:[#allocation3 + $0x80] sm:$0xff]
  %v3880 = vld [vmem:[#allocation3 + $0x88] sm:$0xff]
  %v3881 = vld [vmem:[#allocation3 + $0x90] sm:$0xff]
  %v3882 = vld [vmem:[#allocation3 + $0x98] sm:$0xff]
  %v3883 = vld [vmem:[#allocation3 + $0xa0] sm:$0xff]
  %v3884 = vld [vmem:[#allocation3 + $0xa8] sm:$0xff]
  %v3885 = vld [vmem:[#allocation3 + $0xb0] sm:$0xff]
  %v3886 = vld [vmem:[#allocation3 + $0xb8] sm:$0xff]
  %v3887 = vld [vmem:[#allocation3 + $0xc0] sm:$0xff]
  %v3888 = vld [vmem:[#allocation3 + $0xc8] sm:$0xff]
  %v3889 = vld [vmem:[#allocation3 + $0xd0] sm:$0xff]
  %v3890 = vld [vmem:[#allocation3 + $0xd8] sm:$0xff]
  %v3891 = vld [vmem:[#allocation3 + $0xe0] sm:$0xff]
  %v3892 = vld [vmem:[#allocation3 + $0xe8] sm:$0xff]
  %v3893 = vld [vmem:[#allocation3 + $0xf0] sm:$0xff]
  %v3894 = vld [vmem:[#allocation3 + $0xf8] sm:$0xff]
  %v3895 = vadd.f32 %v1446, %v1447
  %v3896 = vadd.f32 %v3895, %v1448
  %v3897 = vadd.f32 %v3896, %v1449
  %v3898 = vadd.f32 %v3897, %v1450
  %v3899 = vadd.f32 %v3898, %v1451
  %v3900 = vadd.f32 %v3899, %v1452
  %v3901 = vadd.f32 %v3900, %v1453
  %v3902 = vadd.f32 %v3901, %v1454
  %v3903 = vadd.f32 %v3902, %v1455
  %v3904 = vadd.f32 %v3903, %v1456
  %v3905 = vadd.f32 %v3904, %v1457
  %v3906 = vadd.f32 %v3905, %v1458
  %v3907 = vadd.f32 %v3906, %v1459
  %v3908 = vadd.f32 %v3907, %v1460
  %v3909 = vadd.f32 %v3908, %v1461
  %3910 = vadd.xlane.f32.xlu0 %v3909
  %v3911 = vpop.xlane.xlu0 %3910
  %v3912 = vadd.f32 %v1462, %v1463
  %v3913 = vadd.f32 %v3912, %v1464
  %v3914 = vadd.f32 %v3913, %v1465
  %v3915 = vadd.f32 %v3914, %v1466
  %v3916 = vadd.f32 %v3915, %v1467
  %v3917 = vadd.f32 %v3916, %v1468
  %v3918 = vadd.f32 %v3917, %v1469
  %v3919 = vadd.f32 %v3918, %v1470
  %v3920 = vadd.f32 %v3919, %v1471
  %v3921 = vadd.f32 %v3920, %v1472
  %v3922 = vadd.f32 %v3921, %v1473
  %v3923 = vadd.f32 %v3922, %v1474
  %v3924 = vadd.f32 %v3923, %v1475
  %v3925 = vadd.f32 %v3924, %v1476
  %v3926 = vadd.f32 %v3925, %v1477
  %3927 = vadd.xlane.f32.xlu0 %v3926
  %v3928 = vpop.xlane.xlu0 %3927
  %v3929 = vadd.f32 %v1478, %v1479
  %v3930 = vadd.f32 %v3929, %v1480
  %v3931 = vadd.f32 %v3930, %v1481
  %v3932 = vadd.f32 %v3931, %v1482
  %v3933 = vadd.f32 %v3932, %v1483
  %v3934 = vadd.f32 %v3933, %v1484
  %v3935 = vadd.f32 %v3934, %v1485
  %v3936 = vadd.f32 %v3935, %v1486
  %v3937 = vadd.f32 %v3936, %v1487
  %v3938 = vadd.f32 %v3937, %v1488
  %v3939 = vadd.f32 %v3938, %v1489
  %v3940 = vadd.f32 %v3939, %v1490
  %v3941 = vadd.f32 %v3940, %v1491
  %v3942 = vadd.f32 %v3941, %v1492
  %v3943 = vadd.f32 %v3942, %v1493
  %3944 = vadd.xlane.f32.xlu0 %v3943
  %v3945 = vpop.xlane.xlu0 %3944
  %v3946 = vadd.f32 %v1494, %v1495
  %v3947 = vadd.f32 %v3946, %v1496
  %v3948 = vadd.f32 %v3947, %v1497
  %v3949 = vadd.f32 %v3948, %v1498
  %v3950 = vadd.f32 %v3949, %v1499
  %v3951 = vadd.f32 %v3950, %v1500
  %v3952 = vadd.f32 %v3951, %v1501
  %v3953 = vadd.f32 %v3952, %v1502
  %v3954 = vadd.f32 %v3953, %v1503
  %v3955 = vadd.f32 %v3954, %v1504
  %v3956 = vadd.f32 %v3955, %v1505
  %v3957 = vadd.f32 %v3956, %v1506
  %v3958 = vadd.f32 %v3957, %v1507
  %v3959 = vadd.f32 %v3958, %v1508
  %v3960 = vadd.f32 %v3959, %v1509
  %3961 = vadd.xlane.f32.xlu0 %v3960
  %v3962 = vpop.xlane.xlu0 %3961
  %v3963 = vadd.f32 %v1510, %v1511
  %v3964 = vadd.f32 %v3963, %v1512
  %v3965 = vadd.f32 %v3964, %v1513
  %v3966 = vadd.f32 %v3965, %v1514
  %v3967 = vadd.f32 %v3966, %v1515
  %v3968 = vadd.f32 %v3967, %v1516
  %v3969 = vadd.f32 %v3968, %v1517
  %v3970 = vadd.f32 %v3969, %v1518
  %v3971 = vadd.f32 %v3970, %v1519
  %v3972 = vadd.f32 %v3971, %v1520
  %v3973 = vadd.f32 %v3972, %v1521
  %v3974 = vadd.f32 %v3973, %v1522
  %v3975 = vadd.f32 %v3974, %v1523
  %v3976 = vadd.f32 %v3975, %v1524
  %v3977 = vadd.f32 %v3976, %v1525
  %3978 = vadd.xlane.f32.xlu0 %v3977
  %v3979 = vpop.xlane.xlu0 %3978
  %v3980 = vadd.f32 %v1526, %v1527
  %v3981 = vadd.f32 %v3980, %v1528
  %v3982 = vadd.f32 %v3981, %v1529
  %v3983 = vadd.f32 %v3982, %v1530
  %v3984 = vadd.f32 %v3983, %v1531
  %v3985 = vadd.f32 %v3984, %v1532
  %v3986 = vadd.f32 %v3985, %v1533
  %v3987 = vadd.f32 %v3986, %v1534
  %v3988 = vadd.f32 %v3987, %v1535
  %v3989 = vadd.f32 %v3988, %v1536
  %v3990 = vadd.f32 %v3989, %v1537
  %v3991 = vadd.f32 %v3990, %v1538
  %v3992 = vadd.f32 %v3991, %v1539
  %v3993 = vadd.f32 %v3992, %v1540
  %v3994 = vadd.f32 %v3993, %v1541
  %3995 = vadd.xlane.f32.xlu0 %v3994
  %v3996 = vpop.xlane.xlu0 %3995
  %v3997 = vadd.f32 %v1542, %v1543
  %v3998 = vadd.f32 %v3997, %v1544
  %v3999 = vadd.f32 %v3998, %v1545
  %v4000 = vadd.f32 %v3999, %v1546
  %v4001 = vadd.f32 %v4000, %v1547
  %v4002 = vadd.f32 %v4001, %v1548
  %v4003 = vadd.f32 %v4002, %v1549
  %v4004 = vadd.f32 %v4003, %v1550
  %v4005 = vadd.f32 %v4004, %v1551
  %v4006 = vadd.f32 %v4005, %v1552
  %v4007 = vadd.f32 %v4006, %v1553
  %v4008 = vadd.f32 %v4007, %v1554
  %v4009 = vadd.f32 %v4008, %v1555
  %v4010 = vadd.f32 %v4009, %v1556
  %v4011 = vadd.f32 %v4010, %v1557
  %4012 = vadd.xlane.f32.xlu0 %v4011
  %v4013 = vpop.xlane.xlu0 %4012
  %v4014 = vadd.f32 %v1558, %v1559
  %v4015 = vadd.f32 %v4014, %v1560
  %v4016 = vadd.f32 %v4015, %v1561
  %v4017 = vadd.f32 %v4016, %v1562
  %v4018 = vadd.f32 %v4017, %v1563
  %v4019 = vadd.f32 %v4018, %v1564
  %v4020 = vadd.f32 %v4019, %v1565
  %v4021 = vadd.f32 %v4020, %v1566
  %v4022 = vadd.f32 %v4021, %v1567
  %v4023 = vadd.f32 %v4022, %v1568
  %v4024 = vadd.f32 %v4023, %v1569
  %v4025 = vadd.f32 %v4024, %v1570
  %v4026 = vadd.f32 %v4025, %v1571
  %v4027 = vadd.f32 %v4026, %v1572
  %v4028 = vadd.f32 %v4027, %v1573
  %4029 = vadd.xlane.f32.xlu0 %v4028
  %v4030 = vpop.xlane.xlu0 %4029
  %v4031 = vadd.f32 %v1574, %v1575
  %v4032 = vadd.f32 %v4031, %v1576
  %v4033 = vadd.f32 %v4032, %v1577
  %v4034 = vadd.f32 %v4033, %v1578
  %v4035 = vadd.f32 %v4034, %v1579
  %v4036 = vadd.f32 %v4035, %v1580
  %v4037 = vadd.f32 %v4036, %v1581
  %v4038 = vadd.f32 %v4037, %v1582
  %v4039 = vadd.f32 %v4038, %v1583
  %v4040 = vadd.f32 %v4039, %v1584
  %v4041 = vadd.f32 %v4040, %v1585
  %v4042 = vadd.f32 %v4041, %v1586
  %v4043 = vadd.f32 %v4042, %v1587
  %v4044 = vadd.f32 %v4043, %v1588
  %v4045 = vadd.f32 %v4044, %v1589
  %4046 = vadd.xlane.f32.xlu0 %v4045
  %v4047 = vpop.xlane.xlu0 %4046
  %v4048 = vadd.f32 %v1590, %v1591
  %v4049 = vadd.f32 %v4048, %v1592
  %v4050 = vadd.f32 %v4049, %v1593
  %v4051 = vadd.f32 %v4050, %v1594
  %v4052 = vadd.f32 %v4051, %v1595
  %v4053 = vadd.f32 %v4052, %v1596
  %v4054 = vadd.f32 %v4053, %v1597
  %v4055 = vadd.f32 %v4054, %v1598
  %v4056 = vadd.f32 %v4055, %v1599
  %v4057 = vadd.f32 %v4056, %v1600
  %v4058 = vadd.f32 %v4057, %v1601
  %v4059 = vadd.f32 %v4058, %v1602
  %v4060 = vadd.f32 %v4059, %v1603
  %v4061 = vadd.f32 %v4060, %v1604
  %v4062 = vadd.f32 %v4061, %v1605
  %4063 = vadd.xlane.f32.xlu0 %v4062
  %v4064 = vpop.xlane.xlu0 %4063
  %v4065 = vadd.f32 %v1606, %v1607
  %v4066 = vadd.f32 %v4065, %v1608
  %v4067 = vadd.f32 %v4066, %v1609
  %v4068 = vadd.f32 %v4067, %v1610
  %v4069 = vadd.f32 %v4068, %v1611
  %v4070 = vadd.f32 %v4069, %v1612
  %v4071 = vadd.f32 %v4070, %v1613
  %v4072 = vadd.f32 %v4071, %v1614
  %v4073 = vadd.f32 %v4072, %v1615
  %v4074 = vadd.f32 %v4073, %v1616
  %v4075 = vadd.f32 %v4074, %v1617
  %v4076 = vadd.f32 %v4075, %v1618
  %v4077 = vadd.f32 %v4076, %v1619
  %v4078 = vadd.f32 %v4077, %v1620
  %v4079 = vadd.f32 %v4078, %v1621
  %4080 = vadd.xlane.f32.xlu0 %v4079
  %v4081 = vpop.xlane.xlu0 %4080
  %v4082 = vadd.f32 %v1622, %v1623
  %v4083 = vadd.f32 %v4082, %v1624
  %v4084 = vadd.f32 %v4083, %v1625
  %v4085 = vadd.f32 %v4084, %v1626
  %v4086 = vadd.f32 %v4085, %v1627
  %v4087 = vadd.f32 %v4086, %v1628
  %v4088 = vadd.f32 %v4087, %v1629
  %v4089 = vadd.f32 %v4088, %v1630
  %v4090 = vadd.f32 %v4089, %v1631
  %v4091 = vadd.f32 %v4090, %v1632
  %v4092 = vadd.f32 %v4091, %v1633
  %v4093 = vadd.f32 %v4092, %v1634
  %v4094 = vadd.f32 %v4093, %v1635
  %v4095 = vadd.f32 %v4094, %v1636
  %v4096 = vadd.f32 %v4095, %v1637
  %4097 = vadd.xlane.f32.xlu0 %v4096
  %v4098 = vpop.xlane.xlu0 %4097
  %v4099 = vadd.f32 %v1638, %v1639
  %v4100 = vadd.f32 %v4099, %v1640
  %v4101 = vadd.f32 %v4100, %v1641
  %v4102 = vadd.f32 %v4101, %v1642
  %v4103 = vadd.f32 %v4102, %v1643
  %v4104 = vadd.f32 %v4103, %v1644
  %v4105 = vadd.f32 %v4104, %v1645
  %v4106 = vadd.f32 %v4105, %v1646
  %v4107 = vadd.f32 %v4106, %v1647
  %v4108 = vadd.f32 %v4107, %v1648
  %v4109 = vadd.f32 %v4108, %v1649
  %v4110 = vadd.f32 %v4109, %v1650
  %v4111 = vadd.f32 %v4110, %v1651
  %v4112 = vadd.f32 %v4111, %v1652
  %v4113 = vadd.f32 %v4112, %v1653
  %4114 = vadd.xlane.f32.xlu0 %v4113
  %v4115 = vpop.xlane.xlu0 %4114
  %v4116 = vadd.f32 %v1654, %v1655
  %v4117 = vadd.f32 %v4116, %v1656
  %v4118 = vadd.f32 %v4117, %v1657
  %v4119 = vadd.f32 %v4118, %v1658
  %v4120 = vadd.f32 %v4119, %v1659
  %v4121 = vadd.f32 %v4120, %v1660
  %v4122 = vadd.f32 %v4121, %v1661
  %v4123 = vadd.f32 %v4122, %v1662
  %v4124 = vadd.f32 %v4123, %v1663
  %v4125 = vadd.f32 %v4124, %v1664
  %v4126 = vadd.f32 %v4125, %v1665
  %v4127 = vadd.f32 %v4126, %v1666
  %v4128 = vadd.f32 %v4127, %v1667
  %v4129 = vadd.f32 %v4128, %v1668
  %v4130 = vadd.f32 %v4129, %v1669
  %4131 = vadd.xlane.f32.xlu0 %v4130
  %v4132 = vpop.xlane.xlu0 %4131
  %v4133 = vadd.f32 %v1670, %v1671
  %v4134 = vadd.f32 %v4133, %v1672
  %v4135 = vadd.f32 %v4134, %v1673
  %v4136 = vadd.f32 %v4135, %v1674
  %v4137 = vadd.f32 %v4136, %v1675
  %v4138 = vadd.f32 %v4137, %v1676
  %v4139 = vadd.f32 %v4138, %v1677
  %v4140 = vadd.f32 %v4139, %v1678
  %v4141 = vadd.f32 %v4140, %v1679
  %v4142 = vadd.f32 %v4141, %v1680
  %v4143 = vadd.f32 %v4142, %v1681
  %v4144 = vadd.f32 %v4143, %v1682
  %v4145 = vadd.f32 %v4144, %v1683
  %v4146 = vadd.f32 %v4145, %v1684
  %v4147 = vadd.f32 %v4146, %v1685
  %4148 = vadd.xlane.f32.xlu0 %v4147
  %v4149 = vpop.xlane.xlu0 %4148
  %v4150 = vadd.f32 %v1686, %v1687
  %v4151 = vadd.f32 %v4150, %v1688
  %v4152 = vadd.f32 %v4151, %v1689
  %v4153 = vadd.f32 %v4152, %v1690
  %v4154 = vadd.f32 %v4153, %v1691
  %v4155 = vadd.f32 %v4154, %v1692
  %v4156 = vadd.f32 %v4155, %v1693
  %v4157 = vadd.f32 %v4156, %v1694
  %v4158 = vadd.f32 %v4157, %v1695
  %v4159 = vadd.f32 %v4158, %v1696
  %v4160 = vadd.f32 %v4159, %v1697
  %v4161 = vadd.f32 %v4160, %v1698
  %v4162 = vadd.f32 %v4161, %v1699
  %v4163 = vadd.f32 %v4162, %v1700
  %v4164 = vadd.f32 %v4163, %v1701
  %4165 = vadd.xlane.f32.xlu0 %v4164
  %v4166 = vpop.xlane.xlu0 %4165
  %v4167 = vadd.f32 %v1702, %v1703
  %v4168 = vadd.f32 %v4167, %v1704
  %v4169 = vadd.f32 %v4168, %v1705
  %v4170 = vadd.f32 %v4169, %v1706
  %v4171 = vadd.f32 %v4170, %v1707
  %v4172 = vadd.f32 %v4171, %v1708
  %v4173 = vadd.f32 %v4172, %v1709
  %v4174 = vadd.f32 %v4173, %v1710
  %v4175 = vadd.f32 %v4174, %v1711
  %v4176 = vadd.f32 %v4175, %v1712
  %v4177 = vadd.f32 %v4176, %v1713
  %v4178 = vadd.f32 %v4177, %v1714
  %v4179 = vadd.f32 %v4178, %v1715
  %v4180 = vadd.f32 %v4179, %v1716
  %v4181 = vadd.f32 %v4180, %v1717
  %4182 = vadd.xlane.f32.xlu0 %v4181
  %v4183 = vpop.xlane.xlu0 %4182
  %v4184 = vadd.f32 %v1718, %v1719
  %v4185 = vadd.f32 %v4184, %v1720
  %v4186 = vadd.f32 %v4185, %v1721
  %v4187 = vadd.f32 %v4186, %v1722
  %v4188 = vadd.f32 %v4187, %v1723
  %v4189 = vadd.f32 %v4188, %v1724
  %v4190 = vadd.f32 %v4189, %v1725
  %v4191 = vadd.f32 %v4190, %v1726
  %v4192 = vadd.f32 %v4191, %v1727
  %v4193 = vadd.f32 %v4192, %v1728
  %v4194 = vadd.f32 %v4193, %v1729
  %v4195 = vadd.f32 %v4194, %v1730
  %v4196 = vadd.f32 %v4195, %v1731
  %v4197 = vadd.f32 %v4196, %v1732
  %v4198 = vadd.f32 %v4197, %v1733
  %4199 = vadd.xlane.f32.xlu0 %v4198
  %v4200 = vpop.xlane.xlu0 %4199
  %v4201 = vadd.f32 %v1734, %v1735
  %v4202 = vadd.f32 %v4201, %v1736
  %v4203 = vadd.f32 %v4202, %v1737
  %v4204 = vadd.f32 %v4203, %v1738
  %v4205 = vadd.f32 %v4204, %v1739
  %v4206 = vadd.f32 %v4205, %v1740
  %v4207 = vadd.f32 %v4206, %v1741
  %v4208 = vadd.f32 %v4207, %v1742
  %v4209 = vadd.f32 %v4208, %v1743
  %v4210 = vadd.f32 %v4209, %v1744
  %v4211 = vadd.f32 %v4210, %v1745
  %v4212 = vadd.f32 %v4211, %v1746
  %v4213 = vadd.f32 %v4212, %v1747
  %v4214 = vadd.f32 %v4213, %v1748
  %v4215 = vadd.f32 %v4214, %v1749
  %4216 = vadd.xlane.f32.xlu0 %v4215
  %v4217 = vpop.xlane.xlu0 %4216
  %v4218 = vadd.f32 %v1750, %v1751
  %v4219 = vadd.f32 %v4218, %v1752
  %v4220 = vadd.f32 %v4219, %v1753
  %v4221 = vadd.f32 %v4220, %v1754
  %v4222 = vadd.f32 %v4221, %v1755
  %v4223 = vadd.f32 %v4222, %v1756
  %v4224 = vadd.f32 %v4223, %v1757
  %v4225 = vadd.f32 %v4224, %v1758
  %v4226 = vadd.f32 %v4225, %v1759
  %v4227 = vadd.f32 %v4226, %v1760
  %v4228 = vadd.f32 %v4227, %v1761
  %v4229 = vadd.f32 %v4228, %v1762
  %v4230 = vadd.f32 %v4229, %v1763
  %v4231 = vadd.f32 %v4230, %v1764
  %v4232 = vadd.f32 %v4231, %v1765
  %4233 = vadd.xlane.f32.xlu0 %v4232
  %v4234 = vpop.xlane.xlu0 %4233
  %v4235 = vadd.f32 %v1766, %v1767
  %v4236 = vadd.f32 %v4235, %v1768
  %v4237 = vadd.f32 %v4236, %v1769
  %v4238 = vadd.f32 %v4237, %v1770
  %v4239 = vadd.f32 %v4238, %v1771
  %v4240 = vadd.f32 %v4239, %v1772
  %v4241 = vadd.f32 %v4240, %v1773
  %v4242 = vadd.f32 %v4241, %v1774
  %v4243 = vadd.f32 %v4242, %v1775
  %v4244 = vadd.f32 %v4243, %v1776
  %v4245 = vadd.f32 %v4244, %v1777
  %v4246 = vadd.f32 %v4245, %v1778
  %v4247 = vadd.f32 %v4246, %v1779
  %v4248 = vadd.f32 %v4247, %v1780
  %v4249 = vadd.f32 %v4248, %v1781
  %4250 = vadd.xlane.f32.xlu0 %v4249
  %v4251 = vpop.xlane.xlu0 %4250
  %v4252 = vadd.f32 %v1782, %v1783
  %v4253 = vadd.f32 %v4252, %v1784
  %v4254 = vadd.f32 %v4253, %v1785
  %v4255 = vadd.f32 %v4254, %v1786
  %v4256 = vadd.f32 %v4255, %v1787
  %v4257 = vadd.f32 %v4256, %v1788
  %v4258 = vadd.f32 %v4257, %v1789
  %v4259 = vadd.f32 %v4258, %v1790
  %v4260 = vadd.f32 %v4259, %v1791
  %v4261 = vadd.f32 %v4260, %v1792
  %v4262 = vadd.f32 %v4261, %v1793
  %v4263 = vadd.f32 %v4262, %v1794
  %v4264 = vadd.f32 %v4263, %v1795
  %v4265 = vadd.f32 %v4264, %v1796
  %v4266 = vadd.f32 %v4265, %v1797
  %4267 = vadd.xlane.f32.xlu0 %v4266
  %v4268 = vpop.xlane.xlu0 %4267
  %v4269 = vadd.f32 %v1798, %v1799
  %v4270 = vadd.f32 %v4269, %v1800
  %v4271 = vadd.f32 %v4270, %v1801
  %v4272 = vadd.f32 %v4271, %v1802
  %v4273 = vadd.f32 %v4272, %v1803
  %v4274 = vadd.f32 %v4273, %v1804
  %v4275 = vadd.f32 %v4274, %v1805
  %v4276 = vadd.f32 %v4275, %v1806
  %v4277 = vadd.f32 %v4276, %v1807
  %v4278 = vadd.f32 %v4277, %v1808
  %v4279 = vadd.f32 %v4278, %v1809
  %v4280 = vadd.f32 %v4279, %v1810
  %v4281 = vadd.f32 %v4280, %v1811
  %v4282 = vadd.f32 %v4281, %v1812
  %v4283 = vadd.f32 %v4282, %v1813
  %4284 = vadd.xlane.f32.xlu0 %v4283
  %v4285 = vpop.xlane.xlu0 %4284
  %v4286 = vadd.f32 %v1814, %v1815
  %v4287 = vadd.f32 %v4286, %v1816
  %v4288 = vadd.f32 %v4287, %v1817
  %v4289 = vadd.f32 %v4288, %v1818
  %v4290 = vadd.f32 %v4289, %v1819
  %v4291 = vadd.f32 %v4290, %v1820
  %v4292 = vadd.f32 %v4291, %v1821
  %v4293 = vadd.f32 %v4292, %v1822
  %v4294 = vadd.f32 %v4293, %v1823
  %v4295 = vadd.f32 %v4294, %v1824
  %v4296 = vadd.f32 %v4295, %v1825
  %v4297 = vadd.f32 %v4296, %v1826
  %v4298 = vadd.f32 %v4297, %v1827
  %v4299 = vadd.f32 %v4298, %v1828
  %v4300 = vadd.f32 %v4299, %v1829
  %4301 = vadd.xlane.f32.xlu0 %v4300
  %v4302 = vpop.xlane.xlu0 %4301
  %v4303 = vadd.f32 %v1830, %v1831
  %v4304 = vadd.f32 %v4303, %v1832
  %v4305 = vadd.f32 %v4304, %v1833
  %v4306 = vadd.f32 %v4305, %v1834
  %v4307 = vadd.f32 %v4306, %v1835
  %v4308 = vadd.f32 %v4307, %v1836
  %v4309 = vadd.f32 %v4308, %v1837
  %v4310 = vadd.f32 %v4309, %v1838
  %v4311 = vadd.f32 %v4310, %v1839
  %v4312 = vadd.f32 %v4311, %v1840
  %v4313 = vadd.f32 %v4312, %v1841
  %v4314 = vadd.f32 %v4313, %v1842
  %v4315 = vadd.f32 %v4314, %v1843
  %v4316 = vadd.f32 %v4315, %v1844
  %v4317 = vadd.f32 %v4316, %v1845
  %4318 = vadd.xlane.f32.xlu0 %v4317
  %v4319 = vpop.xlane.xlu0 %4318
  %v4320 = vadd.f32 %v1846, %v1847
  %v4321 = vadd.f32 %v4320, %v1848
  %v4322 = vadd.f32 %v4321, %v1849
  %v4323 = vadd.f32 %v4322, %v1850
  %v4324 = vadd.f32 %v4323, %v1851
  %v4325 = vadd.f32 %v4324, %v1852
  %v4326 = vadd.f32 %v4325, %v1853
  %v4327 = vadd.f32 %v4326, %v1854
  %v4328 = vadd.f32 %v4327, %v1855
  %v4329 = vadd.f32 %v4328, %v1856
  %v4330 = vadd.f32 %v4329, %v1857
  %v4331 = vadd.f32 %v4330, %v1858
  %v4332 = vadd.f32 %v4331, %v1859
  %v4333 = vadd.f32 %v4332, %v1860
  %v4334 = vadd.f32 %v4333, %v1861
  %4335 = vadd.xlane.f32.xlu0 %v4334
  %v4336 = vpop.xlane.xlu0 %4335
  %v4337 = vadd.f32 %v1862, %v1863
  %v4338 = vadd.f32 %v4337, %v1864
  %v4339 = vadd.f32 %v4338, %v1865
  %v4340 = vadd.f32 %v4339, %v1866
  %v4341 = vadd.f32 %v4340, %v1867
  %v4342 = vadd.f32 %v4341, %v1868
  %v4343 = vadd.f32 %v4342, %v1869
  %v4344 = vadd.f32 %v4343, %v1870
  %v4345 = vadd.f32 %v4344, %v1871
  %v4346 = vadd.f32 %v4345, %v1872
  %v4347 = vadd.f32 %v4346, %v1873
  %v4348 = vadd.f32 %v4347, %v1874
  %v4349 = vadd.f32 %v4348, %v1875
  %v4350 = vadd.f32 %v4349, %v1876
  %v4351 = vadd.f32 %v4350, %v1877
  %4352 = vadd.xlane.f32.xlu0 %v4351
  %v4353 = vpop.xlane.xlu0 %4352
  %v4354 = vadd.f32 %v1878, %v1879
  %v4355 = vadd.f32 %v4354, %v1880
  %v4356 = vadd.f32 %v4355, %v1881
  %v4357 = vadd.f32 %v4356, %v1882
  %v4358 = vadd.f32 %v4357, %v1883
  %v4359 = vadd.f32 %v4358, %v1884
  %v4360 = vadd.f32 %v4359, %v1885
  %v4361 = vadd.f32 %v4360, %v1886
  %v4362 = vadd.f32 %v4361, %v1887
  %v4363 = vadd.f32 %v4362, %v1888
  %v4364 = vadd.f32 %v4363, %v1889
  %v4365 = vadd.f32 %v4364, %v1890
  %v4366 = vadd.f32 %v4365, %v1891
  %v4367 = vadd.f32 %v4366, %v1892
  %v4368 = vadd.f32 %v4367, %v1893
  %4369 = vadd.xlane.f32.xlu0 %v4368
  %v4370 = vpop.xlane.xlu0 %4369
  %v4371 = vadd.f32 %v1894, %v1895
  %v4372 = vadd.f32 %v4371, %v1896
  %v4373 = vadd.f32 %v4372, %v1897
  %v4374 = vadd.f32 %v4373, %v1898
  %v4375 = vadd.f32 %v4374, %v1899
  %v4376 = vadd.f32 %v4375, %v1900
  %v4377 = vadd.f32 %v4376, %v1901
  %v4378 = vadd.f32 %v4377, %v1902
  %v4379 = vadd.f32 %v4378, %v1903
  %v4380 = vadd.f32 %v4379, %v1904
  %v4381 = vadd.f32 %v4380, %v1905
  %v4382 = vadd.f32 %v4381, %v1906
  %v4383 = vadd.f32 %v4382, %v1907
  %v4384 = vadd.f32 %v4383, %v1908
  %v4385 = vadd.f32 %v4384, %v1909
  %4386 = vadd.xlane.f32.xlu0 %v4385
  %v4387 = vpop.xlane.xlu0 %4386
  %v4388 = vadd.f32 %v1910, %v1911
  %v4389 = vadd.f32 %v4388, %v1912
  %v4390 = vadd.f32 %v4389, %v1913
  %v4391 = vadd.f32 %v4390, %v1914
  %v4392 = vadd.f32 %v4391, %v1915
  %v4393 = vadd.f32 %v4392, %v1916
  %v4394 = vadd.f32 %v4393, %v1917
  %v4395 = vadd.f32 %v4394, %v1918
  %v4396 = vadd.f32 %v4395, %v1919
  %v4397 = vadd.f32 %v4396, %v1920
  %v4398 = vadd.f32 %v4397, %v1921
  %v4399 = vadd.f32 %v4398, %v1922
  %v4400 = vadd.f32 %v4399, %v1923
  %v4401 = vadd.f32 %v4400, %v1924
  %v4402 = vadd.f32 %v4401, %v1925
  %4403 = vadd.xlane.f32.xlu0 %v4402
  %v4404 = vpop.xlane.xlu0 %4403
  %v4405 = vadd.f32 %v1926, %v1927
  %v4406 = vadd.f32 %v4405, %v1928
  %v4407 = vadd.f32 %v4406, %v1929
  %v4408 = vadd.f32 %v4407, %v1930
  %v4409 = vadd.f32 %v4408, %v1931
  %v4410 = vadd.f32 %v4409, %v1932
  %v4411 = vadd.f32 %v4410, %v1933
  %v4412 = vadd.f32 %v4411, %v1934
  %v4413 = vadd.f32 %v4412, %v1935
  %v4414 = vadd.f32 %v4413, %v1936
  %v4415 = vadd.f32 %v4414, %v1937
  %v4416 = vadd.f32 %v4415, %v1938
  %v4417 = vadd.f32 %v4416, %v1939
  %v4418 = vadd.f32 %v4417, %v1940
  %v4419 = vadd.f32 %v4418, %v1941
  %4420 = vadd.xlane.f32.xlu0 %v4419
  %v4421 = vpop.xlane.xlu0 %4420
  %v4422 = vadd.f32 %v1942, %v1943
  %v4423 = vadd.f32 %v4422, %v1944
  %v4424 = vadd.f32 %v4423, %v1945
  %v4425 = vadd.f32 %v4424, %v1946
  %v4426 = vadd.f32 %v4425, %v1947
  %v4427 = vadd.f32 %v4426, %v1948
  %v4428 = vadd.f32 %v4427, %v1949
  %v4429 = vadd.f32 %v4428, %v1950
  %v4430 = vadd.f32 %v4429, %v1951
  %v4431 = vadd.f32 %v4430, %v1952
  %v4432 = vadd.f32 %v4431, %v1953
  %v4433 = vadd.f32 %v4432, %v1954
  %v4434 = vadd.f32 %v4433, %v1955
  %v4435 = vadd.f32 %v4434, %v1956
  %v4436 = vadd.f32 %v4435, %v1957
  %4437 = vadd.xlane.f32.xlu0 %v4436
  %v4438 = vpop.xlane.xlu0 %4437
  %v4439 = vadd.f32 %v3863, %v3911
  %v4440 = vadd.f32 %v3864, %v3928
  %v4441 = vadd.f32 %v3865, %v3945
  %v4442 = vadd.f32 %v3866, %v3962
  %v4443 = vadd.f32 %v3867, %v3979
  %v4444 = vadd.f32 %v3868, %v3996
  %v4445 = vadd.f32 %v3869, %v4013
  %v4446 = vadd.f32 %v3870, %v4030
  %v4447 = vadd.f32 %v3871, %v4047
  %v4448 = vadd.f32 %v3872, %v4064
  %v4449 = vadd.f32 %v3873, %v4081
  %v4450 = vadd.f32 %v3874, %v4098
  %v4451 = vadd.f32 %v3875, %v4115
  %v4452 = vadd.f32 %v3876, %v4132
  %v4453 = vadd.f32 %v3877, %v4149
  %v4454 = vadd.f32 %v3878, %v4166
  %v4455 = vadd.f32 %v3879, %v4183
  %v4456 = vadd.f32 %v3880, %v4200
  %v4457 = vadd.f32 %v3881, %v4217
  %v4458 = vadd.f32 %v3882, %v4234
  %v4459 = vadd.f32 %v3883, %v4251
  %v4460 = vadd.f32 %v3884, %v4268
  %v4461 = vadd.f32 %v3885, %v4285
  %v4462 = vadd.f32 %v3886, %v4302
  %v4463 = vadd.f32 %v3887, %v4319
  %v4464 = vadd.f32 %v3888, %v4336
  %v4465 = vadd.f32 %v3889, %v4353
  %v4466 = vadd.f32 %v3890, %v4370
  %v4467 = vadd.f32 %v3891, %v4387
  %v4468 = vadd.f32 %v3892, %v4404
  %v4469 = vadd.f32 %v3893, %v4421
  %v4470 = vadd.f32 %v3894, %v4438
  %vm4471 = vcmask 7168
  %4472 = vst.msk [vmem:[#allocation3] sm:$0xff] %vm4471, %v4439
  %4473 = vst.msk [vmem:[#allocation3 + $0x8] sm:$0xff] %vm4471, %v4440
  %4474 = vst.msk [vmem:[#allocation3 + $0x10] sm:$0xff] %vm4471, %v4441
  %4475 = vst.msk [vmem:[#allocation3 + $0x18] sm:$0xff] %vm4471, %v4442
  %4476 = vst.msk [vmem:[#allocation3 + $0x20] sm:$0xff] %vm4471, %v4443
  %4477 = vst.msk [vmem:[#allocation3 + $0x28] sm:$0xff] %vm4471, %v4444
  %4478 = vst.msk [vmem:[#allocation3 + $0x30] sm:$0xff] %vm4471, %v4445
  %4479 = vst.msk [vmem:[#allocation3 + $0x38] sm:$0xff] %vm4471, %v4446
  %4480 = vst.msk [vmem:[#allocation3 + $0x40] sm:$0xff] %vm4471, %v4447
  %4481 = vst.msk [vmem:[#allocation3 + $0x48] sm:$0xff] %vm4471, %v4448
  %4482 = vst.msk [vmem:[#allocation3 + $0x50] sm:$0xff] %vm4471, %v4449
  %4483 = vst.msk [vmem:[#allocation3 + $0x58] sm:$0xff] %vm4471, %v4450
  %4484 = vst.msk [vmem:[#allocation3 + $0x60] sm:$0xff] %vm4471, %v4451
  %4485 = vst.msk [vmem:[#allocation3 + $0x68] sm:$0xff] %vm4471, %v4452
  %4486 = vst.msk [vmem:[#allocation3 + $0x70] sm:$0xff] %vm4471, %v4453
  %4487 = vst.msk [vmem:[#allocation3 + $0x78] sm:$0xff] %vm4471, %v4454
  %4488 = vst.msk [vmem:[#allocation3 + $0x80] sm:$0xff] %vm4471, %v4455
  %4489 = vst.msk [vmem:[#allocation3 + $0x88] sm:$0xff] %vm4471, %v4456
  %4490 = vst.msk [vmem:[#allocation3 + $0x90] sm:$0xff] %vm4471, %v4457
  %4491 = vst.msk [vmem:[#allocation3 + $0x98] sm:$0xff] %vm4471, %v4458
  %4492 = vst.msk [vmem:[#allocation3 + $0xa0] sm:$0xff] %vm4471, %v4459
  %4493 = vst.msk [vmem:[#allocation3 + $0xa8] sm:$0xff] %vm4471, %v4460
  %4494 = vst.msk [vmem:[#allocation3 + $0xb0] sm:$0xff] %vm4471, %v4461
  %4495 = vst.msk [vmem:[#allocation3 + $0xb8] sm:$0xff] %vm4471, %v4462
  %4496 = vst.msk [vmem:[#allocation3 + $0xc0] sm:$0xff] %vm4471, %v4463
  %4497 = vst.msk [vmem:[#allocation3 + $0xc8] sm:$0xff] %vm4471, %v4464
  %4498 = vst.msk [vmem:[#allocation3 + $0xd0] sm:$0xff] %vm4471, %v4465
  %4499 = vst.msk [vmem:[#allocation3 + $0xd8] sm:$0xff] %vm4471, %v4466
  %4500 = vst.msk [vmem:[#allocation3 + $0xe0] sm:$0xff] %vm4471, %v4467
  %4501 = vst.msk [vmem:[#allocation3 + $0xe8] sm:$0xff] %vm4471, %v4468
  %4502 = vst.msk [vmem:[#allocation3 + $0xf0] sm:$0xff] %vm4471, %v4469
  %4503 = vst.msk [vmem:[#allocation3 + $0xf8] sm:$0xff] %vm4471, %v4470
  // Predicated region
  $region14: #{tpu_custom_call.1} parent=0 // pred_check
    %p4504 = pneg %p11
  $region15: #{tpu_custom_call.1} parent=0 // pred_check_branch
    %4506 = sbr.rel (%p4504) target = $region17
  $region16: #{tpu_custom_call.1} parent=0 // pred_region
    %v4507 = vld [vmem:[#allocation2] sm:$0xff]
    %v4508 = vld [vmem:[#allocation2 + $0x8] sm:$0xff]
    %v4509 = vld [vmem:[#allocation2 + $0x10] sm:$0xff]
    %v4510 = vld [vmem:[#allocation2 + $0x18] sm:$0xff]
    %v4511 = vld [vmem:[#allocation2 + $0x20] sm:$0xff]
    %v4512 = vld [vmem:[#allocation2 + $0x28] sm:$0xff]
    %v4513 = vld [vmem:[#allocation2 + $0x30] sm:$0xff]
    %v4514 = vld [vmem:[#allocation2 + $0x38] sm:$0xff]
    %v4515 = vld [vmem:[#allocation2 + $0x40] sm:$0xff]
    %v4516 = vld [vmem:[#allocation2 + $0x48] sm:$0xff]
    %v4517 = vld [vmem:[#allocation2 + $0x50] sm:$0xff]
    %v4518 = vld [vmem:[#allocation2 + $0x58] sm:$0xff]
    %v4519 = vld [vmem:[#allocation2 + $0x60] sm:$0xff]
    %v4520 = vld [vmem:[#allocation2 + $0x68] sm:$0xff]
    %v4521 = vld [vmem:[#allocation2 + $0x70] sm:$0xff]
    %v4522 = vld [vmem:[#allocation2 + $0x78] sm:$0xff]
    %v4523 = vld [vmem:[#allocation2 + $0x80] sm:$0xff]
    %v4524 = vld [vmem:[#allocation2 + $0x88] sm:$0xff]
    %v4525 = vld [vmem:[#allocation2 + $0x90] sm:$0xff]
    %v4526 = vld [vmem:[#allocation2 + $0x98] sm:$0xff]
    %v4527 = vld [vmem:[#allocation2 + $0xa0] sm:$0xff]
    %v4528 = vld [vmem:[#allocation2 + $0xa8] sm:$0xff]
    %v4529 = vld [vmem:[#allocation2 + $0xb0] sm:$0xff]
    %v4530 = vld [vmem:[#allocation2 + $0xb8] sm:$0xff]
    %v4531 = vld [vmem:[#allocation2 + $0xc0] sm:$0xff]
    %v4532 = vld [vmem:[#allocation2 + $0xc8] sm:$0xff]
    %v4533 = vld [vmem:[#allocation2 + $0xd0] sm:$0xff]
    %v4534 = vld [vmem:[#allocation2 + $0xd8] sm:$0xff]
    %v4535 = vld [vmem:[#allocation2 + $0xe0] sm:$0xff]
    %v4536 = vld [vmem:[#allocation2 + $0xe8] sm:$0xff]
    %v4537 = vld [vmem:[#allocation2 + $0xf0] sm:$0xff]
    %v4538 = vld [vmem:[#allocation2 + $0xf8] sm:$0xff]
    %v4539 = vld [vmem:[#allocation3] sm:$0xff]
    %v4540 = vld [vmem:[#allocation3 + $0x8] sm:$0xff]
    %v4541 = vld [vmem:[#allocation3 + $0x10] sm:$0xff]
    %v4542 = vld [vmem:[#allocation3 + $0x18] sm:$0xff]
    %v4543 = vld [vmem:[#allocation3 + $0x20] sm:$0xff]
    %v4544 = vld [vmem:[#allocation3 + $0x28] sm:$0xff]
    %v4545 = vld [vmem:[#allocation3 + $0x30] sm:$0xff]
    %v4546 = vld [vmem:[#allocation3 + $0x38] sm:$0xff]
    %v4547 = vld [vmem:[#allocation3 + $0x40] sm:$0xff]
    %v4548 = vld [vmem:[#allocation3 + $0x48] sm:$0xff]
    %v4549 = vld [vmem:[#allocation3 + $0x50] sm:$0xff]
    %v4550 = vld [vmem:[#allocation3 + $0x58] sm:$0xff]
    %v4551 = vld [vmem:[#allocation3 + $0x60] sm:$0xff]
    %v4552 = vld [vmem:[#allocation3 + $0x68] sm:$0xff]
    %v4553 = vld [vmem:[#allocation3 + $0x70] sm:$0xff]
    %v4554 = vld [vmem:[#allocation3 + $0x78] sm:$0xff]
    %v4555 = vld [vmem:[#allocation3 + $0x80] sm:$0xff]
    %v4556 = vld [vmem:[#allocation3 + $0x88] sm:$0xff]
    %v4557 = vld [vmem:[#allocation3 + $0x90] sm:$0xff]
    %v4558 = vld [vmem:[#allocation3 + $0x98] sm:$0xff]
    %v4559 = vld [vmem:[#allocation3 + $0xa0] sm:$0xff]
    %v4560 = vld [vmem:[#allocation3 + $0xa8] sm:$0xff]
    %v4561 = vld [vmem:[#allocation3 + $0xb0] sm:$0xff]
    %v4562 = vld [vmem:[#allocation3 + $0xb8] sm:$0xff]
    %v4563 = vld [vmem:[#allocation3 + $0xc0] sm:$0xff]
    %v4564 = vld [vmem:[#allocation3 + $0xc8] sm:$0xff]
    %v4565 = vld [vmem:[#allocation3 + $0xd0] sm:$0xff]
    %v4566 = vld [vmem:[#allocation3 + $0xd8] sm:$0xff]
    %v4567 = vld [vmem:[#allocation3 + $0xe0] sm:$0xff]
    %v4568 = vld [vmem:[#allocation3 + $0xe8] sm:$0xff]
    %v4569 = vld [vmem:[#allocation3 + $0xf0] sm:$0xff]
    %v4570 = vld [vmem:[#allocation3 + $0xf8] sm:$0xff]
    %v4571 = vmax.f32 %v4539, 1.0
    %v4572 = vmax.f32 %v4540, 1.0
    %v4573 = vmax.f32 %v4541, 1.0
    %v4574 = vmax.f32 %v4542, 1.0
    %v4575 = vmax.f32 %v4543, 1.0
    %v4576 = vmax.f32 %v4544, 1.0
    %v4577 = vmax.f32 %v4545, 1.0
    %v4578 = vmax.f32 %v4546, 1.0
    %v4579 = vmax.f32 %v4547, 1.0
    %v4580 = vmax.f32 %v4548, 1.0
    %v4581 = vmax.f32 %v4549, 1.0
    %v4582 = vmax.f32 %v4550, 1.0
    %v4583 = vmax.f32 %v4551, 1.0
    %v4584 = vmax.f32 %v4552, 1.0
    %v4585 = vmax.f32 %v4553, 1.0
    %v4586 = vmax.f32 %v4554, 1.0
    %v4587 = vmax.f32 %v4555, 1.0
    %v4588 = vmax.f32 %v4556, 1.0
    %v4589 = vmax.f32 %v4557, 1.0
    %v4590 = vmax.f32 %v4558, 1.0
    %v4591 = vmax.f32 %v4559, 1.0
    %v4592 = vmax.f32 %v4560, 1.0
    %v4593 = vmax.f32 %v4561, 1.0
    %v4594 = vmax.f32 %v4562, 1.0
    %v4595 = vmax.f32 %v4563, 1.0
    %v4596 = vmax.f32 %v4564, 1.0
    %v4597 = vmax.f32 %v4565, 1.0
    %v4598 = vmax.f32 %v4566, 1.0
    %v4599 = vmax.f32 %v4567, 1.0
    %v4600 = vmax.f32 %v4568, 1.0
    %v4601 = vmax.f32 %v4569, 1.0
    %v4602 = vmax.f32 %v4570, 1.0
    %v4603 = vrcp.pop %v4571
    %v4604 = vmul.f32 %v4571, %v4603
    %v4605 = vsub.f32 1.0, %v4604
    %v4606 = vmul.f32 %v4603, %v4605
    %v4607 = vadd.f32 %v4603, %v4606
    %vm4608 = vweird.f32 %v4571
    %vm4609 = vweird.f32 %v4603
    %vm4610 = vmor %vm4608, %vm4609
    %v4611 = vsel %vm4610, %v4603, %v4607
    %v4612 = vand.u32 2147483647, %v4571
    %vm4613 = vcmp.eq.f32.partialorder %v4612, 8.507059e+37
    %v4614 = vand.u32 %v4571, 2147483648
    %v4615 = vor.u32 1.1754944e-38, %v4614
    %v4616 = vsel %vm4613, %v4615, %v4611
    %v4617 = vmul.f32 1.0, %v4616
    %v4618 = vrcp.pop %v4572
    %v4619 = vmul.f32 %v4572, %v4618
    %v4620 = vsub.f32 1.0, %v4619
    %v4621 = vmul.f32 %v4618, %v4620
    %v4622 = vadd.f32 %v4618, %v4621
    %vm4623 = vweird.f32 %v4572
    %vm4624 = vweird.f32 %v4618
    %vm4625 = vmor %vm4623, %vm4624
    %v4626 = vsel %vm4625, %v4618, %v4622
    %v4627 = vand.u32 2147483647, %v4572
    %vm4628 = vcmp.eq.f32.partialorder %v4627, 8.507059e+37
    %v4629 = vand.u32 %v4572, 2147483648
    %v4630 = vor.u32 1.1754944e-38, %v4629
    %v4631 = vsel %vm4628, %v4630, %v4626
    %v4632 = vmul.f32 1.0, %v4631
    %v4633 = vrcp.pop %v4573
    %v4634 = vmul.f32 %v4573, %v4633
    %v4635 = vsub.f32 1.0, %v4634
    %v4636 = vmul.f32 %v4633, %v4635
    %v4637 = vadd.f32 %v4633, %v4636
    %vm4638 = vweird.f32 %v4573
    %vm4639 = vweird.f32 %v4633
    %vm4640 = vmor %vm4638, %vm4639
    %v4641 = vsel %vm4640, %v4633, %v4637
    %v4642 = vand.u32 2147483647, %v4573
    %vm4643 = vcmp.eq.f32.partialorder %v4642, 8.507059e+37
    %v4644 = vand.u32 %v4573, 2147483648
    %v4645 = vor.u32 1.1754944e-38, %v4644
    %v4646 = vsel %vm4643, %v4645, %v4641
    %v4647 = vmul.f32 1.0, %v4646
    %v4648 = vrcp.pop %v4574
    %v4649 = vmul.f32 %v4574, %v4648
    %v4650 = vsub.f32 1.0, %v4649
    %v4651 = vmul.f32 %v4648, %v4650
    %v4652 = vadd.f32 %v4648, %v4651
    %vm4653 = vweird.f32 %v4574
    %vm4654 = vweird.f32 %v4648
    %vm4655 = vmor %vm4653, %vm4654
    %v4656 = vsel %vm4655, %v4648, %v4652
    %v4657 = vand.u32 2147483647, %v4574
    %vm4658 = vcmp.eq.f32.partialorder %v4657, 8.507059e+37
    %v4659 = vand.u32 %v4574, 2147483648
    %v4660 = vor.u32 1.1754944e-38, %v4659
    %v4661 = vsel %vm4658, %v4660, %v4656
    %v4662 = vmul.f32 1.0, %v4661
    %v4663 = vrcp.pop %v4575
    %v4664 = vmul.f32 %v4575, %v4663
    %v4665 = vsub.f32 1.0, %v4664
    %v4666 = vmul.f32 %v4663, %v4665
    %v4667 = vadd.f32 %v4663, %v4666
    %vm4668 = vweird.f32 %v4575
    %vm4669 = vweird.f32 %v4663
    %vm4670 = vmor %vm4668, %vm4669
    %v4671 = vsel %vm4670, %v4663, %v4667
    %v4672 = vand.u32 2147483647, %v4575
    %vm4673 = vcmp.eq.f32.partialorder %v4672, 8.507059e+37
    %v4674 = vand.u32 %v4575, 2147483648
    %v4675 = vor.u32 1.1754944e-38, %v4674
    %v4676 = vsel %vm4673, %v4675, %v4671
    %v4677 = vmul.f32 1.0, %v4676
    %v4678 = vrcp.pop %v4576
    %v4679 = vmul.f32 %v4576, %v4678
    %v4680 = vsub.f32 1.0, %v4679
    %v4681 = vmul.f32 %v4678, %v4680
    %v4682 = vadd.f32 %v4678, %v4681
    %vm4683 = vweird.f32 %v4576
    %vm4684 = vweird.f32 %v4678
    %vm4685 = vmor %vm4683, %vm4684
    %v4686 = vsel %vm4685, %v4678, %v4682
    %v4687 = vand.u32 2147483647, %v4576
    %vm4688 = vcmp.eq.f32.partialorder %v4687, 8.507059e+37
    %v4689 = vand.u32 %v4576, 2147483648
    %v4690 = vor.u32 1.1754944e-38, %v4689
    %v4691 = vsel %vm4688, %v4690, %v4686
    %v4692 = vmul.f32 1.0, %v4691
    %v4693 = vrcp.pop %v4577
    %v4694 = vmul.f32 %v4577, %v4693
    %v4695 = vsub.f32 1.0, %v4694
    %v4696 = vmul.f32 %v4693, %v4695
    %v4697 = vadd.f32 %v4693, %v4696
    %vm4698 = vweird.f32 %v4577
    %vm4699 = vweird.f32 %v4693
    %vm4700 = vmor %vm4698, %vm4699
    %v4701 = vsel %vm4700, %v4693, %v4697
    %v4702 = vand.u32 2147483647, %v4577
    %vm4703 = vcmp.eq.f32.partialorder %v4702, 8.507059e+37
    %v4704 = vand.u32 %v4577, 2147483648
    %v4705 = vor.u32 1.1754944e-38, %v4704
    %v4706 = vsel %vm4703, %v4705, %v4701
    %v4707 = vmul.f32 1.0, %v4706
    %v4708 = vrcp.pop %v4578
    %v4709 = vmul.f32 %v4578, %v4708
    %v4710 = vsub.f32 1.0, %v4709
    %v4711 = vmul.f32 %v4708, %v4710
    %v4712 = vadd.f32 %v4708, %v4711
    %vm4713 = vweird.f32 %v4578
    %vm4714 = vweird.f32 %v4708
    %vm4715 = vmor %vm4713, %vm4714
    %v4716 = vsel %vm4715, %v4708, %v4712
    %v4717 = vand.u32 2147483647, %v4578
    %vm4718 = vcmp.eq.f32.partialorder %v4717, 8.507059e+37
    %v4719 = vand.u32 %v4578, 2147483648
    %v4720 = vor.u32 1.1754944e-38, %v4719
    %v4721 = vsel %vm4718, %v4720, %v4716
    %v4722 = vmul.f32 1.0, %v4721
    %v4723 = vrcp.pop %v4579
    %v4724 = vmul.f32 %v4579, %v4723
    %v4725 = vsub.f32 1.0, %v4724
    %v4726 = vmul.f32 %v4723, %v4725
    %v4727 = vadd.f32 %v4723, %v4726
    %vm4728 = vweird.f32 %v4579
    %vm4729 = vweird.f32 %v4723
    %vm4730 = vmor %vm4728, %vm4729
    %v4731 = vsel %vm4730, %v4723, %v4727
    %v4732 = vand.u32 2147483647, %v4579
    %vm4733 = vcmp.eq.f32.partialorder %v4732, 8.507059e+37
    %v4734 = vand.u32 %v4579, 2147483648
    %v4735 = vor.u32 1.1754944e-38, %v4734
    %v4736 = vsel %vm4733, %v4735, %v4731
    %v4737 = vmul.f32 1.0, %v4736
    %v4738 = vrcp.pop %v4580
    %v4739 = vmul.f32 %v4580, %v4738
    %v4740 = vsub.f32 1.0, %v4739
    %v4741 = vmul.f32 %v4738, %v4740
    %v4742 = vadd.f32 %v4738, %v4741
    %vm4743 = vweird.f32 %v4580
    %vm4744 = vweird.f32 %v4738
    %vm4745 = vmor %vm4743, %vm4744
    %v4746 = vsel %vm4745, %v4738, %v4742
    %v4747 = vand.u32 2147483647, %v4580
    %vm4748 = vcmp.eq.f32.partialorder %v4747, 8.507059e+37
    %v4749 = vand.u32 %v4580, 2147483648
    %v4750 = vor.u32 1.1754944e-38, %v4749
    %v4751 = vsel %vm4748, %v4750, %v4746
    %v4752 = vmul.f32 1.0, %v4751
    %v4753 = vrcp.pop %v4581
    %v4754 = vmul.f32 %v4581, %v4753
    %v4755 = vsub.f32 1.0, %v4754
    %v4756 = vmul.f32 %v4753, %v4755
    %v4757 = vadd.f32 %v4753, %v4756
    %vm4758 = vweird.f32 %v4581
    %vm4759 = vweird.f32 %v4753
    %vm4760 = vmor %vm4758, %vm4759
    %v4761 = vsel %vm4760, %v4753, %v4757
    %v4762 = vand.u32 2147483647, %v4581
    %vm4763 = vcmp.eq.f32.partialorder %v4762, 8.507059e+37
    %v4764 = vand.u32 %v4581, 2147483648
    %v4765 = vor.u32 1.1754944e-38, %v4764
    %v4766 = vsel %vm4763, %v4765, %v4761
    %v4767 = vmul.f32 1.0, %v4766
    %v4768 = vrcp.pop %v4582
    %v4769 = vmul.f32 %v4582, %v4768
    %v4770 = vsub.f32 1.0, %v4769
    %v4771 = vmul.f32 %v4768, %v4770
    %v4772 = vadd.f32 %v4768, %v4771
    %vm4773 = vweird.f32 %v4582
    %vm4774 = vweird.f32 %v4768
    %vm4775 = vmor %vm4773, %vm4774
    %v4776 = vsel %vm4775, %v4768, %v4772
    %v4777 = vand.u32 2147483647, %v4582
    %vm4778 = vcmp.eq.f32.partialorder %v4777, 8.507059e+37
    %v4779 = vand.u32 %v4582, 2147483648
    %v4780 = vor.u32 1.1754944e-38, %v4779
    %v4781 = vsel %vm4778, %v4780, %v4776
    %v4782 = vmul.f32 1.0, %v4781
    %v4783 = vrcp.pop %v4583
    %v4784 = vmul.f32 %v4583, %v4783
    %v4785 = vsub.f32 1.0, %v4784
    %v4786 = vmul.f32 %v4783, %v4785
    %v4787 = vadd.f32 %v4783, %v4786
    %vm4788 = vweird.f32 %v4583
    %vm4789 = vweird.f32 %v4783
    %vm4790 = vmor %vm4788, %vm4789
    %v4791 = vsel %vm4790, %v4783, %v4787
    %v4792 = vand.u32 2147483647, %v4583
    %vm4793 = vcmp.eq.f32.partialorder %v4792, 8.507059e+37
    %v4794 = vand.u32 %v4583, 2147483648
    %v4795 = vor.u32 1.1754944e-38, %v4794
    %v4796 = vsel %vm4793, %v4795, %v4791
    %v4797 = vmul.f32 1.0, %v4796
    %v4798 = vrcp.pop %v4584
    %v4799 = vmul.f32 %v4584, %v4798
    %v4800 = vsub.f32 1.0, %v4799
    %v4801 = vmul.f32 %v4798, %v4800
    %v4802 = vadd.f32 %v4798, %v4801
    %vm4803 = vweird.f32 %v4584
    %vm4804 = vweird.f32 %v4798
    %vm4805 = vmor %vm4803, %vm4804
    %v4806 = vsel %vm4805, %v4798, %v4802
    %v4807 = vand.u32 2147483647, %v4584
    %vm4808 = vcmp.eq.f32.partialorder %v4807, 8.507059e+37
    %v4809 = vand.u32 %v4584, 2147483648
    %v4810 = vor.u32 1.1754944e-38, %v4809
    %v4811 = vsel %vm4808, %v4810, %v4806
    %v4812 = vmul.f32 1.0, %v4811
    %v4813 = vrcp.pop %v4585
    %v4814 = vmul.f32 %v4585, %v4813
    %v4815 = vsub.f32 1.0, %v4814
    %v4816 = vmul.f32 %v4813, %v4815
    %v4817 = vadd.f32 %v4813, %v4816
    %vm4818 = vweird.f32 %v4585
    %vm4819 = vweird.f32 %v4813
    %vm4820 = vmor %vm4818, %vm4819
    %v4821 = vsel %vm4820, %v4813, %v4817
    %v4822 = vand.u32 2147483647, %v4585
    %vm4823 = vcmp.eq.f32.partialorder %v4822, 8.507059e+37
    %v4824 = vand.u32 %v4585, 2147483648
    %v4825 = vor.u32 1.1754944e-38, %v4824
    %v4826 = vsel %vm4823, %v4825, %v4821
    %v4827 = vmul.f32 1.0, %v4826
    %v4828 = vrcp.pop %v4586
    %v4829 = vmul.f32 %v4586, %v4828
    %v4830 = vsub.f32 1.0, %v4829
    %v4831 = vmul.f32 %v4828, %v4830
    %v4832 = vadd.f32 %v4828, %v4831
    %vm4833 = vweird.f32 %v4586
    %vm4834 = vweird.f32 %v4828
    %vm4835 = vmor %vm4833, %vm4834
    %v4836 = vsel %vm4835, %v4828, %v4832
    %v4837 = vand.u32 2147483647, %v4586
    %vm4838 = vcmp.eq.f32.partialorder %v4837, 8.507059e+37
    %v4839 = vand.u32 %v4586, 2147483648
    %v4840 = vor.u32 1.1754944e-38, %v4839
    %v4841 = vsel %vm4838, %v4840, %v4836
    %v4842 = vmul.f32 1.0, %v4841
    %v4843 = vrcp.pop %v4587
    %v4844 = vmul.f32 %v4587, %v4843
    %v4845 = vsub.f32 1.0, %v4844
    %v4846 = vmul.f32 %v4843, %v4845
    %v4847 = vadd.f32 %v4843, %v4846
    %vm4848 = vweird.f32 %v4587
    %vm4849 = vweird.f32 %v4843
    %vm4850 = vmor %vm4848, %vm4849
    %v4851 = vsel %vm4850, %v4843, %v4847
    %v4852 = vand.u32 2147483647, %v4587
    %vm4853 = vcmp.eq.f32.partialorder %v4852, 8.507059e+37
    %v4854 = vand.u32 %v4587, 2147483648
    %v4855 = vor.u32 1.1754944e-38, %v4854
    %v4856 = vsel %vm4853, %v4855, %v4851
    %v4857 = vmul.f32 1.0, %v4856
    %v4858 = vrcp.pop %v4588
    %v4859 = vmul.f32 %v4588, %v4858
    %v4860 = vsub.f32 1.0, %v4859
    %v4861 = vmul.f32 %v4858, %v4860
    %v4862 = vadd.f32 %v4858, %v4861
    %vm4863 = vweird.f32 %v4588
    %vm4864 = vweird.f32 %v4858
    %vm4865 = vmor %vm4863, %vm4864
    %v4866 = vsel %vm4865, %v4858, %v4862
    %v4867 = vand.u32 2147483647, %v4588
    %vm4868 = vcmp.eq.f32.partialorder %v4867, 8.507059e+37
    %v4869 = vand.u32 %v4588, 2147483648
    %v4870 = vor.u32 1.1754944e-38, %v4869
    %v4871 = vsel %vm4868, %v4870, %v4866
    %v4872 = vmul.f32 1.0, %v4871
    %v4873 = vrcp.pop %v4589
    %v4874 = vmul.f32 %v4589, %v4873
    %v4875 = vsub.f32 1.0, %v4874
    %v4876 = vmul.f32 %v4873, %v4875
    %v4877 = vadd.f32 %v4873, %v4876
    %vm4878 = vweird.f32 %v4589
    %vm4879 = vweird.f32 %v4873
    %vm4880 = vmor %vm4878, %vm4879
    %v4881 = vsel %vm4880, %v4873, %v4877
    %v4882 = vand.u32 2147483647, %v4589
    %vm4883 = vcmp.eq.f32.partialorder %v4882, 8.507059e+37
    %v4884 = vand.u32 %v4589, 2147483648
    %v4885 = vor.u32 1.1754944e-38, %v4884
    %v4886 = vsel %vm4883, %v4885, %v4881
    %v4887 = vmul.f32 1.0, %v4886
    %v4888 = vrcp.pop %v4590
    %v4889 = vmul.f32 %v4590, %v4888
    %v4890 = vsub.f32 1.0, %v4889
    %v4891 = vmul.f32 %v4888, %v4890
    %v4892 = vadd.f32 %v4888, %v4891
    %vm4893 = vweird.f32 %v4590
    %vm4894 = vweird.f32 %v4888
    %vm4895 = vmor %vm4893, %vm4894
    %v4896 = vsel %vm4895, %v4888, %v4892
    %v4897 = vand.u32 2147483647, %v4590
    %vm4898 = vcmp.eq.f32.partialorder %v4897, 8.507059e+37
    %v4899 = vand.u32 %v4590, 2147483648
    %v4900 = vor.u32 1.1754944e-38, %v4899
    %v4901 = vsel %vm4898, %v4900, %v4896
    %v4902 = vmul.f32 1.0, %v4901
    %v4903 = vrcp.pop %v4591
    %v4904 = vmul.f32 %v4591, %v4903
    %v4905 = vsub.f32 1.0, %v4904
    %v4906 = vmul.f32 %v4903, %v4905
    %v4907 = vadd.f32 %v4903, %v4906
    %vm4908 = vweird.f32 %v4591
    %vm4909 = vweird.f32 %v4903
    %vm4910 = vmor %vm4908, %vm4909
    %v4911 = vsel %vm4910, %v4903, %v4907
    %v4912 = vand.u32 2147483647, %v4591
    %vm4913 = vcmp.eq.f32.partialorder %v4912, 8.507059e+37
    %v4914 = vand.u32 %v4591, 2147483648
    %v4915 = vor.u32 1.1754944e-38, %v4914
    %v4916 = vsel %vm4913, %v4915, %v4911
    %v4917 = vmul.f32 1.0, %v4916
    %v4918 = vrcp.pop %v4592
    %v4919 = vmul.f32 %v4592, %v4918
    %v4920 = vsub.f32 1.0, %v4919
    %v4921 = vmul.f32 %v4918, %v4920
    %v4922 = vadd.f32 %v4918, %v4921
    %vm4923 = vweird.f32 %v4592
    %vm4924 = vweird.f32 %v4918
    %vm4925 = vmor %vm4923, %vm4924
    %v4926 = vsel %vm4925, %v4918, %v4922
    %v4927 = vand.u32 2147483647, %v4592
    %vm4928 = vcmp.eq.f32.partialorder %v4927, 8.507059e+37
    %v4929 = vand.u32 %v4592, 2147483648
    %v4930 = vor.u32 1.1754944e-38, %v4929
    %v4931 = vsel %vm4928, %v4930, %v4926
    %v4932 = vmul.f32 1.0, %v4931
    %v4933 = vrcp.pop %v4593
    %v4934 = vmul.f32 %v4593, %v4933
    %v4935 = vsub.f32 1.0, %v4934
    %v4936 = vmul.f32 %v4933, %v4935
    %v4937 = vadd.f32 %v4933, %v4936
    %vm4938 = vweird.f32 %v4593
    %vm4939 = vweird.f32 %v4933
    %vm4940 = vmor %vm4938, %vm4939
    %v4941 = vsel %vm4940, %v4933, %v4937
    %v4942 = vand.u32 2147483647, %v4593
    %vm4943 = vcmp.eq.f32.partialorder %v4942, 8.507059e+37
    %v4944 = vand.u32 %v4593, 2147483648
    %v4945 = vor.u32 1.1754944e-38, %v4944
    %v4946 = vsel %vm4943, %v4945, %v4941
    %v4947 = vmul.f32 1.0, %v4946
    %v4948 = vrcp.pop %v4594
    %v4949 = vmul.f32 %v4594, %v4948
    %v4950 = vsub.f32 1.0, %v4949
    %v4951 = vmul.f32 %v4948, %v4950
    %v4952 = vadd.f32 %v4948, %v4951
    %vm4953 = vweird.f32 %v4594
    %vm4954 = vweird.f32 %v4948
    %vm4955 = vmor %vm4953, %vm4954
    %v4956 = vsel %vm4955, %v4948, %v4952
    %v4957 = vand.u32 2147483647, %v4594
    %vm4958 = vcmp.eq.f32.partialorder %v4957, 8.507059e+37
    %v4959 = vand.u32 %v4594, 2147483648
    %v4960 = vor.u32 1.1754944e-38, %v4959
    %v4961 = vsel %vm4958, %v4960, %v4956
    %v4962 = vmul.f32 1.0, %v4961
    %v4963 = vrcp.pop %v4595
    %v4964 = vmul.f32 %v4595, %v4963
    %v4965 = vsub.f32 1.0, %v4964
    %v4966 = vmul.f32 %v4963, %v4965
    %v4967 = vadd.f32 %v4963, %v4966
    %vm4968 = vweird.f32 %v4595
    %vm4969 = vweird.f32 %v4963
    %vm4970 = vmor %vm4968, %vm4969
    %v4971 = vsel %vm4970, %v4963, %v4967
    %v4972 = vand.u32 2147483647, %v4595
    %vm4973 = vcmp.eq.f32.partialorder %v4972, 8.507059e+37
    %v4974 = vand.u32 %v4595, 2147483648
    %v4975 = vor.u32 1.1754944e-38, %v4974
    %v4976 = vsel %vm4973, %v4975, %v4971
    %v4977 = vmul.f32 1.0, %v4976
    %v4978 = vrcp.pop %v4596
    %v4979 = vmul.f32 %v4596, %v4978
    %v4980 = vsub.f32 1.0, %v4979
    %v4981 = vmul.f32 %v4978, %v4980
    %v4982 = vadd.f32 %v4978, %v4981
    %vm4983 = vweird.f32 %v4596
    %vm4984 = vweird.f32 %v4978
    %vm4985 = vmor %vm4983, %vm4984
    %v4986 = vsel %vm4985, %v4978, %v4982
    %v4987 = vand.u32 2147483647, %v4596
    %vm4988 = vcmp.eq.f32.partialorder %v4987, 8.507059e+37
    %v4989 = vand.u32 %v4596, 2147483648
    %v4990 = vor.u32 1.1754944e-38, %v4989
    %v4991 = vsel %vm4988, %v4990, %v4986
    %v4992 = vmul.f32 1.0, %v4991
    %v4993 = vrcp.pop %v4597
    %v4994 = vmul.f32 %v4597, %v4993
    %v4995 = vsub.f32 1.0, %v4994
    %v4996 = vmul.f32 %v4993, %v4995
    %v4997 = vadd.f32 %v4993, %v4996
    %vm4998 = vweird.f32 %v4597
    %vm4999 = vweird.f32 %v4993
    %vm5000 = vmor %vm4998, %vm4999
    %v5001 = vsel %vm5000, %v4993, %v4997
    %v5002 = vand.u32 2147483647, %v4597
    %vm5003 = vcmp.eq.f32.partialorder %v5002, 8.507059e+37
    %v5004 = vand.u32 %v4597, 2147483648
    %v5005 = vor.u32 1.1754944e-38, %v5004
    %v5006 = vsel %vm5003, %v5005, %v5001
    %v5007 = vmul.f32 1.0, %v5006
    %v5008 = vrcp.pop %v4598
    %v5009 = vmul.f32 %v4598, %v5008
    %v5010 = vsub.f32 1.0, %v5009
    %v5011 = vmul.f32 %v5008, %v5010
    %v5012 = vadd.f32 %v5008, %v5011
    %vm5013 = vweird.f32 %v4598
    %vm5014 = vweird.f32 %v5008
    %vm5015 = vmor %vm5013, %vm5014
    %v5016 = vsel %vm5015, %v5008, %v5012
    %v5017 = vand.u32 2147483647, %v4598
    %vm5018 = vcmp.eq.f32.partialorder %v5017, 8.507059e+37
    %v5019 = vand.u32 %v4598, 2147483648
    %v5020 = vor.u32 1.1754944e-38, %v5019
    %v5021 = vsel %vm5018, %v5020, %v5016
    %v5022 = vmul.f32 1.0, %v5021
    %v5023 = vrcp.pop %v4599
    %v5024 = vmul.f32 %v4599, %v5023
    %v5025 = vsub.f32 1.0, %v5024
    %v5026 = vmul.f32 %v5023, %v5025
    %v5027 = vadd.f32 %v5023, %v5026
    %vm5028 = vweird.f32 %v4599
    %vm5029 = vweird.f32 %v5023
    %vm5030 = vmor %vm5028, %vm5029
    %v5031 = vsel %vm5030, %v5023, %v5027
    %v5032 = vand.u32 2147483647, %v4599
    %vm5033 = vcmp.eq.f32.partialorder %v5032, 8.507059e+37
    %v5034 = vand.u32 %v4599, 2147483648
    %v5035 = vor.u32 1.1754944e-38, %v5034
    %v5036 = vsel %vm5033, %v5035, %v5031
    %v5037 = vmul.f32 1.0, %v5036
    %v5038 = vrcp.pop %v4600
    %v5039 = vmul.f32 %v4600, %v5038
    %v5040 = vsub.f32 1.0, %v5039
    %v5041 = vmul.f32 %v5038, %v5040
    %v5042 = vadd.f32 %v5038, %v5041
    %vm5043 = vweird.f32 %v4600
    %vm5044 = vweird.f32 %v5038
    %vm5045 = vmor %vm5043, %vm5044
    %v5046 = vsel %vm5045, %v5038, %v5042
    %v5047 = vand.u32 2147483647, %v4600
    %vm5048 = vcmp.eq.f32.partialorder %v5047, 8.507059e+37
    %v5049 = vand.u32 %v4600, 2147483648
    %v5050 = vor.u32 1.1754944e-38, %v5049
    %v5051 = vsel %vm5048, %v5050, %v5046
    %v5052 = vmul.f32 1.0, %v5051
    %v5053 = vrcp.pop %v4601
    %v5054 = vmul.f32 %v4601, %v5053
    %v5055 = vsub.f32 1.0, %v5054
    %v5056 = vmul.f32 %v5053, %v5055
    %v5057 = vadd.f32 %v5053, %v5056
    %vm5058 = vweird.f32 %v4601
    %vm5059 = vweird.f32 %v5053
    %vm5060 = vmor %vm5058, %vm5059
    %v5061 = vsel %vm5060, %v5053, %v5057
    %v5062 = vand.u32 2147483647, %v4601
    %vm5063 = vcmp.eq.f32.partialorder %v5062, 8.507059e+37
    %v5064 = vand.u32 %v4601, 2147483648
    %v5065 = vor.u32 1.1754944e-38, %v5064
    %v5066 = vsel %vm5063, %v5065, %v5061
    %v5067 = vmul.f32 1.0, %v5066
    %v5068 = vrcp.pop %v4602
    %v5069 = vmul.f32 %v4602, %v5068
    %v5070 = vsub.f32 1.0, %v5069
    %v5071 = vmul.f32 %v5068, %v5070
    %v5072 = vadd.f32 %v5068, %v5071
    %vm5073 = vweird.f32 %v4602
    %vm5074 = vweird.f32 %v5068
    %vm5075 = vmor %vm5073, %vm5074
    %v5076 = vsel %vm5075, %v5068, %v5072
    %v5077 = vand.u32 2147483647, %v4602
    %vm5078 = vcmp.eq.f32.partialorder %v5077, 8.507059e+37
    %v5079 = vand.u32 %v4602, 2147483648
    %v5080 = vor.u32 1.1754944e-38, %v5079
    %v5081 = vsel %vm5078, %v5080, %v5076
    %v5082 = vmul.f32 1.0, %v5081
    %5084 = vset.pattern.permute.xlu0 0
    %5085 = vperm.xlu0 %5084, %v4617
    %v5086 = vpop.permute.xlu0 %5085
    %5089 = vset.pattern.permute.xlu0 0
    %5090 = vperm.xlu0 %5089, %v4632
    %v5091 = vpop.permute.xlu0 %5090
    %5094 = vset.pattern.permute.xlu0 0
    %5095 = vperm.xlu0 %5094, %v4647
    %v5096 = vpop.permute.xlu0 %5095
    %5099 = vset.pattern.permute.xlu0 0
    %5100 = vperm.xlu0 %5099, %v4662
    %v5101 = vpop.permute.xlu0 %5100
    %5104 = vset.pattern.permute.xlu0 0
    %5105 = vperm.xlu0 %5104, %v4677
    %v5106 = vpop.permute.xlu0 %5105
    %5109 = vset.pattern.permute.xlu0 0
    %5110 = vperm.xlu0 %5109, %v4692
    %v5111 = vpop.permute.xlu0 %5110
    %5114 = vset.pattern.permute.xlu0 0
    %5115 = vperm.xlu0 %5114, %v4707
    %v5116 = vpop.permute.xlu0 %5115
    %5119 = vset.pattern.permute.xlu0 0
    %5120 = vperm.xlu0 %5119, %v4722
    %v5121 = vpop.permute.xlu0 %5120
    %5124 = vset.pattern.permute.xlu0 0
    %5125 = vperm.xlu0 %5124, %v4737
    %v5126 = vpop.permute.xlu0 %5125
    %5129 = vset.pattern.permute.xlu0 0
    %5130 = vperm.xlu0 %5129, %v4752
    %v5131 = vpop.permute.xlu0 %5130
    %5134 = vset.pattern.permute.xlu0 0
    %5135 = vperm.xlu0 %5134, %v4767
    %v5136 = vpop.permute.xlu0 %5135
    %5139 = vset.pattern.permute.xlu0 0
    %5140 = vperm.xlu0 %5139, %v4782
    %v5141 = vpop.permute.xlu0 %5140
    %5144 = vset.pattern.permute.xlu0 0
    %5145 = vperm.xlu0 %5144, %v4797
    %v5146 = vpop.permute.xlu0 %5145
    %5149 = vset.pattern.permute.xlu0 0
    %5150 = vperm.xlu0 %5149, %v4812
    %v5151 = vpop.permute.xlu0 %5150
    %5154 = vset.pattern.permute.xlu0 0
    %5155 = vperm.xlu0 %5154, %v4827
    %v5156 = vpop.permute.xlu0 %5155
    %5159 = vset.pattern.permute.xlu0 0
    %5160 = vperm.xlu0 %5159, %v4842
    %v5161 = vpop.permute.xlu0 %5160
    %5164 = vset.pattern.permute.xlu0 0
    %5165 = vperm.xlu0 %5164, %v4857
    %v5166 = vpop.permute.xlu0 %5165
    %5169 = vset.pattern.permute.xlu0 0
    %5170 = vperm.xlu0 %5169, %v4872
    %v5171 = vpop.permute.xlu0 %5170
    %5174 = vset.pattern.permute.xlu0 0
    %5175 = vperm.xlu0 %5174, %v4887
    %v5176 = vpop.permute.xlu0 %5175
    %5179 = vset.pattern.permute.xlu0 0
    %5180 = vperm.xlu0 %5179, %v4902
    %v5181 = vpop.permute.xlu0 %5180
    %5184 = vset.pattern.permute.xlu0 0
    %5185 = vperm.xlu0 %5184, %v4917
    %v5186 = vpop.permute.xlu0 %5185
    %5189 = vset.pattern.permute.xlu0 0
    %5190 = vperm.xlu0 %5189, %v4932
    %v5191 = vpop.permute.xlu0 %5190
    %5194 = vset.pattern.permute.xlu0 0
    %5195 = vperm.xlu0 %5194, %v4947
    %v5196 = vpop.permute.xlu0 %5195
    %5199 = vset.pattern.permute.xlu0 0
    %5200 = vperm.xlu0 %5199, %v4962
    %v5201 = vpop.permute.xlu0 %5200
    %5204 = vset.pattern.permute.xlu0 0
    %5205 = vperm.xlu0 %5204, %v4977
    %v5206 = vpop.permute.xlu0 %5205
    %5209 = vset.pattern.permute.xlu0 0
    %5210 = vperm.xlu0 %5209, %v4992
    %v5211 = vpop.permute.xlu0 %5210
    %5214 = vset.pattern.permute.xlu0 0
    %5215 = vperm.xlu0 %5214, %v5007
    %v5216 = vpop.permute.xlu0 %5215
    %5219 = vset.pattern.permute.xlu0 0
    %5220 = vperm.xlu0 %5219, %v5022
    %v5221 = vpop.permute.xlu0 %5220
    %5224 = vset.pattern.permute.xlu0 0
    %5225 = vperm.xlu0 %5224, %v5037
    %v5226 = vpop.permute.xlu0 %5225
    %5229 = vset.pattern.permute.xlu0 0
    %5230 = vperm.xlu0 %5229, %v5052
    %v5231 = vpop.permute.xlu0 %5230
    %5234 = vset.pattern.permute.xlu0 0
    %5235 = vperm.xlu0 %5234, %v5067
    %v5236 = vpop.permute.xlu0 %5235
    %5239 = vset.pattern.permute.xlu0 0
    %5240 = vperm.xlu0 %5239, %v5082
    %v5241 = vpop.permute.xlu0 %5240
    %v5243 = vmul.f32 %v4507, %v5086
    %v5244 = vmul.f32 %v4508, %v5091
    %v5245 = vmul.f32 %v4509, %v5096
    %v5246 = vmul.f32 %v4510, %v5101
    %v5247 = vmul.f32 %v4511, %v5106
    %v5248 = vmul.f32 %v4512, %v5111
    %v5249 = vmul.f32 %v4513, %v5116
    %v5250 = vmul.f32 %v4514, %v5121
    %v5251 = vmul.f32 %v4515, %v5126
    %v5252 = vmul.f32 %v4516, %v5131
    %v5253 = vmul.f32 %v4517, %v5136
    %v5254 = vmul.f32 %v4518, %v5141
    %v5255 = vmul.f32 %v4519, %v5146
    %v5256 = vmul.f32 %v4520, %v5151
    %v5257 = vmul.f32 %v4521, %v5156
    %v5258 = vmul.f32 %v4522, %v5161
    %v5259 = vmul.f32 %v4523, %v5166
    %v5260 = vmul.f32 %v4524, %v5171
    %v5261 = vmul.f32 %v4525, %v5176
    %v5262 = vmul.f32 %v4526, %v5181
    %v5263 = vmul.f32 %v4527, %v5186
    %v5264 = vmul.f32 %v4528, %v5191
    %v5265 = vmul.f32 %v4529, %v5196
    %v5266 = vmul.f32 %v4530, %v5201
    %v5267 = vmul.f32 %v4531, %v5206
    %v5268 = vmul.f32 %v4532, %v5211
    %v5269 = vmul.f32 %v4533, %v5216
    %v5270 = vmul.f32 %v4534, %v5221
    %v5271 = vmul.f32 %v4535, %v5226
    %v5272 = vmul.f32 %v4536, %v5231
    %v5273 = vmul.f32 %v4537, %v5236
    %v5274 = vmul.f32 %v4538, %v5241
    %5275 = vst.msk [vmem:[%s2] sm:$0xff] %vm3830, %v5243
    %5276 = vst.msk [vmem:[%s2 + $0x8] sm:$0xff] %vm3830, %v5244
    %5277 = vst.msk [vmem:[%s2 + $0x10] sm:$0xff] %vm3830, %v5245
    %5278 = vst.msk [vmem:[%s2 + $0x18] sm:$0xff] %vm3830, %v5246
    %5279 = vst.msk [vmem:[%s2 + $0x20] sm:$0xff] %vm3830, %v5247
    %5280 = vst.msk [vmem:[%s2 + $0x28] sm:$0xff] %vm3830, %v5248
    %5281 = vst.msk [vmem:[%s2 + $0x30] sm:$0xff] %vm3830, %v5249
    %5282 = vst.msk [vmem:[%s2 + $0x38] sm:$0xff] %vm3830, %v5250
    %5283 = vst.msk [vmem:[%s2 + $0x40] sm:$0xff] %vm3830, %v5251
    %5284 = vst.msk [vmem:[%s2 + $0x48] sm:$0xff] %vm3830, %v5252
    %5285 = vst.msk [vmem:[%s2 + $0x50] sm:$0xff] %vm3830, %v5253
    %5286 = vst.msk [vmem:[%s2 + $0x58] sm:$0xff] %vm3830, %v5254
    %5287 = vst.msk [vmem:[%s2 + $0x60] sm:$0xff] %vm3830, %v5255
    %5288 = vst.msk [vmem:[%s2 + $0x68] sm:$0xff] %vm3830, %v5256
    %5289 = vst.msk [vmem:[%s2 + $0x70] sm:$0xff] %vm3830, %v5257
    %5290 = vst.msk [vmem:[%s2 + $0x78] sm:$0xff] %vm3830, %v5258
    %5291 = vst.msk [vmem:[%s2 + $0x80] sm:$0xff] %vm3830, %v5259
    %5292 = vst.msk [vmem:[%s2 + $0x88] sm:$0xff] %vm3830, %v5260
    %5293 = vst.msk [vmem:[%s2 + $0x90] sm:$0xff] %vm3830, %v5261
    %5294 = vst.msk [vmem:[%s2 + $0x98] sm:$0xff] %vm3830, %v5262
    %5295 = vst.msk [vmem:[%s2 + $0xa0] sm:$0xff] %vm3830, %v5263
    %5296 = vst.msk [vmem:[%s2 + $0xa8] sm:$0xff] %vm3830, %v5264
    %5297 = vst.msk [vmem:[%s2 + $0xb0] sm:$0xff] %vm3830, %v5265
    %5298 = vst.msk [vmem:[%s2 + $0xb8] sm:$0xff] %vm3830, %v5266
    %5299 = vst.msk [vmem:[%s2 + $0xc0] sm:$0xff] %vm3830, %v5267
    %5300 = vst.msk [vmem:[%s2 + $0xc8] sm:$0xff] %vm3830, %v5268
    %5301 = vst.msk [vmem:[%s2 + $0xd0] sm:$0xff] %vm3830, %v5269
    %5302 = vst.msk [vmem:[%s2 + $0xd8] sm:$0xff] %vm3830, %v5270
    %5303 = vst.msk [vmem:[%s2 + $0xe0] sm:$0xff] %vm3830, %v5271
    %5304 = vst.msk [vmem:[%s2 + $0xe8] sm:$0xff] %vm3830, %v5272
    %5305 = vst.msk [vmem:[%s2 + $0xf0] sm:$0xff] %vm3830, %v5273
    %5306 = vst.msk [vmem:[%s2 + $0xf8] sm:$0xff] %vm3830, %v5274
  $region17: #{tpu_custom_call.1} parent=0 // pred_fallthru
    _
  // Predicated region
  $region18: #{tpu_custom_call.1} parent=0 // pred_check
    _
  $region19: #{tpu_custom_call.1} parent=0 // pred_check_branch
    %5308 = sbr.rel (0) target = $region21
  $region20: #{tpu_custom_call.1} parent=0 // pred_region
    _
  $region21: #{tpu_custom_call.1} parent=0 // pred_fallthru
    _
  // Predicated region
  $region22: #{tpu_custom_call.1} parent=0 // pred_check
    _
  $region23: #{tpu_custom_call.1} parent=0 // pred_check_branch
    %5310 = sbr.rel (0) target = $region25
  $region24: #{tpu_custom_call.1} parent=0 // pred_region
    _
  $region25: #{tpu_custom_call.1} parent=0 // pred_fallthru
    _

</llo_original>
